<compile_context>
chip_gen: v7x
topology: tpu7x:2x2x1
jax: 0.10.0
libtpu: 0.0.40
codegen_flags: <defaults>
</compile_context>

<pallas_src>
import functools

import jax
import jax.numpy as jnp
import numpy as np
from jax.experimental import pallas as pl
from jax.experimental.pallas import tpu as pltpu

LRELU = 0.1
N_LAYERS = 4          # block1.conv1, block1.conv2, block2.conv1, block2.conv2
N_TAPS = 9            # 3x3 conv taps, row-major over (dy, dx) in {-1,0,1}^2
CENTER_TAP = 4        # (dy, dx) == (0, 0)


# ------------------------------ Pallas kernel ------------------------------

def _encoder1_kernel(x_ref, w_ref, b_ref, s_ref, o_ref, *, C, HW):
    """Fused Encoder1 forward for one batch element, channels-first (C, HW)."""
    act = x_ref[0]                                          # (C, HW) f32
    for layer in range(N_LAYERS):
        # Per-tap channel mixing for all 9 taps in one stacked matmul (K = C).
        y = jnp.dot(w_ref[layer], act,
                    preferred_element_type=jnp.float32)     # (9*C, HW)
        acc = b_ref[layer]                                   # (C, HW) folded bias
        for t in range(N_TAPS):
            yt = y[t * C:(t + 1) * C, :]                     # (C, HW)
            if t == CENTER_TAP:
                acc = acc + yt                               # identity shift
            else:
                # Spatial shift with zero boundary as a 0/1 matmul on the MXU.
                acc = acc + jnp.dot(yt, s_ref[t],
                                    preferred_element_type=jnp.float32)
        if layer % 2 == 0:                                   # LeakyReLU after ERB.conv1
            acc = jnp.where(acc >= 0, acc, LRELU * acc)
        act = acc
    o_ref[0] = act.astype(o_ref.dtype)


# ------------------------- wrapper / re-parameterization -------------------

def _shift_matrices(H, W):
    """S[t, src, dst] = 1 iff dst=(h,w) reads src=(h+dy, w+dx) in-bounds,
    tap t = (dy+1)*3 + (dx+1).  act_shifted = act @ S[t]."""
    HW = H * W
    s = np.zeros((N_TAPS, HW, HW), np.float32)
    taps = [(a, b) for a in (-1, 0, 1) for b in (-1, 0, 1)]
    for t, (dy, dx) in enumerate(taps):
        for h in range(H):
            hs = h + dy
            if not 0 <= hs < H:
                continue
            for w in range(W):
                ws = w + dx
                if 0 <= ws < W:
                    s[t, hs * W + ws, h * W + w] = 1.0
    return jnp.asarray(s)


def _fold_rrrb(rrrb):
    """Fold one RRRB (expand 1x1 -> be-bordered pad -> 3x3 -> reduce 1x1 ->
    residual) into an equivalent single zero-padded 3x3 conv + bias."""
    we, be, wf, bf, wr, br = rrrb
    Cin = we.shape[0]
    be = be.reshape(-1)
    bf = bf.reshape(-1)
    br = br.reshape(-1)
    hi = jax.lax.Precision.HIGHEST
    w_eff = jnp.einsum('ce,yxed,df->yxcf', we, wf, wr, precision=hi)   # (3,3,Cin,Cin)
    w_eff = w_eff.at[1, 1].add(jnp.matmul(we, wr, precision=hi) +
                               jnp.eye(Cin, dtype=we.dtype))
    b_eff = jnp.matmul(jnp.matmul(be, wf.sum(axis=(0, 1)), precision=hi)
                       + bf + be, wr, precision=hi) + br               # (Cin,)
    # Channels-first stacked tap matrix: row (t*C + j) holds w_eff[dy,dx][:, j].
    w_stack = jnp.transpose(w_eff, (0, 1, 3, 2)).reshape(N_TAPS * Cin, Cin)
    return w_stack, b_eff


@jax.jit
def encoder1_forward(x_nchw, params):
    """x_nchw: (N, C, H, W) float32 (PyTorch layout).  Returns (N, C, H, W)."""
    N, C, H, W = x_nchw.shape
    HW = H * W
    rrrbs = (params["block1"]["conv1"], params["block1"]["conv2"],
             params["block2"]["conv1"], params["block2"]["conv2"])
    folds = [_fold_rrrb(p) for p in rrrbs]
    w_all = jnp.stack([w for w, _ in folds])                            # (4, 9C, C)
    b_all = jnp.stack([jnp.broadcast_to(b[:, None], (C, HW))
                       for _, b in folds])                              # (4, C, HW)
    s_all = _shift_matrices(H, W)                                       # (9, HW, HW)
    x2 = x_nchw.reshape(N, C, HW)                                       # channels-first

    kernel = functools.partial(_encoder1_kernel, C=C, HW=HW)
    out = pl.pallas_call(
        kernel,
        out_shape=jax.ShapeDtypeStruct((N, C, HW), x_nchw.dtype),
        grid_spec=pltpu.PrefetchScalarGridSpec(
            num_scalar_prefetch=0,
            grid=(N,),
            in_specs=[
                pl.BlockSpec((1, C, HW), lambda n: (n, 0, 0)),
                pl.BlockSpec((N_LAYERS, N_TAPS * C, C), lambda n: (0, 0, 0)),
                pl.BlockSpec((N_LAYERS, C, HW), lambda n: (0, 0, 0)),
                pl.BlockSpec((N_TAPS, HW, HW), lambda n: (0, 0, 0)),
            ],
            out_specs=pl.BlockSpec((1, C, HW), lambda n: (n, 0, 0)),
        ),
        compiler_params=pltpu.CompilerParams(
            dimension_semantics=("parallel",)),
    )(x2, w_all, b_all, s_all)
    return out.reshape(N, C, H, W)


# --------------------------- parameter construction ------------------------

def init_rrrb_params(key, c_in, c_out, scale=0.1):
    ks = jax.random.split(key, 6)
    we = scale * jax.random.normal(ks[0], (c_in, c_out), jnp.float32)
    be = scale * jax.random.normal(ks[1], (1, c_out), jnp.float32)
    wf = scale * jax.random.normal(ks[2], (3, 3, c_out, c_out), jnp.float32)
    bf = scale * jax.random.normal(ks[3], (1, c_out), jnp.float32)
    wr = scale * jax.random.normal(ks[4], (c_out, c_in), jnp.float32)
    br = scale * jax.random.normal(ks[5], (1, c_in), jnp.float32)
    return (we, be, wf, bf, wr, br)


def init_encoder1_params(key, in_planes, out_planes):
    ks = jax.random.split(key, 4)
    return {
        "block1": {"conv1": init_rrrb_params(ks[0], in_planes, out_planes),
                   "conv2": init_rrrb_params(ks[1], in_planes, out_planes)},
        "block2": {"conv1": init_rrrb_params(ks[2], out_planes, out_planes),
                   "conv2": init_rrrb_params(ks[3], out_planes, out_planes)},
    }


# --------------------------- pure-JAX reference (NHWC) ----------------------

def _rrrb_ref(x, we, be, wf, bf, wr, br, apply_act):
    N, H, W, _ = x.shape
    Cout = we.shape[1]
    hi = jax.lax.Precision.HIGHEST
    y = jnp.einsum('nhwc,cd->nhwd', x, we, precision=hi) + be.reshape(1, 1, 1, -1)
    p = jnp.broadcast_to(be.reshape(1, 1, 1, -1), (N, H + 2, W + 2, Cout))
    p = p.at[:, 1:H + 1, 1:W + 1, :].set(y)
    acc = jnp.zeros((N, H, W, Cout), jnp.float32)
    for dy in range(3):
        for dx in range(3):
            acc = acc + jnp.einsum('nhwc,cd->nhwd',
                                   p[:, dy:dy + H, dx:dx + W, :], wf[dy, dx],
                                   precision=hi)
    out = acc + bf.reshape(1, 1, 1, -1) + y
    out = jnp.einsum('nhwc,cd->nhwd', out, wr, precision=hi) + br.reshape(1, 1, 1, -1)
    out = out + x
    if apply_act:
        out = jnp.where(out >= 0, out, LRELU * out)
    return out


def _encoder1_ref(x, params):
    def erb(h, p):
        h = _rrrb_ref(h, *p["conv1"], apply_act=True)
        h = _rrrb_ref(h, *p["conv2"], apply_act=False)
        return h
    h = erb(x, params["block1"])
    h = erb(h, params["block2"])
    return h


# ----------------------------------- main -----------------------------------

if __name__ == "__main__":
    N, C, H, W = 2, 8, 16, 16          # in_planes == out_planes == 8
    key = jax.random.PRNGKey(0)
    kx, kp = jax.random.split(key)

    x_nchw = jax.random.normal(kx, (N, C, H, W), jnp.float32)  # PyTorch NCHW
    params = init_encoder1_params(kp, in_planes=C, out_planes=C)

    out = jax.block_until_ready(encoder1_forward(x_nchw, params))

    # Reference implements the original (un-folded) module in NHWC.
    x_nhwc = jnp.transpose(x_nchw, (0, 2, 3, 1))
    ref_nhwc = jax.block_until_ready(_encoder1_ref(x_nhwc, params))
    ref_nchw = jnp.transpose(ref_nhwc, (0, 3, 1, 2))

    np.testing.assert_allclose(np.asarray(out), np.asarray(ref_nchw),
                               rtol=2e-2, atol=2e-2)
    assert out.shape == (N, C, H, W)
    print("KERNEL_OK")
</pallas_src>

<mosaic_0001>
module attributes {stable_mosaic.version = 11 : i64} {
  func.func @_encoder1_kernel(%arg0: i32, %arg1: memref<1x8x256xf32, #tpu.memory_space<vmem>>, %arg2: memref<4x72x8xf32, #tpu.memory_space<vmem>>, %arg3: memref<4x8x256xf32, #tpu.memory_space<vmem>>, %arg4: memref<9x256x256xf32, #tpu.memory_space<vmem>>, %arg5: memref<1x8x256xf32, #tpu.memory_space<vmem>>) attributes {dimension_semantics = [#tpu.dimension_semantics<parallel>], iteration_bounds = array<i64: 2>, scalar_prefetch = 0 : i64, scratch_operands = 0 : i64, tpu.core_type = #tpu.core_type<tc>, window_params = [{transform_indices = @transform_0, window_bounds = array<i64: 1, 8, 256>}, {pipeline_mode = #tpu.pipeline_mode<synchronous>, transform_indices = @transform_1, window_bounds = array<i64: 4, 72, 8>}, {pipeline_mode = #tpu.pipeline_mode<synchronous>, transform_indices = @transform_2, window_bounds = array<i64: 4, 8, 256>}, {pipeline_mode = #tpu.pipeline_mode<synchronous>, transform_indices = @transform_3, window_bounds = array<i64: 9, 256, 256>}, {transform_indices = @transform_4, window_bounds = array<i64: 1, 8, 256>}]} {
    %c0 = arith.constant 0 : index
    %c0_0 = arith.constant 0 : index
    %c0_1 = arith.constant 0 : index
    %0 = vector.load %arg1[%c0, %c0_0, %c0_1] : memref<1x8x256xf32, #tpu.memory_space<vmem>>, vector<1x8x256xf32>
    %1 = vector.shape_cast %0 : vector<1x8x256xf32> to vector<8x256xf32>
    %c0_2 = arith.constant 0 : index
    %c0_3 = arith.constant 0 : index
    %c0_4 = arith.constant 0 : index
    %2 = vector.load %arg2[%c0_2, %c0_3, %c0_4] : memref<4x72x8xf32, #tpu.memory_space<vmem>>, vector<1x72x8xf32>
    %3 = vector.shape_cast %2 : vector<1x72x8xf32> to vector<72x8xf32>
    %cst = arith.constant dense<0.000000e+00> : vector<72x256xf32>
    %4 = tpu.matmul %3, %1, %cst {dimension_numbers = #tpu.dot_dimension_numbers<[1], [0], [0], [1], [0, 0, 1, 1], [], []>} : vector<72x8xf32>, vector<8x256xf32>, vector<72x256xf32> -> vector<72x256xf32>
    %c0_5 = arith.constant 0 : index
    %c0_6 = arith.constant 0 : index
    %c0_7 = arith.constant 0 : index
    %5 = vector.load %arg3[%c0_5, %c0_6, %c0_7] : memref<4x8x256xf32, #tpu.memory_space<vmem>>, vector<1x8x256xf32>
    %6 = vector.shape_cast %5 : vector<1x8x256xf32> to vector<8x256xf32>
    %7 = vector.extract_strided_slice %4 {offsets = [0, 0], sizes = [8, 256], strides = [1, 1]} : vector<72x256xf32> to vector<8x256xf32>
    %c0_8 = arith.constant 0 : index
    %c0_9 = arith.constant 0 : index
    %c0_10 = arith.constant 0 : index
    %8 = vector.load %arg4[%c0_8, %c0_9, %c0_10] : memref<9x256x256xf32, #tpu.memory_space<vmem>>, vector<1x256x256xf32>
    %9 = vector.shape_cast %8 : vector<1x256x256xf32> to vector<256x256xf32>
    %cst_11 = arith.constant dense<0.000000e+00> : vector<8x256xf32>
    %10 = tpu.matmul %7, %9, %cst_11 {dimension_numbers = #tpu.dot_dimension_numbers<[1], [0], [0], [1], [0, 0, 1, 1], [], []>} : vector<8x256xf32>, vector<256x256xf32>, vector<8x256xf32> -> vector<8x256xf32>
    %11 = arith.addf %6, %10 : vector<8x256xf32>
    %12 = vector.extract_strided_slice %4 {offsets = [8, 0], sizes = [8, 256], strides = [1, 1]} : vector<72x256xf32> to vector<8x256xf32>
    %c1 = arith.constant 1 : index
    %c0_12 = arith.constant 0 : index
    %c0_13 = arith.constant 0 : index
    %13 = vector.load %arg4[%c1, %c0_12, %c0_13] : memref<9x256x256xf32, #tpu.memory_space<vmem>>, vector<1x256x256xf32>
    %14 = vector.shape_cast %13 : vector<1x256x256xf32> to vector<256x256xf32>
    %cst_14 = arith.constant dense<0.000000e+00> : vector<8x256xf32>
    %15 = tpu.matmul %12, %14, %cst_14 {dimension_numbers = #tpu.dot_dimension_numbers<[1], [0], [0], [1], [0, 0, 1, 1], [], []>} : vector<8x256xf32>, vector<256x256xf32>, vector<8x256xf32> -> vector<8x256xf32>
    %16 = arith.addf %11, %15 : vector<8x256xf32>
    %17 = vector.extract_strided_slice %4 {offsets = [16, 0], sizes = [8, 256], strides = [1, 1]} : vector<72x256xf32> to vector<8x256xf32>
    %c2 = arith.constant 2 : index
    %c0_15 = arith.constant 0 : index
    %c0_16 = arith.constant 0 : index
    %18 = vector.load %arg4[%c2, %c0_15, %c0_16] : memref<9x256x256xf32, #tpu.memory_space<vmem>>, vector<1x256x256xf32>
    %19 = vector.shape_cast %18 : vector<1x256x256xf32> to vector<256x256xf32>
    %cst_17 = arith.constant dense<0.000000e+00> : vector<8x256xf32>
    %20 = tpu.matmul %17, %19, %cst_17 {dimension_numbers = #tpu.dot_dimension_numbers<[1], [0], [0], [1], [0, 0, 1, 1], [], []>} : vector<8x256xf32>, vector<256x256xf32>, vector<8x256xf32> -> vector<8x256xf32>
    %21 = arith.addf %16, %20 : vector<8x256xf32>
    %22 = vector.extract_strided_slice %4 {offsets = [24, 0], sizes = [8, 256], strides = [1, 1]} : vector<72x256xf32> to vector<8x256xf32>
    %c3 = arith.constant 3 : index
    %c0_18 = arith.constant 0 : index
    %c0_19 = arith.constant 0 : index
    %23 = vector.load %arg4[%c3, %c0_18, %c0_19] : memref<9x256x256xf32, #tpu.memory_space<vmem>>, vector<1x256x256xf32>
    %24 = vector.shape_cast %23 : vector<1x256x256xf32> to vector<256x256xf32>
    %cst_20 = arith.constant dense<0.000000e+00> : vector<8x256xf32>
    %25 = tpu.matmul %22, %24, %cst_20 {dimension_numbers = #tpu.dot_dimension_numbers<[1], [0], [0], [1], [0, 0, 1, 1], [], []>} : vector<8x256xf32>, vector<256x256xf32>, vector<8x256xf32> -> vector<8x256xf32>
    %26 = arith.addf %21, %25 : vector<8x256xf32>
    %27 = vector.extract_strided_slice %4 {offsets = [32, 0], sizes = [8, 256], strides = [1, 1]} : vector<72x256xf32> to vector<8x256xf32>
    %28 = arith.addf %26, %27 : vector<8x256xf32>
    %29 = vector.extract_strided_slice %4 {offsets = [40, 0], sizes = [8, 256], strides = [1, 1]} : vector<72x256xf32> to vector<8x256xf32>
    %c5 = arith.constant 5 : index
    %c0_21 = arith.constant 0 : index
    %c0_22 = arith.constant 0 : index
    %30 = vector.load %arg4[%c5, %c0_21, %c0_22] : memref<9x256x256xf32, #tpu.memory_space<vmem>>, vector<1x256x256xf32>
    %31 = vector.shape_cast %30 : vector<1x256x256xf32> to vector<256x256xf32>
    %cst_23 = arith.constant dense<0.000000e+00> : vector<8x256xf32>
    %32 = tpu.matmul %29, %31, %cst_23 {dimension_numbers = #tpu.dot_dimension_numbers<[1], [0], [0], [1], [0, 0, 1, 1], [], []>} : vector<8x256xf32>, vector<256x256xf32>, vector<8x256xf32> -> vector<8x256xf32>
    %33 = arith.addf %28, %32 : vector<8x256xf32>
    %34 = vector.extract_strided_slice %4 {offsets = [48, 0], sizes = [8, 256], strides = [1, 1]} : vector<72x256xf32> to vector<8x256xf32>
    %c6 = arith.constant 6 : index
    %c0_24 = arith.constant 0 : index
    %c0_25 = arith.constant 0 : index
    %35 = vector.load %arg4[%c6, %c0_24, %c0_25] : memref<9x256x256xf32, #tpu.memory_space<vmem>>, vector<1x256x256xf32>
    %36 = vector.shape_cast %35 : vector<1x256x256xf32> to vector<256x256xf32>
    %cst_26 = arith.constant dense<0.000000e+00> : vector<8x256xf32>
    %37 = tpu.matmul %34, %36, %cst_26 {dimension_numbers = #tpu.dot_dimension_numbers<[1], [0], [0], [1], [0, 0, 1, 1], [], []>} : vector<8x256xf32>, vector<256x256xf32>, vector<8x256xf32> -> vector<8x256xf32>
    %38 = arith.addf %33, %37 : vector<8x256xf32>
    %39 = vector.extract_strided_slice %4 {offsets = [56, 0], sizes = [8, 256], strides = [1, 1]} : vector<72x256xf32> to vector<8x256xf32>
    %c7 = arith.constant 7 : index
    %c0_27 = arith.constant 0 : index
    %c0_28 = arith.constant 0 : index
    %40 = vector.load %arg4[%c7, %c0_27, %c0_28] : memref<9x256x256xf32, #tpu.memory_space<vmem>>, vector<1x256x256xf32>
    %41 = vector.shape_cast %40 : vector<1x256x256xf32> to vector<256x256xf32>
    %cst_29 = arith.constant dense<0.000000e+00> : vector<8x256xf32>
    %42 = tpu.matmul %39, %41, %cst_29 {dimension_numbers = #tpu.dot_dimension_numbers<[1], [0], [0], [1], [0, 0, 1, 1], [], []>} : vector<8x256xf32>, vector<256x256xf32>, vector<8x256xf32> -> vector<8x256xf32>
    %43 = arith.addf %38, %42 : vector<8x256xf32>
    %44 = vector.extract_strided_slice %4 {offsets = [64, 0], sizes = [8, 256], strides = [1, 1]} : vector<72x256xf32> to vector<8x256xf32>
    %c8 = arith.constant 8 : index
    %c0_30 = arith.constant 0 : index
    %c0_31 = arith.constant 0 : index
    %45 = vector.load %arg4[%c8, %c0_30, %c0_31] : memref<9x256x256xf32, #tpu.memory_space<vmem>>, vector<1x256x256xf32>
    %46 = vector.shape_cast %45 : vector<1x256x256xf32> to vector<256x256xf32>
    %cst_32 = arith.constant dense<0.000000e+00> : vector<8x256xf32>
    %47 = tpu.matmul %44, %46, %cst_32 {dimension_numbers = #tpu.dot_dimension_numbers<[1], [0], [0], [1], [0, 0, 1, 1], [], []>} : vector<8x256xf32>, vector<256x256xf32>, vector<8x256xf32> -> vector<8x256xf32>
    %48 = arith.addf %43, %47 : vector<8x256xf32>
    %cst_33 = arith.constant 0.000000e+00 : f32
    %49 = vector.broadcast %cst_33 : f32 to vector<8x256xf32>
    %50 = arith.cmpf oge, %48, %49 : vector<8x256xf32>
    %cst_34 = arith.constant 1.000000e-01 : f32
    %51 = vector.broadcast %cst_34 : f32 to vector<8x256xf32>
    %52 = arith.mulf %51, %48 : vector<8x256xf32>
    %53 = arith.select %50, %48, %52 : vector<8x256xi1>, vector<8x256xf32>
    %c1_35 = arith.constant 1 : index
    %c0_36 = arith.constant 0 : index
    %c0_37 = arith.constant 0 : index
    %54 = vector.load %arg2[%c1_35, %c0_36, %c0_37] : memref<4x72x8xf32, #tpu.memory_space<vmem>>, vector<1x72x8xf32>
    %55 = vector.shape_cast %54 : vector<1x72x8xf32> to vector<72x8xf32>
    %cst_38 = arith.constant dense<0.000000e+00> : vector<72x256xf32>
    %56 = tpu.matmul %55, %53, %cst_38 {dimension_numbers = #tpu.dot_dimension_numbers<[1], [0], [0], [1], [0, 0, 1, 1], [], []>} : vector<72x8xf32>, vector<8x256xf32>, vector<72x256xf32> -> vector<72x256xf32>
    %c1_39 = arith.constant 1 : index
    %c0_40 = arith.constant 0 : index
    %c0_41 = arith.constant 0 : index
    %57 = vector.load %arg3[%c1_39, %c0_40, %c0_41] : memref<4x8x256xf32, #tpu.memory_space<vmem>>, vector<1x8x256xf32>
    %58 = vector.shape_cast %57 : vector<1x8x256xf32> to vector<8x256xf32>
    %59 = vector.extract_strided_slice %56 {offsets = [0, 0], sizes = [8, 256], strides = [1, 1]} : vector<72x256xf32> to vector<8x256xf32>
    %c0_42 = arith.constant 0 : index
    %c0_43 = arith.constant 0 : index
    %c0_44 = arith.constant 0 : index
    %60 = vector.load %arg4[%c0_42, %c0_43, %c0_44] : memref<9x256x256xf32, #tpu.memory_space<vmem>>, vector<1x256x256xf32>
    %61 = vector.shape_cast %60 : vector<1x256x256xf32> to vector<256x256xf32>
    %cst_45 = arith.constant dense<0.000000e+00> : vector<8x256xf32>
    %62 = tpu.matmul %59, %61, %cst_45 {dimension_numbers = #tpu.dot_dimension_numbers<[1], [0], [0], [1], [0, 0, 1, 1], [], []>} : vector<8x256xf32>, vector<256x256xf32>, vector<8x256xf32> -> vector<8x256xf32>
    %63 = arith.addf %58, %62 : vector<8x256xf32>
    %64 = vector.extract_strided_slice %56 {offsets = [8, 0], sizes = [8, 256], strides = [1, 1]} : vector<72x256xf32> to vector<8x256xf32>
    %c1_46 = arith.constant 1 : index
    %c0_47 = arith.constant 0 : index
    %c0_48 = arith.constant 0 : index
    %65 = vector.load %arg4[%c1_46, %c0_47, %c0_48] : memref<9x256x256xf32, #tpu.memory_space<vmem>>, vector<1x256x256xf32>
    %66 = vector.shape_cast %65 : vector<1x256x256xf32> to vector<256x256xf32>
    %cst_49 = arith.constant dense<0.000000e+00> : vector<8x256xf32>
    %67 = tpu.matmul %64, %66, %cst_49 {dimension_numbers = #tpu.dot_dimension_numbers<[1], [0], [0], [1], [0, 0, 1, 1], [], []>} : vector<8x256xf32>, vector<256x256xf32>, vector<8x256xf32> -> vector<8x256xf32>
    %68 = arith.addf %63, %67 : vector<8x256xf32>
    %69 = vector.extract_strided_slice %56 {offsets = [16, 0], sizes = [8, 256], strides = [1, 1]} : vector<72x256xf32> to vector<8x256xf32>
    %c2_50 = arith.constant 2 : index
    %c0_51 = arith.constant 0 : index
    %c0_52 = arith.constant 0 : index
    %70 = vector.load %arg4[%c2_50, %c0_51, %c0_52] : memref<9x256x256xf32, #tpu.memory_space<vmem>>, vector<1x256x256xf32>
    %71 = vector.shape_cast %70 : vector<1x256x256xf32> to vector<256x256xf32>
    %cst_53 = arith.constant dense<0.000000e+00> : vector<8x256xf32>
    %72 = tpu.matmul %69, %71, %cst_53 {dimension_numbers = #tpu.dot_dimension_numbers<[1], [0], [0], [1], [0, 0, 1, 1], [], []>} : vector<8x256xf32>, vector<256x256xf32>, vector<8x256xf32> -> vector<8x256xf32>
    %73 = arith.addf %68, %72 : vector<8x256xf32>
    %74 = vector.extract_strided_slice %56 {offsets = [24, 0], sizes = [8, 256], strides = [1, 1]} : vector<72x256xf32> to vector<8x256xf32>
    %c3_54 = arith.constant 3 : index
    %c0_55 = arith.constant 0 : index
    %c0_56 = arith.constant 0 : index
    %75 = vector.load %arg4[%c3_54, %c0_55, %c0_56] : memref<9x256x256xf32, #tpu.memory_space<vmem>>, vector<1x256x256xf32>
    %76 = vector.shape_cast %75 : vector<1x256x256xf32> to vector<256x256xf32>
    %cst_57 = arith.constant dense<0.000000e+00> : vector<8x256xf32>
    %77 = tpu.matmul %74, %76, %cst_57 {dimension_numbers = #tpu.dot_dimension_numbers<[1], [0], [0], [1], [0, 0, 1, 1], [], []>} : vector<8x256xf32>, vector<256x256xf32>, vector<8x256xf32> -> vector<8x256xf32>
    %78 = arith.addf %73, %77 : vector<8x256xf32>
    %79 = vector.extract_strided_slice %56 {offsets = [32, 0], sizes = [8, 256], strides = [1, 1]} : vector<72x256xf32> to vector<8x256xf32>
    %80 = arith.addf %78, %79 : vector<8x256xf32>
    %81 = vector.extract_strided_slice %56 {offsets = [40, 0], sizes = [8, 256], strides = [1, 1]} : vector<72x256xf32> to vector<8x256xf32>
    %c5_58 = arith.constant 5 : index
    %c0_59 = arith.constant 0 : index
    %c0_60 = arith.constant 0 : index
    %82 = vector.load %arg4[%c5_58, %c0_59, %c0_60] : memref<9x256x256xf32, #tpu.memory_space<vmem>>, vector<1x256x256xf32>
    %83 = vector.shape_cast %82 : vector<1x256x256xf32> to vector<256x256xf32>
    %cst_61 = arith.constant dense<0.000000e+00> : vector<8x256xf32>
    %84 = tpu.matmul %81, %83, %cst_61 {dimension_numbers = #tpu.dot_dimension_numbers<[1], [0], [0], [1], [0, 0, 1, 1], [], []>} : vector<8x256xf32>, vector<256x256xf32>, vector<8x256xf32> -> vector<8x256xf32>
    %85 = arith.addf %80, %84 : vector<8x256xf32>
    %86 = vector.extract_strided_slice %56 {offsets = [48, 0], sizes = [8, 256], strides = [1, 1]} : vector<72x256xf32> to vector<8x256xf32>
    %c6_62 = arith.constant 6 : index
    %c0_63 = arith.constant 0 : index
    %c0_64 = arith.constant 0 : index
    %87 = vector.load %arg4[%c6_62, %c0_63, %c0_64] : memref<9x256x256xf32, #tpu.memory_space<vmem>>, vector<1x256x256xf32>
    %88 = vector.shape_cast %87 : vector<1x256x256xf32> to vector<256x256xf32>
    %cst_65 = arith.constant dense<0.000000e+00> : vector<8x256xf32>
    %89 = tpu.matmul %86, %88, %cst_65 {dimension_numbers = #tpu.dot_dimension_numbers<[1], [0], [0], [1], [0, 0, 1, 1], [], []>} : vector<8x256xf32>, vector<256x256xf32>, vector<8x256xf32> -> vector<8x256xf32>
    %90 = arith.addf %85, %89 : vector<8x256xf32>
    %91 = vector.extract_strided_slice %56 {offsets = [56, 0], sizes = [8, 256], strides = [1, 1]} : vector<72x256xf32> to vector<8x256xf32>
    %c7_66 = arith.constant 7 : index
    %c0_67 = arith.constant 0 : index
    %c0_68 = arith.constant 0 : index
    %92 = vector.load %arg4[%c7_66, %c0_67, %c0_68] : memref<9x256x256xf32, #tpu.memory_space<vmem>>, vector<1x256x256xf32>
    %93 = vector.shape_cast %92 : vector<1x256x256xf32> to vector<256x256xf32>
    %cst_69 = arith.constant dense<0.000000e+00> : vector<8x256xf32>
    %94 = tpu.matmul %91, %93, %cst_69 {dimension_numbers = #tpu.dot_dimension_numbers<[1], [0], [0], [1], [0, 0, 1, 1], [], []>} : vector<8x256xf32>, vector<256x256xf32>, vector<8x256xf32> -> vector<8x256xf32>
    %95 = arith.addf %90, %94 : vector<8x256xf32>
    %96 = vector.extract_strided_slice %56 {offsets = [64, 0], sizes = [8, 256], strides = [1, 1]} : vector<72x256xf32> to vector<8x256xf32>
    %c8_70 = arith.constant 8 : index
    %c0_71 = arith.constant 0 : index
    %c0_72 = arith.constant 0 : index
    %97 = vector.load %arg4[%c8_70, %c0_71, %c0_72] : memref<9x256x256xf32, #tpu.memory_space<vmem>>, vector<1x256x256xf32>
    %98 = vector.shape_cast %97 : vector<1x256x256xf32> to vector<256x256xf32>
    %cst_73 = arith.constant dense<0.000000e+00> : vector<8x256xf32>
    %99 = tpu.matmul %96, %98, %cst_73 {dimension_numbers = #tpu.dot_dimension_numbers<[1], [0], [0], [1], [0, 0, 1, 1], [], []>} : vector<8x256xf32>, vector<256x256xf32>, vector<8x256xf32> -> vector<8x256xf32>
    %100 = arith.addf %95, %99 : vector<8x256xf32>
    %c2_74 = arith.constant 2 : index
    %c0_75 = arith.constant 0 : index
    %c0_76 = arith.constant 0 : index
    %101 = vector.load %arg2[%c2_74, %c0_75, %c0_76] : memref<4x72x8xf32, #tpu.memory_space<vmem>>, vector<1x72x8xf32>
    %102 = vector.shape_cast %101 : vector<1x72x8xf32> to vector<72x8xf32>
    %cst_77 = arith.constant dense<0.000000e+00> : vector<72x256xf32>
    %103 = tpu.matmul %102, %100, %cst_77 {dimension_numbers = #tpu.dot_dimension_numbers<[1], [0], [0], [1], [0, 0, 1, 1], [], []>} : vector<72x8xf32>, vector<8x256xf32>, vector<72x256xf32> -> vector<72x256xf32>
    %c2_78 = arith.constant 2 : index
    %c0_79 = arith.constant 0 : index
    %c0_80 = arith.constant 0 : index
    %104 = vector.load %arg3[%c2_78, %c0_79, %c0_80] : memref<4x8x256xf32, #tpu.memory_space<vmem>>, vector<1x8x256xf32>
    %105 = vector.shape_cast %104 : vector<1x8x256xf32> to vector<8x256xf32>
    %106 = vector.extract_strided_slice %103 {offsets = [0, 0], sizes = [8, 256], strides = [1, 1]} : vector<72x256xf32> to vector<8x256xf32>
    %c0_81 = arith.constant 0 : index
    %c0_82 = arith.constant 0 : index
    %c0_83 = arith.constant 0 : index
    %107 = vector.load %arg4[%c0_81, %c0_82, %c0_83] : memref<9x256x256xf32, #tpu.memory_space<vmem>>, vector<1x256x256xf32>
    %108 = vector.shape_cast %107 : vector<1x256x256xf32> to vector<256x256xf32>
    %cst_84 = arith.constant dense<0.000000e+00> : vector<8x256xf32>
    %109 = tpu.matmul %106, %108, %cst_84 {dimension_numbers = #tpu.dot_dimension_numbers<[1], [0], [0], [1], [0, 0, 1, 1], [], []>} : vector<8x256xf32>, vector<256x256xf32>, vector<8x256xf32> -> vector<8x256xf32>
    %110 = arith.addf %105, %109 : vector<8x256xf32>
    %111 = vector.extract_strided_slice %103 {offsets = [8, 0], sizes = [8, 256], strides = [1, 1]} : vector<72x256xf32> to vector<8x256xf32>
    %c1_85 = arith.constant 1 : index
    %c0_86 = arith.constant 0 : index
    %c0_87 = arith.constant 0 : index
    %112 = vector.load %arg4[%c1_85, %c0_86, %c0_87] : memref<9x256x256xf32, #tpu.memory_space<vmem>>, vector<1x256x256xf32>
    %113 = vector.shape_cast %112 : vector<1x256x256xf32> to vector<256x256xf32>
    %cst_88 = arith.constant dense<0.000000e+00> : vector<8x256xf32>
    %114 = tpu.matmul %111, %113, %cst_88 {dimension_numbers = #tpu.dot_dimension_numbers<[1], [0], [0], [1], [0, 0, 1, 1], [], []>} : vector<8x256xf32>, vector<256x256xf32>, vector<8x256xf32> -> vector<8x256xf32>
    %115 = arith.addf %110, %114 : vector<8x256xf32>
    %116 = vector.extract_strided_slice %103 {offsets = [16, 0], sizes = [8, 256], strides = [1, 1]} : vector<72x256xf32> to vector<8x256xf32>
    %c2_89 = arith.constant 2 : index
    %c0_90 = arith.constant 0 : index
    %c0_91 = arith.constant 0 : index
    %117 = vector.load %arg4[%c2_89, %c0_90, %c0_91] : memref<9x256x256xf32, #tpu.memory_space<vmem>>, vector<1x256x256xf32>
    %118 = vector.shape_cast %117 : vector<1x256x256xf32> to vector<256x256xf32>
    %cst_92 = arith.constant dense<0.000000e+00> : vector<8x256xf32>
    %119 = tpu.matmul %116, %118, %cst_92 {dimension_numbers = #tpu.dot_dimension_numbers<[1], [0], [0], [1], [0, 0, 1, 1], [], []>} : vector<8x256xf32>, vector<256x256xf32>, vector<8x256xf32> -> vector<8x256xf32>
    %120 = arith.addf %115, %119 : vector<8x256xf32>
    %121 = vector.extract_strided_slice %103 {offsets = [24, 0], sizes = [8, 256], strides = [1, 1]} : vector<72x256xf32> to vector<8x256xf32>
    %c3_93 = arith.constant 3 : index
    %c0_94 = arith.constant 0 : index
    %c0_95 = arith.constant 0 : index
    %122 = vector.load %arg4[%c3_93, %c0_94, %c0_95] : memref<9x256x256xf32, #tpu.memory_space<vmem>>, vector<1x256x256xf32>
    %123 = vector.shape_cast %122 : vector<1x256x256xf32> to vector<256x256xf32>
    %cst_96 = arith.constant dense<0.000000e+00> : vector<8x256xf32>
    %124 = tpu.matmul %121, %123, %cst_96 {dimension_numbers = #tpu.dot_dimension_numbers<[1], [0], [0], [1], [0, 0, 1, 1], [], []>} : vector<8x256xf32>, vector<256x256xf32>, vector<8x256xf32> -> vector<8x256xf32>
    %125 = arith.addf %120, %124 : vector<8x256xf32>
    %126 = vector.extract_strided_slice %103 {offsets = [32, 0], sizes = [8, 256], strides = [1, 1]} : vector<72x256xf32> to vector<8x256xf32>
    %127 = arith.addf %125, %126 : vector<8x256xf32>
    %128 = vector.extract_strided_slice %103 {offsets = [40, 0], sizes = [8, 256], strides = [1, 1]} : vector<72x256xf32> to vector<8x256xf32>
    %c5_97 = arith.constant 5 : index
    %c0_98 = arith.constant 0 : index
    %c0_99 = arith.constant 0 : index
    %129 = vector.load %arg4[%c5_97, %c0_98, %c0_99] : memref<9x256x256xf32, #tpu.memory_space<vmem>>, vector<1x256x256xf32>
    %130 = vector.shape_cast %129 : vector<1x256x256xf32> to vector<256x256xf32>
    %cst_100 = arith.constant dense<0.000000e+00> : vector<8x256xf32>
    %131 = tpu.matmul %128, %130, %cst_100 {dimension_numbers = #tpu.dot_dimension_numbers<[1], [0], [0], [1], [0, 0, 1, 1], [], []>} : vector<8x256xf32>, vector<256x256xf32>, vector<8x256xf32> -> vector<8x256xf32>
    %132 = arith.addf %127, %131 : vector<8x256xf32>
    %133 = vector.extract_strided_slice %103 {offsets = [48, 0], sizes = [8, 256], strides = [1, 1]} : vector<72x256xf32> to vector<8x256xf32>
    %c6_101 = arith.constant 6 : index
    %c0_102 = arith.constant 0 : index
    %c0_103 = arith.constant 0 : index
    %134 = vector.load %arg4[%c6_101, %c0_102, %c0_103] : memref<9x256x256xf32, #tpu.memory_space<vmem>>, vector<1x256x256xf32>
    %135 = vector.shape_cast %134 : vector<1x256x256xf32> to vector<256x256xf32>
    %cst_104 = arith.constant dense<0.000000e+00> : vector<8x256xf32>
    %136 = tpu.matmul %133, %135, %cst_104 {dimension_numbers = #tpu.dot_dimension_numbers<[1], [0], [0], [1], [0, 0, 1, 1], [], []>} : vector<8x256xf32>, vector<256x256xf32>, vector<8x256xf32> -> vector<8x256xf32>
    %137 = arith.addf %132, %136 : vector<8x256xf32>
    %138 = vector.extract_strided_slice %103 {offsets = [56, 0], sizes = [8, 256], strides = [1, 1]} : vector<72x256xf32> to vector<8x256xf32>
    %c7_105 = arith.constant 7 : index
    %c0_106 = arith.constant 0 : index
    %c0_107 = arith.constant 0 : index
    %139 = vector.load %arg4[%c7_105, %c0_106, %c0_107] : memref<9x256x256xf32, #tpu.memory_space<vmem>>, vector<1x256x256xf32>
    %140 = vector.shape_cast %139 : vector<1x256x256xf32> to vector<256x256xf32>
    %cst_108 = arith.constant dense<0.000000e+00> : vector<8x256xf32>
    %141 = tpu.matmul %138, %140, %cst_108 {dimension_numbers = #tpu.dot_dimension_numbers<[1], [0], [0], [1], [0, 0, 1, 1], [], []>} : vector<8x256xf32>, vector<256x256xf32>, vector<8x256xf32> -> vector<8x256xf32>
    %142 = arith.addf %137, %141 : vector<8x256xf32>
    %143 = vector.extract_strided_slice %103 {offsets = [64, 0], sizes = [8, 256], strides = [1, 1]} : vector<72x256xf32> to vector<8x256xf32>
    %c8_109 = arith.constant 8 : index
    %c0_110 = arith.constant 0 : index
    %c0_111 = arith.constant 0 : index
    %144 = vector.load %arg4[%c8_109, %c0_110, %c0_111] : memref<9x256x256xf32, #tpu.memory_space<vmem>>, vector<1x256x256xf32>
    %145 = vector.shape_cast %144 : vector<1x256x256xf32> to vector<256x256xf32>
    %cst_112 = arith.constant dense<0.000000e+00> : vector<8x256xf32>
    %146 = tpu.matmul %143, %145, %cst_112 {dimension_numbers = #tpu.dot_dimension_numbers<[1], [0], [0], [1], [0, 0, 1, 1], [], []>} : vector<8x256xf32>, vector<256x256xf32>, vector<8x256xf32> -> vector<8x256xf32>
    %147 = arith.addf %142, %146 : vector<8x256xf32>
    %cst_113 = arith.constant 0.000000e+00 : f32
    %148 = vector.broadcast %cst_113 : f32 to vector<8x256xf32>
    %149 = arith.cmpf oge, %147, %148 : vector<8x256xf32>
    %cst_114 = arith.constant 1.000000e-01 : f32
    %150 = vector.broadcast %cst_114 : f32 to vector<8x256xf32>
    %151 = arith.mulf %150, %147 : vector<8x256xf32>
    %152 = arith.select %149, %147, %151 : vector<8x256xi1>, vector<8x256xf32>
    %c3_115 = arith.constant 3 : index
    %c0_116 = arith.constant 0 : index
    %c0_117 = arith.constant 0 : index
    %153 = vector.load %arg2[%c3_115, %c0_116, %c0_117] : memref<4x72x8xf32, #tpu.memory_space<vmem>>, vector<1x72x8xf32>
    %154 = vector.shape_cast %153 : vector<1x72x8xf32> to vector<72x8xf32>
    %cst_118 = arith.constant dense<0.000000e+00> : vector<72x256xf32>
    %155 = tpu.matmul %154, %152, %cst_118 {dimension_numbers = #tpu.dot_dimension_numbers<[1], [0], [0], [1], [0, 0, 1, 1], [], []>} : vector<72x8xf32>, vector<8x256xf32>, vector<72x256xf32> -> vector<72x256xf32>
    %c3_119 = arith.constant 3 : index
    %c0_120 = arith.constant 0 : index
    %c0_121 = arith.constant 0 : index
    %156 = vector.load %arg3[%c3_119, %c0_120, %c0_121] : memref<4x8x256xf32, #tpu.memory_space<vmem>>, vector<1x8x256xf32>
    %157 = vector.shape_cast %156 : vector<1x8x256xf32> to vector<8x256xf32>
    %158 = vector.extract_strided_slice %155 {offsets = [0, 0], sizes = [8, 256], strides = [1, 1]} : vector<72x256xf32> to vector<8x256xf32>
    %c0_122 = arith.constant 0 : index
    %c0_123 = arith.constant 0 : index
    %c0_124 = arith.constant 0 : index
    %159 = vector.load %arg4[%c0_122, %c0_123, %c0_124] : memref<9x256x256xf32, #tpu.memory_space<vmem>>, vector<1x256x256xf32>
    %160 = vector.shape_cast %159 : vector<1x256x256xf32> to vector<256x256xf32>
    %cst_125 = arith.constant dense<0.000000e+00> : vector<8x256xf32>
    %161 = tpu.matmul %158, %160, %cst_125 {dimension_numbers = #tpu.dot_dimension_numbers<[1], [0], [0], [1], [0, 0, 1, 1], [], []>} : vector<8x256xf32>, vector<256x256xf32>, vector<8x256xf32> -> vector<8x256xf32>
    %162 = arith.addf %157, %161 : vector<8x256xf32>
    %163 = vector.extract_strided_slice %155 {offsets = [8, 0], sizes = [8, 256], strides = [1, 1]} : vector<72x256xf32> to vector<8x256xf32>
    %c1_126 = arith.constant 1 : index
    %c0_127 = arith.constant 0 : index
    %c0_128 = arith.constant 0 : index
    %164 = vector.load %arg4[%c1_126, %c0_127, %c0_128] : memref<9x256x256xf32, #tpu.memory_space<vmem>>, vector<1x256x256xf32>
    %165 = vector.shape_cast %164 : vector<1x256x256xf32> to vector<256x256xf32>
    %cst_129 = arith.constant dense<0.000000e+00> : vector<8x256xf32>
    %166 = tpu.matmul %163, %165, %cst_129 {dimension_numbers = #tpu.dot_dimension_numbers<[1], [0], [0], [1], [0, 0, 1, 1], [], []>} : vector<8x256xf32>, vector<256x256xf32>, vector<8x256xf32> -> vector<8x256xf32>
    %167 = arith.addf %162, %166 : vector<8x256xf32>
    %168 = vector.extract_strided_slice %155 {offsets = [16, 0], sizes = [8, 256], strides = [1, 1]} : vector<72x256xf32> to vector<8x256xf32>
    %c2_130 = arith.constant 2 : index
    %c0_131 = arith.constant 0 : index
    %c0_132 = arith.constant 0 : index
    %169 = vector.load %arg4[%c2_130, %c0_131, %c0_132] : memref<9x256x256xf32, #tpu.memory_space<vmem>>, vector<1x256x256xf32>
    %170 = vector.shape_cast %169 : vector<1x256x256xf32> to vector<256x256xf32>
    %cst_133 = arith.constant dense<0.000000e+00> : vector<8x256xf32>
    %171 = tpu.matmul %168, %170, %cst_133 {dimension_numbers = #tpu.dot_dimension_numbers<[1], [0], [0], [1], [0, 0, 1, 1], [], []>} : vector<8x256xf32>, vector<256x256xf32>, vector<8x256xf32> -> vector<8x256xf32>
    %172 = arith.addf %167, %171 : vector<8x256xf32>
    %173 = vector.extract_strided_slice %155 {offsets = [24, 0], sizes = [8, 256], strides = [1, 1]} : vector<72x256xf32> to vector<8x256xf32>
    %c3_134 = arith.constant 3 : index
    %c0_135 = arith.constant 0 : index
    %c0_136 = arith.constant 0 : index
    %174 = vector.load %arg4[%c3_134, %c0_135, %c0_136] : memref<9x256x256xf32, #tpu.memory_space<vmem>>, vector<1x256x256xf32>
    %175 = vector.shape_cast %174 : vector<1x256x256xf32> to vector<256x256xf32>
    %cst_137 = arith.constant dense<0.000000e+00> : vector<8x256xf32>
    %176 = tpu.matmul %173, %175, %cst_137 {dimension_numbers = #tpu.dot_dimension_numbers<[1], [0], [0], [1], [0, 0, 1, 1], [], []>} : vector<8x256xf32>, vector<256x256xf32>, vector<8x256xf32> -> vector<8x256xf32>
    %177 = arith.addf %172, %176 : vector<8x256xf32>
    %178 = vector.extract_strided_slice %155 {offsets = [32, 0], sizes = [8, 256], strides = [1, 1]} : vector<72x256xf32> to vector<8x256xf32>
    %179 = arith.addf %177, %178 : vector<8x256xf32>
    %180 = vector.extract_strided_slice %155 {offsets = [40, 0], sizes = [8, 256], strides = [1, 1]} : vector<72x256xf32> to vector<8x256xf32>
    %c5_138 = arith.constant 5 : index
    %c0_139 = arith.constant 0 : index
    %c0_140 = arith.constant 0 : index
    %181 = vector.load %arg4[%c5_138, %c0_139, %c0_140] : memref<9x256x256xf32, #tpu.memory_space<vmem>>, vector<1x256x256xf32>
    %182 = vector.shape_cast %181 : vector<1x256x256xf32> to vector<256x256xf32>
    %cst_141 = arith.constant dense<0.000000e+00> : vector<8x256xf32>
    %183 = tpu.matmul %180, %182, %cst_141 {dimension_numbers = #tpu.dot_dimension_numbers<[1], [0], [0], [1], [0, 0, 1, 1], [], []>} : vector<8x256xf32>, vector<256x256xf32>, vector<8x256xf32> -> vector<8x256xf32>
    %184 = arith.addf %179, %183 : vector<8x256xf32>
    %185 = vector.extract_strided_slice %155 {offsets = [48, 0], sizes = [8, 256], strides = [1, 1]} : vector<72x256xf32> to vector<8x256xf32>
    %c6_142 = arith.constant 6 : index
    %c0_143 = arith.constant 0 : index
    %c0_144 = arith.constant 0 : index
    %186 = vector.load %arg4[%c6_142, %c0_143, %c0_144] : memref<9x256x256xf32, #tpu.memory_space<vmem>>, vector<1x256x256xf32>
    %187 = vector.shape_cast %186 : vector<1x256x256xf32> to vector<256x256xf32>
    %cst_145 = arith.constant dense<0.000000e+00> : vector<8x256xf32>
    %188 = tpu.matmul %185, %187, %cst_145 {dimension_numbers = #tpu.dot_dimension_numbers<[1], [0], [0], [1], [0, 0, 1, 1], [], []>} : vector<8x256xf32>, vector<256x256xf32>, vector<8x256xf32> -> vector<8x256xf32>
    %189 = arith.addf %184, %188 : vector<8x256xf32>
    %190 = vector.extract_strided_slice %155 {offsets = [56, 0], sizes = [8, 256], strides = [1, 1]} : vector<72x256xf32> to vector<8x256xf32>
    %c7_146 = arith.constant 7 : index
    %c0_147 = arith.constant 0 : index
    %c0_148 = arith.constant 0 : index
    %191 = vector.load %arg4[%c7_146, %c0_147, %c0_148] : memref<9x256x256xf32, #tpu.memory_space<vmem>>, vector<1x256x256xf32>
    %192 = vector.shape_cast %191 : vector<1x256x256xf32> to vector<256x256xf32>
    %cst_149 = arith.constant dense<0.000000e+00> : vector<8x256xf32>
    %193 = tpu.matmul %190, %192, %cst_149 {dimension_numbers = #tpu.dot_dimension_numbers<[1], [0], [0], [1], [0, 0, 1, 1], [], []>} : vector<8x256xf32>, vector<256x256xf32>, vector<8x256xf32> -> vector<8x256xf32>
    %194 = arith.addf %189, %193 : vector<8x256xf32>
    %195 = vector.extract_strided_slice %155 {offsets = [64, 0], sizes = [8, 256], strides = [1, 1]} : vector<72x256xf32> to vector<8x256xf32>
    %c8_150 = arith.constant 8 : index
    %c0_151 = arith.constant 0 : index
    %c0_152 = arith.constant 0 : index
    %196 = vector.load %arg4[%c8_150, %c0_151, %c0_152] : memref<9x256x256xf32, #tpu.memory_space<vmem>>, vector<1x256x256xf32>
    %197 = vector.shape_cast %196 : vector<1x256x256xf32> to vector<256x256xf32>
    %cst_153 = arith.constant dense<0.000000e+00> : vector<8x256xf32>
    %198 = tpu.matmul %195, %197, %cst_153 {dimension_numbers = #tpu.dot_dimension_numbers<[1], [0], [0], [1], [0, 0, 1, 1], [], []>} : vector<8x256xf32>, vector<256x256xf32>, vector<8x256xf32> -> vector<8x256xf32>
    %199 = arith.addf %194, %198 : vector<8x256xf32>
    %c0_154 = arith.constant 0 : index
    %c0_155 = arith.constant 0 : index
    %c0_156 = arith.constant 0 : index
    %200 = vector.load %arg5[%c0_154, %c0_155, %c0_156] : memref<1x8x256xf32, #tpu.memory_space<vmem>>, vector<1x8x256xf32>
    %201 = vector.shape_cast %200 : vector<1x8x256xf32> to vector<8x256xf32>
    %202 = vector.shape_cast %199 : vector<8x256xf32> to vector<1x8x256xf32>
    tpu.vector_store %arg5[%c0_154, %c0_155, %c0_156], %202 {strides = array<i32>} : memref<1x8x256xf32, #tpu.memory_space<vmem>>, vector<1x8x256xf32>,
    return
  }
  func.func @transform_0(%arg0: i32) -> (i32, i32, i32) {
    %c0_i32 = arith.constant 0 : i32
    %c0_i32_0 = arith.constant 0 : i32
    %c0_i32_1 = arith.constant 0 : i32
    return %arg0, %c0_i32, %c0_i32_0 : i32, i32, i32
  }
  func.func @transform_1(%arg0: i32) -> (i32, i32, i32) {
    %c0_i32 = arith.constant 0 : i32
    %c0_i32_0 = arith.constant 0 : i32
    %c0_i32_1 = arith.constant 0 : i32
    %c0_i32_2 = arith.constant 0 : i32
    return %c0_i32, %c0_i32_0, %c0_i32_1 : i32, i32, i32
  }
  func.func @transform_2(%arg0: i32) -> (i32, i32, i32) {
    %c0_i32 = arith.constant 0 : i32
    %c0_i32_0 = arith.constant 0 : i32
    %c0_i32_1 = arith.constant 0 : i32
    %c0_i32_2 = arith.constant 0 : i32
    return %c0_i32, %c0_i32_0, %c0_i32_1 : i32, i32, i32
  }
  func.func @transform_3(%arg0: i32) -> (i32, i32, i32) {
    %c0_i32 = arith.constant 0 : i32
    %c0_i32_0 = arith.constant 0 : i32
    %c0_i32_1 = arith.constant 0 : i32
    %c0_i32_2 = arith.constant 0 : i32
    return %c0_i32, %c0_i32_0, %c0_i32_1 : i32, i32, i32
  }
  func.func @transform_4(%arg0: i32) -> (i32, i32, i32) {
    %c0_i32 = arith.constant 0 : i32
    %c0_i32_0 = arith.constant 0 : i32
    %c0_i32_1 = arith.constant 0 : i32
    return %arg0, %c0_i32, %c0_i32_0 : i32, i32, i32
  }
}

</mosaic_0001>

<llo_original>
// kernel: encoder1_forward.1
$region0: #{encoder1_forward.1}
  #allocation0 [shape = 'u32[]', space=smem, size = 0x4, offset = 0x4, fixed_abs, tag = 'smem constant byte address 0x4 - core index']
  #allocation1 [shape = 'u32[144,128]{1,0:T(1,128)}', space=vmem, size = 0x12000, scoped, tag = 'internal scratch']
  %s0 = inlined_call_operand.vmem [shape: f32[2,8,256], index: 0, kind: input, shape index: {}]
  %s1 = inlined_call_operand.vmem [shape: f32[4,72,8], index: 1, kind: input, shape index: {}]
  %s2 = inlined_call_operand.vmem [shape: f32[4,8,256], index: 2, kind: input, shape index: {}]
  %s3 = inlined_call_operand.hbm [shape: f32[9,256,256], index: 3, kind: input, shape index: {}]
  %s4 = inlined_call_operand.vmem [shape: f32[2,8,256], index: 4, kind: output, shape index: {}]
  %s5 = sld [smem:[#allocation0]]
  $region53: #{encoder1_forward.1} parent=0
    _
  %s7 = ssub.s32 1, %s5
  %s8 = scalar_select 0, %s7, %s5
  $region1: #{encoder1_forward.1} parent=0
    #allocation2 [shape = 'u8[2359296]{0}', space=vmem, size = 0x240000, scoped, tag = 'input window, operand 3, single buffered']
    #allocation3 [shape = 's32[2]{0}', space=sflag, size = 0x8, scoped, tag = 'scoped memory for encoder1_forward.1']
    %9 = vsyncpa [#allocation3], 0
    loop: start=0, step=1, limit=4
    $region2: #{encoder1_forward.1} parent=1 // loop_pre_header
      _
    $region3: #{encoder1_forward.1} parent=1 // loop_header
      %s11 = sphi 0, %s15
      %p12 = scmp.ge.s32.totalorder %s11, 4
      %s21 = sphi 0, %s23
      %s24 = sphi 0, %s21
      %s25 = sphi 0, %s24
      %s41 = sphi 0, %s25
      %s45 = sphi 0, %s45
      %s47 = sphi 0, %s45
      %s48 = sphi 0, %s47
      %s62 = sphi 0, %s48
      %s66 = sphi 0, %s66
      %s68 = sphi 0, %s66
      %s69 = sphi 0, %s68
      %s83 = sphi 0, %s69
      %s87 = sphi 0, %s87
      %s89 = sphi 0, %s87
      %s90 = sphi 0, %s89
      %s104 = sphi 0, %s90
      %s110 = sphi 0, %s112
      %s113 = sphi 0, %s110
      %s114 = sphi 0, %s113
      %s130 = sphi 0, %s114
    $region4: #{encoder1_forward.1} parent=1 // loop_header_branch
      %14 = sbr.rel (%p12) target = $region8
    $region5: #{encoder1_forward.1} parent=1 // loop_body
      %s16 = ssub.s32 %s11, 1
      %s17 = ssub.s32 %s11, 2
      %s18 = sadd.s32 %s11, 1
      %s19 = ssub.s32 %s11, %s18
      %p20 = scmp.eq.s32.totalorder %s19, 0
      %s22 = sadd.s32 %s21, 1
      %s23 = scalar_select %p20, %s21, %s22
      %p26 = pneg %p20
      %p27 = scmp.eq.s32.totalorder %s11, 1
      %p28 = por %p26, %p27
      %p29 = scmp.ne.s32.totalorder %s21, %s24
      %p30 = scmp.eq.s32.totalorder %s11, 0
      %p31 = por %p29, %p30
      %p32 = scmp.ne.s32.totalorder %s21, %s24
      %p33 = scmp.eq.s32.totalorder %s16, 1
      %p34 = por %p32, %p33
      %p35 = scmp.ne.s32.totalorder %s24, %s25
      %p36 = scmp.eq.s32.totalorder %s16, 0
      %p37 = por %p35, %p36
      %p38 = scmp.ne.s32.totalorder %s24, %s25
      %p39 = scmp.eq.s32.totalorder %s17, 1
      %p40 = por %p38, %p39
      %p42 = scmp.ne.s32.totalorder %s25, %s41
      %p43 = scmp.eq.s32.totalorder %s17, 0
      %p44 = por %p42, %p43
      %s46 = sadd.s32 %s45, 1
      %p49 = scmp.eq.s32.totalorder %s11, 1
      %p50 = scmp.ne.s32.totalorder %s45, %s47
      %p51 = scmp.eq.s32.totalorder %s11, 0
      %p52 = por %p50, %p51
      %p53 = scmp.ne.s32.totalorder %s45, %s47
      %p54 = scmp.eq.s32.totalorder %s16, 1
      %p55 = por %p53, %p54
      %p56 = scmp.ne.s32.totalorder %s47, %s48
      %p57 = scmp.eq.s32.totalorder %s16, 0
      %p58 = por %p56, %p57
      %p59 = scmp.ne.s32.totalorder %s47, %s48
      %p60 = scmp.eq.s32.totalorder %s17, 1
      %p61 = por %p59, %p60
      %p63 = scmp.ne.s32.totalorder %s48, %s62
      %p64 = scmp.eq.s32.totalorder %s17, 0
      %p65 = por %p63, %p64
      %s67 = sadd.s32 %s66, 1
      %p70 = scmp.eq.s32.totalorder %s11, 1
      %p71 = scmp.ne.s32.totalorder %s66, %s68
      %p72 = scmp.eq.s32.totalorder %s11, 0
      %p73 = por %p71, %p72
      %p74 = scmp.ne.s32.totalorder %s66, %s68
      %p75 = scmp.eq.s32.totalorder %s16, 1
      %p76 = por %p74, %p75
      %p77 = scmp.ne.s32.totalorder %s68, %s69
      %p78 = scmp.eq.s32.totalorder %s16, 0
      %p79 = por %p77, %p78
      %p80 = scmp.ne.s32.totalorder %s68, %s69
      %p81 = scmp.eq.s32.totalorder %s17, 1
      %p82 = por %p80, %p81
      %p84 = scmp.ne.s32.totalorder %s69, %s83
      %p85 = scmp.eq.s32.totalorder %s17, 0
      %p86 = por %p84, %p85
      %s88 = sadd.s32 %s87, 1
      %p91 = scmp.eq.s32.totalorder %s11, 1
      %p92 = scmp.ne.s32.totalorder %s87, %s89
      %p93 = scmp.eq.s32.totalorder %s11, 0
      %p94 = por %p92, %p93
      %p95 = scmp.ne.s32.totalorder %s87, %s89
      %p96 = scmp.eq.s32.totalorder %s16, 1
      %p97 = por %p95, %p96
      %p98 = scmp.ne.s32.totalorder %s89, %s90
      %p99 = scmp.eq.s32.totalorder %s16, 0
      %p100 = por %p98, %p99
      %p101 = scmp.ne.s32.totalorder %s89, %s90
      %p102 = scmp.eq.s32.totalorder %s17, 1
      %p103 = por %p101, %p102
      %p105 = scmp.ne.s32.totalorder %s90, %s104
      %p106 = scmp.eq.s32.totalorder %s17, 0
      %p107 = por %p105, %p106
      %s108 = ssub.s32 %s11, %s18
      %p109 = scmp.eq.s32.totalorder %s108, 0
      %s111 = sadd.s32 %s110, 1
      %s112 = scalar_select %p109, %s110, %s111
      %p115 = pneg %p109
      %p116 = scmp.eq.s32.totalorder %s11, 1
      %p117 = por %p115, %p116
      %p118 = scmp.ne.s32.totalorder %s110, %s113
      %p119 = scmp.eq.s32.totalorder %s11, 0
      %p120 = por %p118, %p119
      %p121 = scmp.ne.s32.totalorder %s110, %s113
      %p122 = scmp.eq.s32.totalorder %s16, 1
      %p123 = por %p121, %p122
      %p124 = scmp.ne.s32.totalorder %s113, %s114
      %p125 = scmp.eq.s32.totalorder %s16, 0
      %p126 = por %p124, %p125
      %p127 = scmp.ne.s32.totalorder %s113, %s114
      %p128 = scmp.eq.s32.totalorder %s17, 1
      %p129 = por %p127, %p128
      %p131 = scmp.ne.s32.totalorder %s114, %s130
      %p132 = scmp.eq.s32.totalorder %s17, 0
      %p133 = por %p131, %p132
      %p134 = scmp.le.s32.totalorder 1, %s11
      %p135 = scmp.lt.s32.totalorder %s11, 3
      %p136 = pnand %p134, %p135
      %p137 = pneg %p136
      // Predicated region
      $region9: #{encoder1_forward.1} parent=5 // pred_check
        _
      $region10: #{encoder1_forward.1} parent=5 // pred_check_branch
        %139 = sbr.rel (%p136) target = $region12
      $region11: #{encoder1_forward.1} parent=5 // pred_region
        %s140 = ssub.s32 %s11, 1
        // Predicated region
        $region13: #{encoder1_forward.1} parent=11 // pred_check
          %p141 = pneg %p58
        $region14: #{encoder1_forward.1} parent=11 // pred_check_branch
          %143 = sbr.rel (%p141) target = $region16
        $region15: #{encoder1_forward.1} parent=11 // pred_region
          _
        $region16: #{encoder1_forward.1} parent=11 // pred_fallthru
          _
        // Predicated region
        $region17: #{encoder1_forward.1} parent=11 // pred_check
          %p144 = pneg %p79
        $region18: #{encoder1_forward.1} parent=11 // pred_check_branch
          %146 = sbr.rel (%p144) target = $region20
        $region19: #{encoder1_forward.1} parent=11 // pred_region
          _
        $region20: #{encoder1_forward.1} parent=11 // pred_fallthru
          _
        // Predicated region
        $region21: #{encoder1_forward.1} parent=11 // pred_check
          %p147 = pneg %p100
        $region22: #{encoder1_forward.1} parent=11 // pred_check_branch
          %149 = sbr.rel (%p147) target = $region24
        $region23: #{encoder1_forward.1} parent=11 // pred_region
          %s151 = ssub.s32 73728, 73728
          %152 = vsyncadd [#allocation3], %s151
          %s153 = sshll.u32 [#allocation2], 4
          %s154 = int_to_ptr.vmem [resolvable:$true] %s153
          %159 = dma.hbm_to_vmem [thread:$0]  %s3, 73728, %s154, [#allocation3], 256, 256, 16
        $region24: #{encoder1_forward.1} parent=11 // pred_fallthru
          _
      $region12: #{encoder1_forward.1} parent=5 // pred_fallthru
        _
      %p160 = scmp.lt.s32.totalorder %s11, 2
      // Predicated region
      $region25: #{encoder1_forward.1} parent=5 // pred_check
        %p161 = pneg %p160
      $region26: #{encoder1_forward.1} parent=5 // pred_check_branch
        %163 = sbr.rel (%p161) target = $region28
      $region27: #{encoder1_forward.1} parent=5 // pred_region
        // Predicated region
        $region29: #{encoder1_forward.1} parent=27 // pred_check
          %p164 = pneg %p31
        $region30: #{encoder1_forward.1} parent=27 // pred_check_branch
          %166 = sbr.rel (%p164) target = $region32
        $region31: #{encoder1_forward.1} parent=27 // pred_region
          %p167 = scmp.lt.s32.totalorder %s11, 1
          %s168 = scalar_select %p167, %s11, 1
          %s169 = smul.addr %s168, 2
          %s170 = smul.addr %s169, 8
          %s171 = scalar_lea.vmem %s0, %s170
        $region32: #{encoder1_forward.1} parent=27 // pred_fallthru
          _
      $region28: #{encoder1_forward.1} parent=5 // pred_fallthru
        _
      %p172 = scmp.le.s32.totalorder 1, %s11
      %p173 = scmp.lt.s32.totalorder %s11, 3
      %p174 = pnand %p172, %p173
      %p175 = pneg %p174
      // Predicated region
      $region33: #{encoder1_forward.1} parent=5 // pred_check
        _
      $region34: #{encoder1_forward.1} parent=5 // pred_check_branch
        %177 = sbr.rel (%p174) target = $region36
      $region35: #{encoder1_forward.1} parent=5 // pred_region
        %s178 = ssub.s32 %s11, 1
        // Predicated region
        $region37: #{encoder1_forward.1} parent=35 // pred_check
          %p179 = pneg %p100
        $region38: #{encoder1_forward.1} parent=35 // pred_check_branch
          %181 = sbr.rel (%p179) target = $region40
        $region39: #{encoder1_forward.1} parent=35 // pred_region
          %182 = dma.done [#allocation3], 73728
        $region40: #{encoder1_forward.1} parent=35 // pred_fallthru
          _
        %p183 = scmp.lt.s32.totalorder %s16, 1
        %s184 = scalar_select %p183, %s16, 1
        %s185 = smul.addr %s184, 2
        %s186 = smul.addr %s185, 8
        %s187 = scalar_lea.vmem %s0, %s186
        %p188 = pneg %p37
        %p189 = pneg %p34
        %p190 = pneg %p58
        %p191 = pneg %p55
        %p192 = pneg %p79
        %p193 = pneg %p76
        %p194 = pneg %p100
        %p195 = pneg %p97
        %p196 = pneg %p126
        %p197 = pneg %p123
        %p198 = scmp.lt.s32.totalorder %s16, 1
        %s199 = scalar_select %p198, %s16, 1
        %s200 = smul.addr %s199, 2
        %s201 = smul.addr %s200, 8
        %s202 = scalar_lea.vmem %s4, %s201
        %p203 = scmp.lt.s32.totalorder %s16, 1
        %s204 = scalar_select %p203, %s16, 1
        %s205 = smul.addr %s204, 2
        %s206 = smul.addr %s205, 8
        %s207 = scalar_lea.vmem %s0, %s206
        %p208 = scmp.lt.s32.totalorder %s16, 1
        %s209 = scalar_select %p208, %s16, 1
        %s210 = smul.addr %s209, 2
        %s211 = smul.addr %s210, 8
        %s212 = scalar_lea.vmem %s4, %s211
        %v213 = vld [vmem:[%s207] sm:$0xff]
        %v214 = vld [vmem:[%s207 + $0x8] sm:$0xff]
        %v215 = vld [vmem:[%s1] sm:$0xff]
        %v216 = vld [vmem:[%s1 + $0x8] sm:$0xff]
        %v217 = vld [vmem:[%s1 + $0x10] sm:$0xff]
        %v218 = vld [vmem:[%s1 + $0x18] sm:$0xff]
        %v219 = vld [vmem:[%s1 + $0x20] sm:$0xff]
        %v220 = vld [vmem:[%s1 + $0x28] sm:$0xff]
        %v221 = vld [vmem:[%s1 + $0x30] sm:$0xff]
        %v222 = vld [vmem:[%s1 + $0x38] sm:$0xff]
        %v223 = vld [vmem:[%s1 + $0x40] sm:$0xff]
        %vm224 = vcmask 64512
        %v226 = vsel %vm224, %v215, 0
        %v229 = vsel %vm224, %v216, 0
        %v232 = vsel %vm224, %v217, 0
        %v235 = vsel %vm224, %v218, 0
        %v238 = vsel %vm224, %v219, 0
        %v241 = vsel %vm224, %v220, 0
        %v244 = vsel %vm224, %v221, 0
        %v247 = vsel %vm224, %v222, 0
        %v250 = vsel %vm224, %v223, 0
        %252 = vmatprep.subr.mxu0 %v214
        %253 = vmatpush1.msra.mxu0 %v213
        %254 = vmatprep.subr.mxu0 0.0
        %255 = vmatpush1.msra.mxu0 0.0
        %256 = vmatprep.subr.mxu0 0.0
        %257 = vmatpush1.msra.mxu0 0.0
        %258 = vmatprep.subr.mxu0 0.0
        %259 = vmatpush1.msra.mxu0 0.0
        %260 = vmatprep.subr.mxu0 0.0
        %261 = vmatpush1.msra.mxu0 0.0
        %262 = vmatprep.subr.mxu0 0.0
        %263 = vmatpush1.msra.mxu0 0.0
        %264 = vmatprep.subr.mxu0 0.0
        %265 = vmatpush1.msra.mxu0 0.0
        %266 = vmatprep.subr.mxu0 0.0
        %267 = vmatpush1.msra.mxu0 0.0
        %268 = vmatprep.subr.mxu0 0.0
        %269 = vmatpush1.msra.mxu0 0.0
        %270 = vmatprep.subr.mxu0 0.0
        %271 = vmatpush1.msra.mxu0 0.0
        %272 = vmatprep.subr.mxu0 0.0
        %273 = vmatpush1.msra.mxu0 0.0
        %274 = vmatprep.subr.mxu0 0.0
        %275 = vmatpush1.msra.mxu0 0.0
        %276 = vmatprep.subr.mxu0 0.0
        %277 = vmatpush1.msra.mxu0 0.0
        %278 = vmatprep.subr.mxu0 0.0
        %279 = vmatpush1.msra.mxu0 0.0
        %280 = vmatprep.subr.mxu0 0.0
        %281 = vmatpush1.msra.mxu0 0.0
        %282 = vmatprep.subr.mxu0 0.0
        %283 = vmatpush1.msra.mxu0 0.0
        %284 = vmatprep.subr.mxu0 0.0
        %285 = vmatpush1.msra.mxu0 0.0
        %286 = vmatprep.subr.mxu0 0.0
        %287 = vmatpush1.msra.mxu0 0.0
        %288 = vmatprep.subr.mxu0 0.0
        %289 = vmatpush1.msra.mxu0 0.0
        %290 = vmatprep.subr.mxu0 0.0
        %291 = vmatpush1.msra.mxu0 0.0
        %292 = vmatprep.subr.mxu0 0.0
        %293 = vmatpush1.msra.mxu0 0.0
        %294 = vmatprep.subr.mxu0 0.0
        %295 = vmatpush1.msra.mxu0 0.0
        %296 = vmatprep.subr.mxu0 0.0
        %297 = vmatpush1.msra.mxu0 0.0
        %298 = vmatprep.subr.mxu0 0.0
        %299 = vmatpush1.msra.mxu0 0.0
        %300 = vmatprep.subr.mxu0 0.0
        %301 = vmatpush1.msra.mxu0 0.0
        %302 = vmatprep.subr.mxu0 0.0
        %303 = vmatpush1.msra.mxu0 0.0
        %304 = vmatprep.subr.mxu0 0.0
        %305 = vmatpush1.msra.mxu0 0.0
        %306 = vmatprep.subr.mxu0 0.0
        %307 = vmatpush1.msra.mxu0 0.0
        %308 = vmatprep.subr.mxu0 0.0
        %309 = vmatpush1.msra.mxu0 0.0
        %310 = vmatprep.subr.mxu0 0.0
        %311 = vmatpush1.msra.mxu0 0.0
        %312 = vmatprep.subr.mxu0 0.0
        %313 = vmatpush1.msra.mxu0 0.0
        %314 = vmatprep.subr.mxu0 0.0
        %315 = vmatpush1.msra.mxu0 0.0
        %316 = vmatprep.mubr.f32.mxu0 0.0
        %317 = vmatmul.mubr.f32.gmra.mrb[0].mxu0 %v226
        %v318 = vpop.f32.mrb[0].mxu0
        %v319 = vadd.f32 0.0, %v318
        %v320 = vpop.f32.mrb[0].mxu0
        %v321 = vadd.f32 0.0, %v320
        %322 = vmatprep.mubr.f32.mxu0 0.0
        %323 = vmatmul.mubr.f32.gmra.mrb[0].mxu0 %v229
        %v324 = vpop.f32.mrb[0].mxu0
        %v325 = vadd.f32 0.0, %v324
        %v326 = vpop.f32.mrb[0].mxu0
        %v327 = vadd.f32 0.0, %v326
        %328 = vmatprep.mubr.f32.mxu0 0.0
        %329 = vmatmul.mubr.f32.gmra.mrb[0].mxu0 %v232
        %v330 = vpop.f32.mrb[0].mxu0
        %v331 = vadd.f32 0.0, %v330
        %v332 = vpop.f32.mrb[0].mxu0
        %v333 = vadd.f32 0.0, %v332
        %334 = vmatprep.mubr.f32.mxu0 0.0
        %335 = vmatmul.mubr.f32.gmra.mrb[0].mxu0 %v235
        %v336 = vpop.f32.mrb[0].mxu0
        %v337 = vadd.f32 0.0, %v336
        %v338 = vpop.f32.mrb[0].mxu0
        %v339 = vadd.f32 0.0, %v338
        %340 = vmatprep.mubr.f32.mxu0 0.0
        %341 = vmatmul.mubr.f32.gmra.mrb[0].mxu0 %v238
        %v342 = vpop.f32.mrb[0].mxu0
        %v343 = vadd.f32 0.0, %v342
        %v344 = vpop.f32.mrb[0].mxu0
        %v345 = vadd.f32 0.0, %v344
        %346 = vmatprep.mubr.f32.mxu0 0.0
        %347 = vmatmul.mubr.f32.gmra.mrb[0].mxu0 %v241
        %v348 = vpop.f32.mrb[0].mxu0
        %v349 = vadd.f32 0.0, %v348
        %v350 = vpop.f32.mrb[0].mxu0
        %v351 = vadd.f32 0.0, %v350
        %352 = vmatprep.mubr.f32.mxu0 0.0
        %353 = vmatmul.mubr.f32.gmra.mrb[0].mxu0 %v244
        %v354 = vpop.f32.mrb[0].mxu0
        %v355 = vadd.f32 0.0, %v354
        %v356 = vpop.f32.mrb[0].mxu0
        %v357 = vadd.f32 0.0, %v356
        %358 = vmatprep.mubr.f32.mxu0 0.0
        %359 = vmatmul.mubr.f32.gmra.mrb[0].mxu0 %v247
        %v360 = vpop.f32.mrb[0].mxu0
        %v361 = vadd.f32 0.0, %v360
        %v362 = vpop.f32.mrb[0].mxu0
        %v363 = vadd.f32 0.0, %v362
        %364 = vmatprep.mubr.f32.mxu0 0.0
        %365 = vmatmul.mubr.f32.gmra.mrb[0].mxu0 %v250
        %v366 = vpop.f32.mrb[0].mxu0
        %v367 = vadd.f32 0.0, %v366
        %v368 = vpop.f32.mrb[0].mxu0
        %v369 = vadd.f32 0.0, %v368
        %370 = vdwg.mxu0
        %v371 = vld [vmem:[%s2] sm:$0xff]
        %v372 = vld [vmem:[%s2 + $0x8] sm:$0xff]
        %v373 = vld [vmem:[#allocation2] sm:$0xff]
        %v374 = vld [vmem:[#allocation2 + $0x8] sm:$0xff]
        %v375 = vld [vmem:[#allocation2 + $0x10] sm:$0xff]
        %v376 = vld [vmem:[#allocation2 + $0x18] sm:$0xff]
        %v377 = vld [vmem:[#allocation2 + $0x20] sm:$0xff]
        %v378 = vld [vmem:[#allocation2 + $0x28] sm:$0xff]
        %v379 = vld [vmem:[#allocation2 + $0x30] sm:$0xff]
        %v380 = vld [vmem:[#allocation2 + $0x38] sm:$0xff]
        %v381 = vld [vmem:[#allocation2 + $0x40] sm:$0xff]
        %v382 = vld [vmem:[#allocation2 + $0x48] sm:$0xff]
        %v383 = vld [vmem:[#allocation2 + $0x50] sm:$0xff]
        %v384 = vld [vmem:[#allocation2 + $0x58] sm:$0xff]
        %v385 = vld [vmem:[#allocation2 + $0x60] sm:$0xff]
        %v386 = vld [vmem:[#allocation2 + $0x68] sm:$0xff]
        %v387 = vld [vmem:[#allocation2 + $0x70] sm:$0xff]
        %v388 = vld [vmem:[#allocation2 + $0x78] sm:$0xff]
        %v389 = vld [vmem:[#allocation2 + $0x80] sm:$0xff]
        %v390 = vld [vmem:[#allocation2 + $0x88] sm:$0xff]
        %v391 = vld [vmem:[#allocation2 + $0x90] sm:$0xff]
        %v392 = vld [vmem:[#allocation2 + $0x98] sm:$0xff]
        %v393 = vld [vmem:[#allocation2 + $0xa0] sm:$0xff]
        %v394 = vld [vmem:[#allocation2 + $0xa8] sm:$0xff]
        %v395 = vld [vmem:[#allocation2 + $0xb0] sm:$0xff]
        %v396 = vld [vmem:[#allocation2 + $0xb8] sm:$0xff]
        %v397 = vld [vmem:[#allocation2 + $0xc0] sm:$0xff]
        %v398 = vld [vmem:[#allocation2 + $0xc8] sm:$0xff]
        %v399 = vld [vmem:[#allocation2 + $0xd0] sm:$0xff]
        %v400 = vld [vmem:[#allocation2 + $0xd8] sm:$0xff]
        %v401 = vld [vmem:[#allocation2 + $0xe0] sm:$0xff]
        %v402 = vld [vmem:[#allocation2 + $0xe8] sm:$0xff]
        %v403 = vld [vmem:[#allocation2 + $0xf0] sm:$0xff]
        %v404 = vld [vmem:[#allocation2 + $0xf8] sm:$0xff]
        %v405 = vld [vmem:[#allocation2 + $0x100] sm:$0xff]
        %v406 = vld [vmem:[#allocation2 + $0x108] sm:$0xff]
        %v407 = vld [vmem:[#allocation2 + $0x110] sm:$0xff]
        %v408 = vld [vmem:[#allocation2 + $0x118] sm:$0xff]
        %v409 = vld [vmem:[#allocation2 + $0x120] sm:$0xff]
        %v410 = vld [vmem:[#allocation2 + $0x128] sm:$0xff]
        %v411 = vld [vmem:[#allocation2 + $0x130] sm:$0xff]
        %v412 = vld [vmem:[#allocation2 + $0x138] sm:$0xff]
        %v413 = vld [vmem:[#allocation2 + $0x140] sm:$0xff]
        %v414 = vld [vmem:[#allocation2 + $0x148] sm:$0xff]
        %v415 = vld [vmem:[#allocation2 + $0x150] sm:$0xff]
        %v416 = vld [vmem:[#allocation2 + $0x158] sm:$0xff]
        %v417 = vld [vmem:[#allocation2 + $0x160] sm:$0xff]
        %v418 = vld [vmem:[#allocation2 + $0x168] sm:$0xff]
        %v419 = vld [vmem:[#allocation2 + $0x170] sm:$0xff]
        %v420 = vld [vmem:[#allocation2 + $0x178] sm:$0xff]
        %v421 = vld [vmem:[#allocation2 + $0x180] sm:$0xff]
        %v422 = vld [vmem:[#allocation2 + $0x188] sm:$0xff]
        %v423 = vld [vmem:[#allocation2 + $0x190] sm:$0xff]
        %v424 = vld [vmem:[#allocation2 + $0x198] sm:$0xff]
        %v425 = vld [vmem:[#allocation2 + $0x1a0] sm:$0xff]
        %v426 = vld [vmem:[#allocation2 + $0x1a8] sm:$0xff]
        %v427 = vld [vmem:[#allocation2 + $0x1b0] sm:$0xff]
        %v428 = vld [vmem:[#allocation2 + $0x1b8] sm:$0xff]
        %v429 = vld [vmem:[#allocation2 + $0x1c0] sm:$0xff]
        %v430 = vld [vmem:[#allocation2 + $0x1c8] sm:$0xff]
        %v431 = vld [vmem:[#allocation2 + $0x1d0] sm:$0xff]
        %v432 = vld [vmem:[#allocation2 + $0x1d8] sm:$0xff]
        %v433 = vld [vmem:[#allocation2 + $0x1e0] sm:$0xff]
        %v434 = vld [vmem:[#allocation2 + $0x1e8] sm:$0xff]
        %v435 = vld [vmem:[#allocation2 + $0x1f0] sm:$0xff]
        %v436 = vld [vmem:[#allocation2 + $0x1f8] sm:$0xff]
        %437 = vmatprep.subr.mxu0 %v374
        %438 = vmatpush1.msra.mxu0 %v373
        %439 = vmatprep.subr.mxu0 %v376
        %440 = vmatpush1.msra.mxu0 %v375
        %441 = vmatprep.subr.mxu0 %v378
        %442 = vmatpush1.msra.mxu0 %v377
        %443 = vmatprep.subr.mxu0 %v380
        %444 = vmatpush1.msra.mxu0 %v379
        %445 = vmatprep.subr.mxu0 %v382
        %446 = vmatpush1.msra.mxu0 %v381
        %447 = vmatprep.subr.mxu0 %v384
        %448 = vmatpush1.msra.mxu0 %v383
        %449 = vmatprep.subr.mxu0 %v386
        %450 = vmatpush1.msra.mxu0 %v385
        %451 = vmatprep.subr.mxu0 %v388
        %452 = vmatpush1.msra.mxu0 %v387
        %453 = vmatprep.subr.mxu0 %v390
        %454 = vmatpush1.msra.mxu0 %v389
        %455 = vmatprep.subr.mxu0 %v392
        %456 = vmatpush1.msra.mxu0 %v391
        %457 = vmatprep.subr.mxu0 %v394
        %458 = vmatpush1.msra.mxu0 %v393
        %459 = vmatprep.subr.mxu0 %v396
        %460 = vmatpush1.msra.mxu0 %v395
        %461 = vmatprep.subr.mxu0 %v398
        %462 = vmatpush1.msra.mxu0 %v397
        %463 = vmatprep.subr.mxu0 %v400
        %464 = vmatpush1.msra.mxu0 %v399
        %465 = vmatprep.subr.mxu0 %v402
        %466 = vmatpush1.msra.mxu0 %v401
        %467 = vmatprep.subr.mxu0 %v404
        %468 = vmatpush1.msra.mxu0 %v403
        %469 = vmatprep.subr.mxu0 %v406
        %470 = vmatpush1.msra.mxu0 %v405
        %471 = vmatprep.subr.mxu0 %v408
        %472 = vmatpush1.msra.mxu0 %v407
        %473 = vmatprep.subr.mxu0 %v410
        %474 = vmatpush1.msra.mxu0 %v409
        %475 = vmatprep.subr.mxu0 %v412
        %476 = vmatpush1.msra.mxu0 %v411
        %477 = vmatprep.subr.mxu0 %v414
        %478 = vmatpush1.msra.mxu0 %v413
        %479 = vmatprep.subr.mxu0 %v416
        %480 = vmatpush1.msra.mxu0 %v415
        %481 = vmatprep.subr.mxu0 %v418
        %482 = vmatpush1.msra.mxu0 %v417
        %483 = vmatprep.subr.mxu0 %v420
        %484 = vmatpush1.msra.mxu0 %v419
        %485 = vmatprep.subr.mxu0 %v422
        %486 = vmatpush1.msra.mxu0 %v421
        %487 = vmatprep.subr.mxu0 %v424
        %488 = vmatpush1.msra.mxu0 %v423
        %489 = vmatprep.subr.mxu0 %v426
        %490 = vmatpush1.msra.mxu0 %v425
        %491 = vmatprep.subr.mxu0 %v428
        %492 = vmatpush1.msra.mxu0 %v427
        %493 = vmatprep.subr.mxu0 %v430
        %494 = vmatpush1.msra.mxu0 %v429
        %495 = vmatprep.subr.mxu0 %v432
        %496 = vmatpush1.msra.mxu0 %v431
        %497 = vmatprep.subr.mxu0 %v434
        %498 = vmatpush1.msra.mxu0 %v433
        %499 = vmatprep.subr.mxu0 %v436
        %500 = vmatpush1.msra.mxu0 %v435
        %501 = vmatprep.mubr.f32.mxu0 %v321
        %502 = vmatmul.mubr.f32.gmra.mrb[0].mxu0 %v319
        %v503 = vpop.f32.mrb[0].mxu0
        %v504 = vadd.f32 0.0, %v503
        %v505 = vpop.f32.mrb[0].mxu0
        %v506 = vadd.f32 0.0, %v505
        %507 = vdwg.mxu0
        %v508 = vadd.f32 %v371, %v504
        %v509 = vadd.f32 %v372, %v506
        %s510 = scalar_lea.vmem [#allocation2], 512
        %v511 = vld [vmem:[%s510] sm:$0xff]
        %v512 = vld [vmem:[%s510 + $0x8] sm:$0xff]
        %v513 = vld [vmem:[%s510 + $0x10] sm:$0xff]
        %v514 = vld [vmem:[%s510 + $0x18] sm:$0xff]
        %v515 = vld [vmem:[%s510 + $0x20] sm:$0xff]
        %v516 = vld [vmem:[%s510 + $0x28] sm:$0xff]
        %v517 = vld [vmem:[%s510 + $0x30] sm:$0xff]
        %v518 = vld [vmem:[%s510 + $0x38] sm:$0xff]
        %v519 = vld [vmem:[%s510 + $0x40] sm:$0xff]
        %v520 = vld [vmem:[%s510 + $0x48] sm:$0xff]
        %v521 = vld [vmem:[%s510 + $0x50] sm:$0xff]
        %v522 = vld [vmem:[%s510 + $0x58] sm:$0xff]
        %v523 = vld [vmem:[%s510 + $0x60] sm:$0xff]
        %v524 = vld [vmem:[%s510 + $0x68] sm:$0xff]
        %v525 = vld [vmem:[%s510 + $0x70] sm:$0xff]
        %v526 = vld [vmem:[%s510 + $0x78] sm:$0xff]
        %v527 = vld [vmem:[%s510 + $0x80] sm:$0xff]
        %v528 = vld [vmem:[%s510 + $0x88] sm:$0xff]
        %v529 = vld [vmem:[%s510 + $0x90] sm:$0xff]
        %v530 = vld [vmem:[%s510 + $0x98] sm:$0xff]
        %v531 = vld [vmem:[%s510 + $0xa0] sm:$0xff]
        %v532 = vld [vmem:[%s510 + $0xa8] sm:$0xff]
        %v533 = vld [vmem:[%s510 + $0xb0] sm:$0xff]
        %v534 = vld [vmem:[%s510 + $0xb8] sm:$0xff]
        %v535 = vld [vmem:[%s510 + $0xc0] sm:$0xff]
        %v536 = vld [vmem:[%s510 + $0xc8] sm:$0xff]
        %v537 = vld [vmem:[%s510 + $0xd0] sm:$0xff]
        %v538 = vld [vmem:[%s510 + $0xd8] sm:$0xff]
        %v539 = vld [vmem:[%s510 + $0xe0] sm:$0xff]
        %v540 = vld [vmem:[%s510 + $0xe8] sm:$0xff]
        %v541 = vld [vmem:[%s510 + $0xf0] sm:$0xff]
        %v542 = vld [vmem:[%s510 + $0xf8] sm:$0xff]
        %v543 = vld [vmem:[%s510 + $0x100] sm:$0xff]
        %v544 = vld [vmem:[%s510 + $0x108] sm:$0xff]
        %v545 = vld [vmem:[%s510 + $0x110] sm:$0xff]
        %v546 = vld [vmem:[%s510 + $0x118] sm:$0xff]
        %v547 = vld [vmem:[%s510 + $0x120] sm:$0xff]
        %v548 = vld [vmem:[%s510 + $0x128] sm:$0xff]
        %v549 = vld [vmem:[%s510 + $0x130] sm:$0xff]
        %v550 = vld [vmem:[%s510 + $0x138] sm:$0xff]
        %v551 = vld [vmem:[%s510 + $0x140] sm:$0xff]
        %v552 = vld [vmem:[%s510 + $0x148] sm:$0xff]
        %v553 = vld [vmem:[%s510 + $0x150] sm:$0xff]
        %v554 = vld [vmem:[%s510 + $0x158] sm:$0xff]
        %v555 = vld [vmem:[%s510 + $0x160] sm:$0xff]
        %v556 = vld [vmem:[%s510 + $0x168] sm:$0xff]
        %v557 = vld [vmem:[%s510 + $0x170] sm:$0xff]
        %v558 = vld [vmem:[%s510 + $0x178] sm:$0xff]
        %v559 = vld [vmem:[%s510 + $0x180] sm:$0xff]
        %v560 = vld [vmem:[%s510 + $0x188] sm:$0xff]
        %v561 = vld [vmem:[%s510 + $0x190] sm:$0xff]
        %v562 = vld [vmem:[%s510 + $0x198] sm:$0xff]
        %v563 = vld [vmem:[%s510 + $0x1a0] sm:$0xff]
        %v564 = vld [vmem:[%s510 + $0x1a8] sm:$0xff]
        %v565 = vld [vmem:[%s510 + $0x1b0] sm:$0xff]
        %v566 = vld [vmem:[%s510 + $0x1b8] sm:$0xff]
        %v567 = vld [vmem:[%s510 + $0x1c0] sm:$0xff]
        %v568 = vld [vmem:[%s510 + $0x1c8] sm:$0xff]
        %v569 = vld [vmem:[%s510 + $0x1d0] sm:$0xff]
        %v570 = vld [vmem:[%s510 + $0x1d8] sm:$0xff]
        %v571 = vld [vmem:[%s510 + $0x1e0] sm:$0xff]
        %v572 = vld [vmem:[%s510 + $0x1e8] sm:$0xff]
        %v573 = vld [vmem:[%s510 + $0x1f0] sm:$0xff]
        %v574 = vld [vmem:[%s510 + $0x1f8] sm:$0xff]
        %575 = vmatprep.subr.mxu0 %v512
        %576 = vmatpush1.msra.mxu0 %v511
        %577 = vmatprep.subr.mxu0 %v514
        %578 = vmatpush1.msra.mxu0 %v513
        %579 = vmatprep.subr.mxu0 %v516
        %580 = vmatpush1.msra.mxu0 %v515
        %581 = vmatprep.subr.mxu0 %v518
        %582 = vmatpush1.msra.mxu0 %v517
        %583 = vmatprep.subr.mxu0 %v520
        %584 = vmatpush1.msra.mxu0 %v519
        %585 = vmatprep.subr.mxu0 %v522
        %586 = vmatpush1.msra.mxu0 %v521
        %587 = vmatprep.subr.mxu0 %v524
        %588 = vmatpush1.msra.mxu0 %v523
        %589 = vmatprep.subr.mxu0 %v526
        %590 = vmatpush1.msra.mxu0 %v525
        %591 = vmatprep.subr.mxu0 %v528
        %592 = vmatpush1.msra.mxu0 %v527
        %593 = vmatprep.subr.mxu0 %v530
        %594 = vmatpush1.msra.mxu0 %v529
        %595 = vmatprep.subr.mxu0 %v532
        %596 = vmatpush1.msra.mxu0 %v531
        %597 = vmatprep.subr.mxu0 %v534
        %598 = vmatpush1.msra.mxu0 %v533
        %599 = vmatprep.subr.mxu0 %v536
        %600 = vmatpush1.msra.mxu0 %v535
        %601 = vmatprep.subr.mxu0 %v538
        %602 = vmatpush1.msra.mxu0 %v537
        %603 = vmatprep.subr.mxu0 %v540
        %604 = vmatpush1.msra.mxu0 %v539
        %605 = vmatprep.subr.mxu0 %v542
        %606 = vmatpush1.msra.mxu0 %v541
        %607 = vmatprep.subr.mxu0 %v544
        %608 = vmatpush1.msra.mxu0 %v543
        %609 = vmatprep.subr.mxu0 %v546
        %610 = vmatpush1.msra.mxu0 %v545
        %611 = vmatprep.subr.mxu0 %v548
        %612 = vmatpush1.msra.mxu0 %v547
        %613 = vmatprep.subr.mxu0 %v550
        %614 = vmatpush1.msra.mxu0 %v549
        %615 = vmatprep.subr.mxu0 %v552
        %616 = vmatpush1.msra.mxu0 %v551
        %617 = vmatprep.subr.mxu0 %v554
        %618 = vmatpush1.msra.mxu0 %v553
        %619 = vmatprep.subr.mxu0 %v556
        %620 = vmatpush1.msra.mxu0 %v555
        %621 = vmatprep.subr.mxu0 %v558
        %622 = vmatpush1.msra.mxu0 %v557
        %623 = vmatprep.subr.mxu0 %v560
        %624 = vmatpush1.msra.mxu0 %v559
        %625 = vmatprep.subr.mxu0 %v562
        %626 = vmatpush1.msra.mxu0 %v561
        %627 = vmatprep.subr.mxu0 %v564
        %628 = vmatpush1.msra.mxu0 %v563
        %629 = vmatprep.subr.mxu0 %v566
        %630 = vmatpush1.msra.mxu0 %v565
        %631 = vmatprep.subr.mxu0 %v568
        %632 = vmatpush1.msra.mxu0 %v567
        %633 = vmatprep.subr.mxu0 %v570
        %634 = vmatpush1.msra.mxu0 %v569
        %635 = vmatprep.subr.mxu0 %v572
        %636 = vmatpush1.msra.mxu0 %v571
        %637 = vmatprep.subr.mxu0 %v574
        %638 = vmatpush1.msra.mxu0 %v573
        %639 = vmatprep.mubr.f32.mxu0 %v327
        %640 = vmatmul.mubr.f32.gmra.mrb[0].mxu0 %v325
        %v641 = vpop.f32.mrb[0].mxu0
        %v642 = vadd.f32 0.0, %v641
        %v643 = vpop.f32.mrb[0].mxu0
        %v644 = vadd.f32 0.0, %v643
        %645 = vdwg.mxu0
        %v646 = vadd.f32 %v508, %v642
        %v647 = vadd.f32 %v509, %v644
        %s648 = scalar_lea.vmem [#allocation2], 1024
        %v649 = vld [vmem:[%s648] sm:$0xff]
        %v650 = vld [vmem:[%s648 + $0x8] sm:$0xff]
        %v651 = vld [vmem:[%s648 + $0x10] sm:$0xff]
        %v652 = vld [vmem:[%s648 + $0x18] sm:$0xff]
        %v653 = vld [vmem:[%s648 + $0x20] sm:$0xff]
        %v654 = vld [vmem:[%s648 + $0x28] sm:$0xff]
        %v655 = vld [vmem:[%s648 + $0x30] sm:$0xff]
        %v656 = vld [vmem:[%s648 + $0x38] sm:$0xff]
        %v657 = vld [vmem:[%s648 + $0x40] sm:$0xff]
        %v658 = vld [vmem:[%s648 + $0x48] sm:$0xff]
        %v659 = vld [vmem:[%s648 + $0x50] sm:$0xff]
        %v660 = vld [vmem:[%s648 + $0x58] sm:$0xff]
        %v661 = vld [vmem:[%s648 + $0x60] sm:$0xff]
        %v662 = vld [vmem:[%s648 + $0x68] sm:$0xff]
        %v663 = vld [vmem:[%s648 + $0x70] sm:$0xff]
        %v664 = vld [vmem:[%s648 + $0x78] sm:$0xff]
        %v665 = vld [vmem:[%s648 + $0x80] sm:$0xff]
        %v666 = vld [vmem:[%s648 + $0x88] sm:$0xff]
        %v667 = vld [vmem:[%s648 + $0x90] sm:$0xff]
        %v668 = vld [vmem:[%s648 + $0x98] sm:$0xff]
        %v669 = vld [vmem:[%s648 + $0xa0] sm:$0xff]
        %v670 = vld [vmem:[%s648 + $0xa8] sm:$0xff]
        %v671 = vld [vmem:[%s648 + $0xb0] sm:$0xff]
        %v672 = vld [vmem:[%s648 + $0xb8] sm:$0xff]
        %v673 = vld [vmem:[%s648 + $0xc0] sm:$0xff]
        %v674 = vld [vmem:[%s648 + $0xc8] sm:$0xff]
        %v675 = vld [vmem:[%s648 + $0xd0] sm:$0xff]
        %v676 = vld [vmem:[%s648 + $0xd8] sm:$0xff]
        %v677 = vld [vmem:[%s648 + $0xe0] sm:$0xff]
        %v678 = vld [vmem:[%s648 + $0xe8] sm:$0xff]
        %v679 = vld [vmem:[%s648 + $0xf0] sm:$0xff]
        %v680 = vld [vmem:[%s648 + $0xf8] sm:$0xff]
        %v681 = vld [vmem:[%s648 + $0x100] sm:$0xff]
        %v682 = vld [vmem:[%s648 + $0x108] sm:$0xff]
        %v683 = vld [vmem:[%s648 + $0x110] sm:$0xff]
        %v684 = vld [vmem:[%s648 + $0x118] sm:$0xff]
        %v685 = vld [vmem:[%s648 + $0x120] sm:$0xff]
        %v686 = vld [vmem:[%s648 + $0x128] sm:$0xff]
        %v687 = vld [vmem:[%s648 + $0x130] sm:$0xff]
        %v688 = vld [vmem:[%s648 + $0x138] sm:$0xff]
        %v689 = vld [vmem:[%s648 + $0x140] sm:$0xff]
        %v690 = vld [vmem:[%s648 + $0x148] sm:$0xff]
        %v691 = vld [vmem:[%s648 + $0x150] sm:$0xff]
        %v692 = vld [vmem:[%s648 + $0x158] sm:$0xff]
        %v693 = vld [vmem:[%s648 + $0x160] sm:$0xff]
        %v694 = vld [vmem:[%s648 + $0x168] sm:$0xff]
        %v695 = vld [vmem:[%s648 + $0x170] sm:$0xff]
        %v696 = vld [vmem:[%s648 + $0x178] sm:$0xff]
        %v697 = vld [vmem:[%s648 + $0x180] sm:$0xff]
        %v698 = vld [vmem:[%s648 + $0x188] sm:$0xff]
        %v699 = vld [vmem:[%s648 + $0x190] sm:$0xff]
        %v700 = vld [vmem:[%s648 + $0x198] sm:$0xff]
        %v701 = vld [vmem:[%s648 + $0x1a0] sm:$0xff]
        %v702 = vld [vmem:[%s648 + $0x1a8] sm:$0xff]
        %v703 = vld [vmem:[%s648 + $0x1b0] sm:$0xff]
        %v704 = vld [vmem:[%s648 + $0x1b8] sm:$0xff]
        %v705 = vld [vmem:[%s648 + $0x1c0] sm:$0xff]
        %v706 = vld [vmem:[%s648 + $0x1c8] sm:$0xff]
        %v707 = vld [vmem:[%s648 + $0x1d0] sm:$0xff]
        %v708 = vld [vmem:[%s648 + $0x1d8] sm:$0xff]
        %v709 = vld [vmem:[%s648 + $0x1e0] sm:$0xff]
        %v710 = vld [vmem:[%s648 + $0x1e8] sm:$0xff]
        %v711 = vld [vmem:[%s648 + $0x1f0] sm:$0xff]
        %v712 = vld [vmem:[%s648 + $0x1f8] sm:$0xff]
        %713 = vmatprep.subr.mxu0 %v650
        %714 = vmatpush1.msra.mxu0 %v649
        %715 = vmatprep.subr.mxu0 %v652
        %716 = vmatpush1.msra.mxu0 %v651
        %717 = vmatprep.subr.mxu0 %v654
        %718 = vmatpush1.msra.mxu0 %v653
        %719 = vmatprep.subr.mxu0 %v656
        %720 = vmatpush1.msra.mxu0 %v655
        %721 = vmatprep.subr.mxu0 %v658
        %722 = vmatpush1.msra.mxu0 %v657
        %723 = vmatprep.subr.mxu0 %v660
        %724 = vmatpush1.msra.mxu0 %v659
        %725 = vmatprep.subr.mxu0 %v662
        %726 = vmatpush1.msra.mxu0 %v661
        %727 = vmatprep.subr.mxu0 %v664
        %728 = vmatpush1.msra.mxu0 %v663
        %729 = vmatprep.subr.mxu0 %v666
        %730 = vmatpush1.msra.mxu0 %v665
        %731 = vmatprep.subr.mxu0 %v668
        %732 = vmatpush1.msra.mxu0 %v667
        %733 = vmatprep.subr.mxu0 %v670
        %734 = vmatpush1.msra.mxu0 %v669
        %735 = vmatprep.subr.mxu0 %v672
        %736 = vmatpush1.msra.mxu0 %v671
        %737 = vmatprep.subr.mxu0 %v674
        %738 = vmatpush1.msra.mxu0 %v673
        %739 = vmatprep.subr.mxu0 %v676
        %740 = vmatpush1.msra.mxu0 %v675
        %741 = vmatprep.subr.mxu0 %v678
        %742 = vmatpush1.msra.mxu0 %v677
        %743 = vmatprep.subr.mxu0 %v680
        %744 = vmatpush1.msra.mxu0 %v679
        %745 = vmatprep.subr.mxu0 %v682
        %746 = vmatpush1.msra.mxu0 %v681
        %747 = vmatprep.subr.mxu0 %v684
        %748 = vmatpush1.msra.mxu0 %v683
        %749 = vmatprep.subr.mxu0 %v686
        %750 = vmatpush1.msra.mxu0 %v685
        %751 = vmatprep.subr.mxu0 %v688
        %752 = vmatpush1.msra.mxu0 %v687
        %753 = vmatprep.subr.mxu0 %v690
        %754 = vmatpush1.msra.mxu0 %v689
        %755 = vmatprep.subr.mxu0 %v692
        %756 = vmatpush1.msra.mxu0 %v691
        %757 = vmatprep.subr.mxu0 %v694
        %758 = vmatpush1.msra.mxu0 %v693
        %759 = vmatprep.subr.mxu0 %v696
        %760 = vmatpush1.msra.mxu0 %v695
        %761 = vmatprep.subr.mxu0 %v698
        %762 = vmatpush1.msra.mxu0 %v697
        %763 = vmatprep.subr.mxu0 %v700
        %764 = vmatpush1.msra.mxu0 %v699
        %765 = vmatprep.subr.mxu0 %v702
        %766 = vmatpush1.msra.mxu0 %v701
        %767 = vmatprep.subr.mxu0 %v704
        %768 = vmatpush1.msra.mxu0 %v703
        %769 = vmatprep.subr.mxu0 %v706
        %770 = vmatpush1.msra.mxu0 %v705
        %771 = vmatprep.subr.mxu0 %v708
        %772 = vmatpush1.msra.mxu0 %v707
        %773 = vmatprep.subr.mxu0 %v710
        %774 = vmatpush1.msra.mxu0 %v709
        %775 = vmatprep.subr.mxu0 %v712
        %776 = vmatpush1.msra.mxu0 %v711
        %777 = vmatprep.mubr.f32.mxu0 %v333
        %778 = vmatmul.mubr.f32.gmra.mrb[0].mxu0 %v331
        %v779 = vpop.f32.mrb[0].mxu0
        %v780 = vadd.f32 0.0, %v779
        %v781 = vpop.f32.mrb[0].mxu0
        %v782 = vadd.f32 0.0, %v781
        %783 = vdwg.mxu0
        %v784 = vadd.f32 %v646, %v780
        %v785 = vadd.f32 %v647, %v782
        %s786 = scalar_lea.vmem [#allocation2], 1536
        %v787 = vld [vmem:[%s786] sm:$0xff]
        %v788 = vld [vmem:[%s786 + $0x8] sm:$0xff]
        %v789 = vld [vmem:[%s786 + $0x10] sm:$0xff]
        %v790 = vld [vmem:[%s786 + $0x18] sm:$0xff]
        %v791 = vld [vmem:[%s786 + $0x20] sm:$0xff]
        %v792 = vld [vmem:[%s786 + $0x28] sm:$0xff]
        %v793 = vld [vmem:[%s786 + $0x30] sm:$0xff]
        %v794 = vld [vmem:[%s786 + $0x38] sm:$0xff]
        %v795 = vld [vmem:[%s786 + $0x40] sm:$0xff]
        %v796 = vld [vmem:[%s786 + $0x48] sm:$0xff]
        %v797 = vld [vmem:[%s786 + $0x50] sm:$0xff]
        %v798 = vld [vmem:[%s786 + $0x58] sm:$0xff]
        %v799 = vld [vmem:[%s786 + $0x60] sm:$0xff]
        %v800 = vld [vmem:[%s786 + $0x68] sm:$0xff]
        %v801 = vld [vmem:[%s786 + $0x70] sm:$0xff]
        %v802 = vld [vmem:[%s786 + $0x78] sm:$0xff]
        %v803 = vld [vmem:[%s786 + $0x80] sm:$0xff]
        %v804 = vld [vmem:[%s786 + $0x88] sm:$0xff]
        %v805 = vld [vmem:[%s786 + $0x90] sm:$0xff]
        %v806 = vld [vmem:[%s786 + $0x98] sm:$0xff]
        %v807 = vld [vmem:[%s786 + $0xa0] sm:$0xff]
        %v808 = vld [vmem:[%s786 + $0xa8] sm:$0xff]
        %v809 = vld [vmem:[%s786 + $0xb0] sm:$0xff]
        %v810 = vld [vmem:[%s786 + $0xb8] sm:$0xff]
        %v811 = vld [vmem:[%s786 + $0xc0] sm:$0xff]
        %v812 = vld [vmem:[%s786 + $0xc8] sm:$0xff]
        %v813 = vld [vmem:[%s786 + $0xd0] sm:$0xff]
        %v814 = vld [vmem:[%s786 + $0xd8] sm:$0xff]
        %v815 = vld [vmem:[%s786 + $0xe0] sm:$0xff]
        %v816 = vld [vmem:[%s786 + $0xe8] sm:$0xff]
        %v817 = vld [vmem:[%s786 + $0xf0] sm:$0xff]
        %v818 = vld [vmem:[%s786 + $0xf8] sm:$0xff]
        %v819 = vld [vmem:[%s786 + $0x100] sm:$0xff]
        %v820 = vld [vmem:[%s786 + $0x108] sm:$0xff]
        %v821 = vld [vmem:[%s786 + $0x110] sm:$0xff]
        %v822 = vld [vmem:[%s786 + $0x118] sm:$0xff]
        %v823 = vld [vmem:[%s786 + $0x120] sm:$0xff]
        %v824 = vld [vmem:[%s786 + $0x128] sm:$0xff]
        %v825 = vld [vmem:[%s786 + $0x130] sm:$0xff]
        %v826 = vld [vmem:[%s786 + $0x138] sm:$0xff]
        %v827 = vld [vmem:[%s786 + $0x140] sm:$0xff]
        %v828 = vld [vmem:[%s786 + $0x148] sm:$0xff]
        %v829 = vld [vmem:[%s786 + $0x150] sm:$0xff]
        %v830 = vld [vmem:[%s786 + $0x158] sm:$0xff]
        %v831 = vld [vmem:[%s786 + $0x160] sm:$0xff]
        %v832 = vld [vmem:[%s786 + $0x168] sm:$0xff]
        %v833 = vld [vmem:[%s786 + $0x170] sm:$0xff]
        %v834 = vld [vmem:[%s786 + $0x178] sm:$0xff]
        %v835 = vld [vmem:[%s786 + $0x180] sm:$0xff]
        %v836 = vld [vmem:[%s786 + $0x188] sm:$0xff]
        %v837 = vld [vmem:[%s786 + $0x190] sm:$0xff]
        %v838 = vld [vmem:[%s786 + $0x198] sm:$0xff]
        %v839 = vld [vmem:[%s786 + $0x1a0] sm:$0xff]
        %v840 = vld [vmem:[%s786 + $0x1a8] sm:$0xff]
        %v841 = vld [vmem:[%s786 + $0x1b0] sm:$0xff]
        %v842 = vld [vmem:[%s786 + $0x1b8] sm:$0xff]
        %v843 = vld [vmem:[%s786 + $0x1c0] sm:$0xff]
        %v844 = vld [vmem:[%s786 + $0x1c8] sm:$0xff]
        %v845 = vld [vmem:[%s786 + $0x1d0] sm:$0xff]
        %v846 = vld [vmem:[%s786 + $0x1d8] sm:$0xff]
        %v847 = vld [vmem:[%s786 + $0x1e0] sm:$0xff]
        %v848 = vld [vmem:[%s786 + $0x1e8] sm:$0xff]
        %v849 = vld [vmem:[%s786 + $0x1f0] sm:$0xff]
        %v850 = vld [vmem:[%s786 + $0x1f8] sm:$0xff]
        %851 = vmatprep.subr.mxu0 %v788
        %852 = vmatpush1.msra.mxu0 %v787
        %853 = vmatprep.subr.mxu0 %v790
        %854 = vmatpush1.msra.mxu0 %v789
        %855 = vmatprep.subr.mxu0 %v792
        %856 = vmatpush1.msra.mxu0 %v791
        %857 = vmatprep.subr.mxu0 %v794
        %858 = vmatpush1.msra.mxu0 %v793
        %859 = vmatprep.subr.mxu0 %v796
        %860 = vmatpush1.msra.mxu0 %v795
        %861 = vmatprep.subr.mxu0 %v798
        %862 = vmatpush1.msra.mxu0 %v797
        %863 = vmatprep.subr.mxu0 %v800
        %864 = vmatpush1.msra.mxu0 %v799
        %865 = vmatprep.subr.mxu0 %v802
        %866 = vmatpush1.msra.mxu0 %v801
        %867 = vmatprep.subr.mxu0 %v804
        %868 = vmatpush1.msra.mxu0 %v803
        %869 = vmatprep.subr.mxu0 %v806
        %870 = vmatpush1.msra.mxu0 %v805
        %871 = vmatprep.subr.mxu0 %v808
        %872 = vmatpush1.msra.mxu0 %v807
        %873 = vmatprep.subr.mxu0 %v810
        %874 = vmatpush1.msra.mxu0 %v809
        %875 = vmatprep.subr.mxu0 %v812
        %876 = vmatpush1.msra.mxu0 %v811
        %877 = vmatprep.subr.mxu0 %v814
        %878 = vmatpush1.msra.mxu0 %v813
        %879 = vmatprep.subr.mxu0 %v816
        %880 = vmatpush1.msra.mxu0 %v815
        %881 = vmatprep.subr.mxu0 %v818
        %882 = vmatpush1.msra.mxu0 %v817
        %883 = vmatprep.subr.mxu0 %v820
        %884 = vmatpush1.msra.mxu0 %v819
        %885 = vmatprep.subr.mxu0 %v822
        %886 = vmatpush1.msra.mxu0 %v821
        %887 = vmatprep.subr.mxu0 %v824
        %888 = vmatpush1.msra.mxu0 %v823
        %889 = vmatprep.subr.mxu0 %v826
        %890 = vmatpush1.msra.mxu0 %v825
        %891 = vmatprep.subr.mxu0 %v828
        %892 = vmatpush1.msra.mxu0 %v827
        %893 = vmatprep.subr.mxu0 %v830
        %894 = vmatpush1.msra.mxu0 %v829
        %895 = vmatprep.subr.mxu0 %v832
        %896 = vmatpush1.msra.mxu0 %v831
        %897 = vmatprep.subr.mxu0 %v834
        %898 = vmatpush1.msra.mxu0 %v833
        %899 = vmatprep.subr.mxu0 %v836
        %900 = vmatpush1.msra.mxu0 %v835
        %901 = vmatprep.subr.mxu0 %v838
        %902 = vmatpush1.msra.mxu0 %v837
        %903 = vmatprep.subr.mxu0 %v840
        %904 = vmatpush1.msra.mxu0 %v839
        %905 = vmatprep.subr.mxu0 %v842
        %906 = vmatpush1.msra.mxu0 %v841
        %907 = vmatprep.subr.mxu0 %v844
        %908 = vmatpush1.msra.mxu0 %v843
        %909 = vmatprep.subr.mxu0 %v846
        %910 = vmatpush1.msra.mxu0 %v845
        %911 = vmatprep.subr.mxu0 %v848
        %912 = vmatpush1.msra.mxu0 %v847
        %913 = vmatprep.subr.mxu0 %v850
        %914 = vmatpush1.msra.mxu0 %v849
        %915 = vmatprep.mubr.f32.mxu0 %v339
        %916 = vmatmul.mubr.f32.gmra.mrb[0].mxu0 %v337
        %v917 = vpop.f32.mrb[0].mxu0
        %v918 = vadd.f32 0.0, %v917
        %v919 = vpop.f32.mrb[0].mxu0
        %v920 = vadd.f32 0.0, %v919
        %921 = vdwg.mxu0
        %v922 = vadd.f32 %v784, %v918
        %v923 = vadd.f32 %v785, %v920
        %v924 = vadd.f32 %v922, %v343
        %v925 = vadd.f32 %v923, %v345
        %s926 = scalar_lea.vmem [#allocation2], 2560
        %v927 = vld [vmem:[%s926] sm:$0xff]
        %v928 = vld [vmem:[%s926 + $0x8] sm:$0xff]
        %v929 = vld [vmem:[%s926 + $0x10] sm:$0xff]
        %v930 = vld [vmem:[%s926 + $0x18] sm:$0xff]
        %v931 = vld [vmem:[%s926 + $0x20] sm:$0xff]
        %v932 = vld [vmem:[%s926 + $0x28] sm:$0xff]
        %v933 = vld [vmem:[%s926 + $0x30] sm:$0xff]
        %v934 = vld [vmem:[%s926 + $0x38] sm:$0xff]
        %v935 = vld [vmem:[%s926 + $0x40] sm:$0xff]
        %v936 = vld [vmem:[%s926 + $0x48] sm:$0xff]
        %v937 = vld [vmem:[%s926 + $0x50] sm:$0xff]
        %v938 = vld [vmem:[%s926 + $0x58] sm:$0xff]
        %v939 = vld [vmem:[%s926 + $0x60] sm:$0xff]
        %v940 = vld [vmem:[%s926 + $0x68] sm:$0xff]
        %v941 = vld [vmem:[%s926 + $0x70] sm:$0xff]
        %v942 = vld [vmem:[%s926 + $0x78] sm:$0xff]
        %v943 = vld [vmem:[%s926 + $0x80] sm:$0xff]
        %v944 = vld [vmem:[%s926 + $0x88] sm:$0xff]
        %v945 = vld [vmem:[%s926 + $0x90] sm:$0xff]
        %v946 = vld [vmem:[%s926 + $0x98] sm:$0xff]
        %v947 = vld [vmem:[%s926 + $0xa0] sm:$0xff]
        %v948 = vld [vmem:[%s926 + $0xa8] sm:$0xff]
        %v949 = vld [vmem:[%s926 + $0xb0] sm:$0xff]
        %v950 = vld [vmem:[%s926 + $0xb8] sm:$0xff]
        %v951 = vld [vmem:[%s926 + $0xc0] sm:$0xff]
        %v952 = vld [vmem:[%s926 + $0xc8] sm:$0xff]
        %v953 = vld [vmem:[%s926 + $0xd0] sm:$0xff]
        %v954 = vld [vmem:[%s926 + $0xd8] sm:$0xff]
        %v955 = vld [vmem:[%s926 + $0xe0] sm:$0xff]
        %v956 = vld [vmem:[%s926 + $0xe8] sm:$0xff]
        %v957 = vld [vmem:[%s926 + $0xf0] sm:$0xff]
        %v958 = vld [vmem:[%s926 + $0xf8] sm:$0xff]
        %v959 = vld [vmem:[%s926 + $0x100] sm:$0xff]
        %v960 = vld [vmem:[%s926 + $0x108] sm:$0xff]
        %v961 = vld [vmem:[%s926 + $0x110] sm:$0xff]
        %v962 = vld [vmem:[%s926 + $0x118] sm:$0xff]
        %v963 = vld [vmem:[%s926 + $0x120] sm:$0xff]
        %v964 = vld [vmem:[%s926 + $0x128] sm:$0xff]
        %v965 = vld [vmem:[%s926 + $0x130] sm:$0xff]
        %v966 = vld [vmem:[%s926 + $0x138] sm:$0xff]
        %v967 = vld [vmem:[%s926 + $0x140] sm:$0xff]
        %v968 = vld [vmem:[%s926 + $0x148] sm:$0xff]
        %v969 = vld [vmem:[%s926 + $0x150] sm:$0xff]
        %v970 = vld [vmem:[%s926 + $0x158] sm:$0xff]
        %v971 = vld [vmem:[%s926 + $0x160] sm:$0xff]
        %v972 = vld [vmem:[%s926 + $0x168] sm:$0xff]
        %v973 = vld [vmem:[%s926 + $0x170] sm:$0xff]
        %v974 = vld [vmem:[%s926 + $0x178] sm:$0xff]
        %v975 = vld [vmem:[%s926 + $0x180] sm:$0xff]
        %v976 = vld [vmem:[%s926 + $0x188] sm:$0xff]
        %v977 = vld [vmem:[%s926 + $0x190] sm:$0xff]
        %v978 = vld [vmem:[%s926 + $0x198] sm:$0xff]
        %v979 = vld [vmem:[%s926 + $0x1a0] sm:$0xff]
        %v980 = vld [vmem:[%s926 + $0x1a8] sm:$0xff]
        %v981 = vld [vmem:[%s926 + $0x1b0] sm:$0xff]
        %v982 = vld [vmem:[%s926 + $0x1b8] sm:$0xff]
        %v983 = vld [vmem:[%s926 + $0x1c0] sm:$0xff]
        %v984 = vld [vmem:[%s926 + $0x1c8] sm:$0xff]
        %v985 = vld [vmem:[%s926 + $0x1d0] sm:$0xff]
        %v986 = vld [vmem:[%s926 + $0x1d8] sm:$0xff]
        %v987 = vld [vmem:[%s926 + $0x1e0] sm:$0xff]
        %v988 = vld [vmem:[%s926 + $0x1e8] sm:$0xff]
        %v989 = vld [vmem:[%s926 + $0x1f0] sm:$0xff]
        %v990 = vld [vmem:[%s926 + $0x1f8] sm:$0xff]
        %991 = vmatprep.subr.mxu0 %v928
        %992 = vmatpush1.msra.mxu0 %v927
        %993 = vmatprep.subr.mxu0 %v930
        %994 = vmatpush1.msra.mxu0 %v929
        %995 = vmatprep.subr.mxu0 %v932
        %996 = vmatpush1.msra.mxu0 %v931
        %997 = vmatprep.subr.mxu0 %v934
        %998 = vmatpush1.msra.mxu0 %v933
        %999 = vmatprep.subr.mxu0 %v936
        %1000 = vmatpush1.msra.mxu0 %v935
        %1001 = vmatprep.subr.mxu0 %v938
        %1002 = vmatpush1.msra.mxu0 %v937
        %1003 = vmatprep.subr.mxu0 %v940
        %1004 = vmatpush1.msra.mxu0 %v939
        %1005 = vmatprep.subr.mxu0 %v942
        %1006 = vmatpush1.msra.mxu0 %v941
        %1007 = vmatprep.subr.mxu0 %v944
        %1008 = vmatpush1.msra.mxu0 %v943
        %1009 = vmatprep.subr.mxu0 %v946
        %1010 = vmatpush1.msra.mxu0 %v945
        %1011 = vmatprep.subr.mxu0 %v948
        %1012 = vmatpush1.msra.mxu0 %v947
        %1013 = vmatprep.subr.mxu0 %v950
        %1014 = vmatpush1.msra.mxu0 %v949
        %1015 = vmatprep.subr.mxu0 %v952
        %1016 = vmatpush1.msra.mxu0 %v951
        %1017 = vmatprep.subr.mxu0 %v954
        %1018 = vmatpush1.msra.mxu0 %v953
        %1019 = vmatprep.subr.mxu0 %v956
        %1020 = vmatpush1.msra.mxu0 %v955
        %1021 = vmatprep.subr.mxu0 %v958
        %1022 = vmatpush1.msra.mxu0 %v957
        %1023 = vmatprep.subr.mxu0 %v960
        %1024 = vmatpush1.msra.mxu0 %v959
        %1025 = vmatprep.subr.mxu0 %v962
        %1026 = vmatpush1.msra.mxu0 %v961
        %1027 = vmatprep.subr.mxu0 %v964
        %1028 = vmatpush1.msra.mxu0 %v963
        %1029 = vmatprep.subr.mxu0 %v966
        %1030 = vmatpush1.msra.mxu0 %v965
        %1031 = vmatprep.subr.mxu0 %v968
        %1032 = vmatpush1.msra.mxu0 %v967
        %1033 = vmatprep.subr.mxu0 %v970
        %1034 = vmatpush1.msra.mxu0 %v969
        %1035 = vmatprep.subr.mxu0 %v972
        %1036 = vmatpush1.msra.mxu0 %v971
        %1037 = vmatprep.subr.mxu0 %v974
        %1038 = vmatpush1.msra.mxu0 %v973
        %1039 = vmatprep.subr.mxu0 %v976
        %1040 = vmatpush1.msra.mxu0 %v975
        %1041 = vmatprep.subr.mxu0 %v978
        %1042 = vmatpush1.msra.mxu0 %v977
        %1043 = vmatprep.subr.mxu0 %v980
        %1044 = vmatpush1.msra.mxu0 %v979
        %1045 = vmatprep.subr.mxu0 %v982
        %1046 = vmatpush1.msra.mxu0 %v981
        %1047 = vmatprep.subr.mxu0 %v984
        %1048 = vmatpush1.msra.mxu0 %v983
        %1049 = vmatprep.subr.mxu0 %v986
        %1050 = vmatpush1.msra.mxu0 %v985
        %1051 = vmatprep.subr.mxu0 %v988
        %1052 = vmatpush1.msra.mxu0 %v987
        %1053 = vmatprep.subr.mxu0 %v990
        %1054 = vmatpush1.msra.mxu0 %v989
        %1055 = vmatprep.mubr.f32.mxu0 %v351
        %1056 = vmatmul.mubr.f32.gmra.mrb[0].mxu0 %v349
        %v1057 = vpop.f32.mrb[0].mxu0
        %v1058 = vadd.f32 0.0, %v1057
        %v1059 = vpop.f32.mrb[0].mxu0
        %v1060 = vadd.f32 0.0, %v1059
        %1061 = vdwg.mxu0
        %v1062 = vadd.f32 %v924, %v1058
        %v1063 = vadd.f32 %v925, %v1060
        %s1064 = scalar_lea.vmem [#allocation2], 3072
        %v1065 = vld [vmem:[%s1064] sm:$0xff]
        %v1066 = vld [vmem:[%s1064 + $0x8] sm:$0xff]
        %v1067 = vld [vmem:[%s1064 + $0x10] sm:$0xff]
        %v1068 = vld [vmem:[%s1064 + $0x18] sm:$0xff]
        %v1069 = vld [vmem:[%s1064 + $0x20] sm:$0xff]
        %v1070 = vld [vmem:[%s1064 + $0x28] sm:$0xff]
        %v1071 = vld [vmem:[%s1064 + $0x30] sm:$0xff]
        %v1072 = vld [vmem:[%s1064 + $0x38] sm:$0xff]
        %v1073 = vld [vmem:[%s1064 + $0x40] sm:$0xff]
        %v1074 = vld [vmem:[%s1064 + $0x48] sm:$0xff]
        %v1075 = vld [vmem:[%s1064 + $0x50] sm:$0xff]
        %v1076 = vld [vmem:[%s1064 + $0x58] sm:$0xff]
        %v1077 = vld [vmem:[%s1064 + $0x60] sm:$0xff]
        %v1078 = vld [vmem:[%s1064 + $0x68] sm:$0xff]
        %v1079 = vld [vmem:[%s1064 + $0x70] sm:$0xff]
        %v1080 = vld [vmem:[%s1064 + $0x78] sm:$0xff]
        %v1081 = vld [vmem:[%s1064 + $0x80] sm:$0xff]
        %v1082 = vld [vmem:[%s1064 + $0x88] sm:$0xff]
        %v1083 = vld [vmem:[%s1064 + $0x90] sm:$0xff]
        %v1084 = vld [vmem:[%s1064 + $0x98] sm:$0xff]
        %v1085 = vld [vmem:[%s1064 + $0xa0] sm:$0xff]
        %v1086 = vld [vmem:[%s1064 + $0xa8] sm:$0xff]
        %v1087 = vld [vmem:[%s1064 + $0xb0] sm:$0xff]
        %v1088 = vld [vmem:[%s1064 + $0xb8] sm:$0xff]
        %v1089 = vld [vmem:[%s1064 + $0xc0] sm:$0xff]
        %v1090 = vld [vmem:[%s1064 + $0xc8] sm:$0xff]
        %v1091 = vld [vmem:[%s1064 + $0xd0] sm:$0xff]
        %v1092 = vld [vmem:[%s1064 + $0xd8] sm:$0xff]
        %v1093 = vld [vmem:[%s1064 + $0xe0] sm:$0xff]
        %v1094 = vld [vmem:[%s1064 + $0xe8] sm:$0xff]
        %v1095 = vld [vmem:[%s1064 + $0xf0] sm:$0xff]
        %v1096 = vld [vmem:[%s1064 + $0xf8] sm:$0xff]
        %v1097 = vld [vmem:[%s1064 + $0x100] sm:$0xff]
        %v1098 = vld [vmem:[%s1064 + $0x108] sm:$0xff]
        %v1099 = vld [vmem:[%s1064 + $0x110] sm:$0xff]
        %v1100 = vld [vmem:[%s1064 + $0x118] sm:$0xff]
        %v1101 = vld [vmem:[%s1064 + $0x120] sm:$0xff]
        %v1102 = vld [vmem:[%s1064 + $0x128] sm:$0xff]
        %v1103 = vld [vmem:[%s1064 + $0x130] sm:$0xff]
        %v1104 = vld [vmem:[%s1064 + $0x138] sm:$0xff]
        %v1105 = vld [vmem:[%s1064 + $0x140] sm:$0xff]
        %v1106 = vld [vmem:[%s1064 + $0x148] sm:$0xff]
        %v1107 = vld [vmem:[%s1064 + $0x150] sm:$0xff]
        %v1108 = vld [vmem:[%s1064 + $0x158] sm:$0xff]
        %v1109 = vld [vmem:[%s1064 + $0x160] sm:$0xff]
        %v1110 = vld [vmem:[%s1064 + $0x168] sm:$0xff]
        %v1111 = vld [vmem:[%s1064 + $0x170] sm:$0xff]
        %v1112 = vld [vmem:[%s1064 + $0x178] sm:$0xff]
        %v1113 = vld [vmem:[%s1064 + $0x180] sm:$0xff]
        %v1114 = vld [vmem:[%s1064 + $0x188] sm:$0xff]
        %v1115 = vld [vmem:[%s1064 + $0x190] sm:$0xff]
        %v1116 = vld [vmem:[%s1064 + $0x198] sm:$0xff]
        %v1117 = vld [vmem:[%s1064 + $0x1a0] sm:$0xff]
        %v1118 = vld [vmem:[%s1064 + $0x1a8] sm:$0xff]
        %v1119 = vld [vmem:[%s1064 + $0x1b0] sm:$0xff]
        %v1120 = vld [vmem:[%s1064 + $0x1b8] sm:$0xff]
        %v1121 = vld [vmem:[%s1064 + $0x1c0] sm:$0xff]
        %v1122 = vld [vmem:[%s1064 + $0x1c8] sm:$0xff]
        %v1123 = vld [vmem:[%s1064 + $0x1d0] sm:$0xff]
        %v1124 = vld [vmem:[%s1064 + $0x1d8] sm:$0xff]
        %v1125 = vld [vmem:[%s1064 + $0x1e0] sm:$0xff]
        %v1126 = vld [vmem:[%s1064 + $0x1e8] sm:$0xff]
        %v1127 = vld [vmem:[%s1064 + $0x1f0] sm:$0xff]
        %v1128 = vld [vmem:[%s1064 + $0x1f8] sm:$0xff]
        %1129 = vmatprep.subr.mxu0 %v1066
        %1130 = vmatpush1.msra.mxu0 %v1065
        %1131 = vmatprep.subr.mxu0 %v1068
        %1132 = vmatpush1.msra.mxu0 %v1067
        %1133 = vmatprep.subr.mxu0 %v1070
        %1134 = vmatpush1.msra.mxu0 %v1069
        %1135 = vmatprep.subr.mxu0 %v1072
        %1136 = vmatpush1.msra.mxu0 %v1071
        %1137 = vmatprep.subr.mxu0 %v1074
        %1138 = vmatpush1.msra.mxu0 %v1073
        %1139 = vmatprep.subr.mxu0 %v1076
        %1140 = vmatpush1.msra.mxu0 %v1075
        %1141 = vmatprep.subr.mxu0 %v1078
        %1142 = vmatpush1.msra.mxu0 %v1077
        %1143 = vmatprep.subr.mxu0 %v1080
        %1144 = vmatpush1.msra.mxu0 %v1079
        %1145 = vmatprep.subr.mxu0 %v1082
        %1146 = vmatpush1.msra.mxu0 %v1081
        %1147 = vmatprep.subr.mxu0 %v1084
        %1148 = vmatpush1.msra.mxu0 %v1083
        %1149 = vmatprep.subr.mxu0 %v1086
        %1150 = vmatpush1.msra.mxu0 %v1085
        %1151 = vmatprep.subr.mxu0 %v1088
        %1152 = vmatpush1.msra.mxu0 %v1087
        %1153 = vmatprep.subr.mxu0 %v1090
        %1154 = vmatpush1.msra.mxu0 %v1089
        %1155 = vmatprep.subr.mxu0 %v1092
        %1156 = vmatpush1.msra.mxu0 %v1091
        %1157 = vmatprep.subr.mxu0 %v1094
        %1158 = vmatpush1.msra.mxu0 %v1093
        %1159 = vmatprep.subr.mxu0 %v1096
        %1160 = vmatpush1.msra.mxu0 %v1095
        %1161 = vmatprep.subr.mxu0 %v1098
        %1162 = vmatpush1.msra.mxu0 %v1097
        %1163 = vmatprep.subr.mxu0 %v1100
        %1164 = vmatpush1.msra.mxu0 %v1099
        %1165 = vmatprep.subr.mxu0 %v1102
        %1166 = vmatpush1.msra.mxu0 %v1101
        %1167 = vmatprep.subr.mxu0 %v1104
        %1168 = vmatpush1.msra.mxu0 %v1103
        %1169 = vmatprep.subr.mxu0 %v1106
        %1170 = vmatpush1.msra.mxu0 %v1105
        %1171 = vmatprep.subr.mxu0 %v1108
        %1172 = vmatpush1.msra.mxu0 %v1107
        %1173 = vmatprep.subr.mxu0 %v1110
        %1174 = vmatpush1.msra.mxu0 %v1109
        %1175 = vmatprep.subr.mxu0 %v1112
        %1176 = vmatpush1.msra.mxu0 %v1111
        %1177 = vmatprep.subr.mxu0 %v1114
        %1178 = vmatpush1.msra.mxu0 %v1113
        %1179 = vmatprep.subr.mxu0 %v1116
        %1180 = vmatpush1.msra.mxu0 %v1115
        %1181 = vmatprep.subr.mxu0 %v1118
        %1182 = vmatpush1.msra.mxu0 %v1117
        %1183 = vmatprep.subr.mxu0 %v1120
        %1184 = vmatpush1.msra.mxu0 %v1119
        %1185 = vmatprep.subr.mxu0 %v1122
        %1186 = vmatpush1.msra.mxu0 %v1121
        %1187 = vmatprep.subr.mxu0 %v1124
        %1188 = vmatpush1.msra.mxu0 %v1123
        %1189 = vmatprep.subr.mxu0 %v1126
        %1190 = vmatpush1.msra.mxu0 %v1125
        %1191 = vmatprep.subr.mxu0 %v1128
        %1192 = vmatpush1.msra.mxu0 %v1127
        %1193 = vmatprep.mubr.f32.mxu0 %v357
        %1194 = vmatmul.mubr.f32.gmra.mrb[0].mxu0 %v355
        %v1195 = vpop.f32.mrb[0].mxu0
        %v1196 = vadd.f32 0.0, %v1195
        %v1197 = vpop.f32.mrb[0].mxu0
        %v1198 = vadd.f32 0.0, %v1197
        %1199 = vdwg.mxu0
        %v1200 = vadd.f32 %v1062, %v1196
        %v1201 = vadd.f32 %v1063, %v1198
        %s1202 = scalar_lea.vmem [#allocation2], 3584
        %v1203 = vld [vmem:[%s1202] sm:$0xff]
        %v1204 = vld [vmem:[%s1202 + $0x8] sm:$0xff]
        %v1205 = vld [vmem:[%s1202 + $0x10] sm:$0xff]
        %v1206 = vld [vmem:[%s1202 + $0x18] sm:$0xff]
        %v1207 = vld [vmem:[%s1202 + $0x20] sm:$0xff]
        %v1208 = vld [vmem:[%s1202 + $0x28] sm:$0xff]
        %v1209 = vld [vmem:[%s1202 + $0x30] sm:$0xff]
        %v1210 = vld [vmem:[%s1202 + $0x38] sm:$0xff]
        %v1211 = vld [vmem:[%s1202 + $0x40] sm:$0xff]
        %v1212 = vld [vmem:[%s1202 + $0x48] sm:$0xff]
        %v1213 = vld [vmem:[%s1202 + $0x50] sm:$0xff]
        %v1214 = vld [vmem:[%s1202 + $0x58] sm:$0xff]
        %v1215 = vld [vmem:[%s1202 + $0x60] sm:$0xff]
        %v1216 = vld [vmem:[%s1202 + $0x68] sm:$0xff]
        %v1217 = vld [vmem:[%s1202 + $0x70] sm:$0xff]
        %v1218 = vld [vmem:[%s1202 + $0x78] sm:$0xff]
        %v1219 = vld [vmem:[%s1202 + $0x80] sm:$0xff]
        %v1220 = vld [vmem:[%s1202 + $0x88] sm:$0xff]
        %v1221 = vld [vmem:[%s1202 + $0x90] sm:$0xff]
        %v1222 = vld [vmem:[%s1202 + $0x98] sm:$0xff]
        %v1223 = vld [vmem:[%s1202 + $0xa0] sm:$0xff]
        %v1224 = vld [vmem:[%s1202 + $0xa8] sm:$0xff]
        %v1225 = vld [vmem:[%s1202 + $0xb0] sm:$0xff]
        %v1226 = vld [vmem:[%s1202 + $0xb8] sm:$0xff]
        %v1227 = vld [vmem:[%s1202 + $0xc0] sm:$0xff]
        %v1228 = vld [vmem:[%s1202 + $0xc8] sm:$0xff]
        %v1229 = vld [vmem:[%s1202 + $0xd0] sm:$0xff]
        %v1230 = vld [vmem:[%s1202 + $0xd8] sm:$0xff]
        %v1231 = vld [vmem:[%s1202 + $0xe0] sm:$0xff]
        %v1232 = vld [vmem:[%s1202 + $0xe8] sm:$0xff]
        %v1233 = vld [vmem:[%s1202 + $0xf0] sm:$0xff]
        %v1234 = vld [vmem:[%s1202 + $0xf8] sm:$0xff]
        %v1235 = vld [vmem:[%s1202 + $0x100] sm:$0xff]
        %v1236 = vld [vmem:[%s1202 + $0x108] sm:$0xff]
        %v1237 = vld [vmem:[%s1202 + $0x110] sm:$0xff]
        %v1238 = vld [vmem:[%s1202 + $0x118] sm:$0xff]
        %v1239 = vld [vmem:[%s1202 + $0x120] sm:$0xff]
        %v1240 = vld [vmem:[%s1202 + $0x128] sm:$0xff]
        %v1241 = vld [vmem:[%s1202 + $0x130] sm:$0xff]
        %v1242 = vld [vmem:[%s1202 + $0x138] sm:$0xff]
        %v1243 = vld [vmem:[%s1202 + $0x140] sm:$0xff]
        %v1244 = vld [vmem:[%s1202 + $0x148] sm:$0xff]
        %v1245 = vld [vmem:[%s1202 + $0x150] sm:$0xff]
        %v1246 = vld [vmem:[%s1202 + $0x158] sm:$0xff]
        %v1247 = vld [vmem:[%s1202 + $0x160] sm:$0xff]
        %v1248 = vld [vmem:[%s1202 + $0x168] sm:$0xff]
        %v1249 = vld [vmem:[%s1202 + $0x170] sm:$0xff]
        %v1250 = vld [vmem:[%s1202 + $0x178] sm:$0xff]
        %v1251 = vld [vmem:[%s1202 + $0x180] sm:$0xff]
        %v1252 = vld [vmem:[%s1202 + $0x188] sm:$0xff]
        %v1253 = vld [vmem:[%s1202 + $0x190] sm:$0xff]
        %v1254 = vld [vmem:[%s1202 + $0x198] sm:$0xff]
        %v1255 = vld [vmem:[%s1202 + $0x1a0] sm:$0xff]
        %v1256 = vld [vmem:[%s1202 + $0x1a8] sm:$0xff]
        %v1257 = vld [vmem:[%s1202 + $0x1b0] sm:$0xff]
        %v1258 = vld [vmem:[%s1202 + $0x1b8] sm:$0xff]
        %v1259 = vld [vmem:[%s1202 + $0x1c0] sm:$0xff]
        %v1260 = vld [vmem:[%s1202 + $0x1c8] sm:$0xff]
        %v1261 = vld [vmem:[%s1202 + $0x1d0] sm:$0xff]
        %v1262 = vld [vmem:[%s1202 + $0x1d8] sm:$0xff]
        %v1263 = vld [vmem:[%s1202 + $0x1e0] sm:$0xff]
        %v1264 = vld [vmem:[%s1202 + $0x1e8] sm:$0xff]
        %v1265 = vld [vmem:[%s1202 + $0x1f0] sm:$0xff]
        %v1266 = vld [vmem:[%s1202 + $0x1f8] sm:$0xff]
        %1267 = vmatprep.subr.mxu0 %v1204
        %1268 = vmatpush1.msra.mxu0 %v1203
        %1269 = vmatprep.subr.mxu0 %v1206
        %1270 = vmatpush1.msra.mxu0 %v1205
        %1271 = vmatprep.subr.mxu0 %v1208
        %1272 = vmatpush1.msra.mxu0 %v1207
        %1273 = vmatprep.subr.mxu0 %v1210
        %1274 = vmatpush1.msra.mxu0 %v1209
        %1275 = vmatprep.subr.mxu0 %v1212
        %1276 = vmatpush1.msra.mxu0 %v1211
        %1277 = vmatprep.subr.mxu0 %v1214
        %1278 = vmatpush1.msra.mxu0 %v1213
        %1279 = vmatprep.subr.mxu0 %v1216
        %1280 = vmatpush1.msra.mxu0 %v1215
        %1281 = vmatprep.subr.mxu0 %v1218
        %1282 = vmatpush1.msra.mxu0 %v1217
        %1283 = vmatprep.subr.mxu0 %v1220
        %1284 = vmatpush1.msra.mxu0 %v1219
        %1285 = vmatprep.subr.mxu0 %v1222
        %1286 = vmatpush1.msra.mxu0 %v1221
        %1287 = vmatprep.subr.mxu0 %v1224
        %1288 = vmatpush1.msra.mxu0 %v1223
        %1289 = vmatprep.subr.mxu0 %v1226
        %1290 = vmatpush1.msra.mxu0 %v1225
        %1291 = vmatprep.subr.mxu0 %v1228
        %1292 = vmatpush1.msra.mxu0 %v1227
        %1293 = vmatprep.subr.mxu0 %v1230
        %1294 = vmatpush1.msra.mxu0 %v1229
        %1295 = vmatprep.subr.mxu0 %v1232
        %1296 = vmatpush1.msra.mxu0 %v1231
        %1297 = vmatprep.subr.mxu0 %v1234
        %1298 = vmatpush1.msra.mxu0 %v1233
        %1299 = vmatprep.subr.mxu0 %v1236
        %1300 = vmatpush1.msra.mxu0 %v1235
        %1301 = vmatprep.subr.mxu0 %v1238
        %1302 = vmatpush1.msra.mxu0 %v1237
        %1303 = vmatprep.subr.mxu0 %v1240
        %1304 = vmatpush1.msra.mxu0 %v1239
        %1305 = vmatprep.subr.mxu0 %v1242
        %1306 = vmatpush1.msra.mxu0 %v1241
        %1307 = vmatprep.subr.mxu0 %v1244
        %1308 = vmatpush1.msra.mxu0 %v1243
        %1309 = vmatprep.subr.mxu0 %v1246
        %1310 = vmatpush1.msra.mxu0 %v1245
        %1311 = vmatprep.subr.mxu0 %v1248
        %1312 = vmatpush1.msra.mxu0 %v1247
        %1313 = vmatprep.subr.mxu0 %v1250
        %1314 = vmatpush1.msra.mxu0 %v1249
        %1315 = vmatprep.subr.mxu0 %v1252
        %1316 = vmatpush1.msra.mxu0 %v1251
        %1317 = vmatprep.subr.mxu0 %v1254
        %1318 = vmatpush1.msra.mxu0 %v1253
        %1319 = vmatprep.subr.mxu0 %v1256
        %1320 = vmatpush1.msra.mxu0 %v1255
        %1321 = vmatprep.subr.mxu0 %v1258
        %1322 = vmatpush1.msra.mxu0 %v1257
        %1323 = vmatprep.subr.mxu0 %v1260
        %1324 = vmatpush1.msra.mxu0 %v1259
        %1325 = vmatprep.subr.mxu0 %v1262
        %1326 = vmatpush1.msra.mxu0 %v1261
        %1327 = vmatprep.subr.mxu0 %v1264
        %1328 = vmatpush1.msra.mxu0 %v1263
        %1329 = vmatprep.subr.mxu0 %v1266
        %1330 = vmatpush1.msra.mxu0 %v1265
        %1331 = vmatprep.mubr.f32.mxu0 %v363
        %1332 = vmatmul.mubr.f32.gmra.mrb[0].mxu0 %v361
        %v1333 = vpop.f32.mrb[0].mxu0
        %v1334 = vadd.f32 0.0, %v1333
        %v1335 = vpop.f32.mrb[0].mxu0
        %v1336 = vadd.f32 0.0, %v1335
        %1337 = vdwg.mxu0
        %v1338 = vadd.f32 %v1200, %v1334
        %v1339 = vadd.f32 %v1201, %v1336
        %s1340 = scalar_lea.vmem [#allocation2], 4096
        %v1341 = vld [vmem:[%s1340] sm:$0xff]
        %v1342 = vld [vmem:[%s1340 + $0x8] sm:$0xff]
        %v1343 = vld [vmem:[%s1340 + $0x10] sm:$0xff]
        %v1344 = vld [vmem:[%s1340 + $0x18] sm:$0xff]
        %v1345 = vld [vmem:[%s1340 + $0x20] sm:$0xff]
        %v1346 = vld [vmem:[%s1340 + $0x28] sm:$0xff]
        %v1347 = vld [vmem:[%s1340 + $0x30] sm:$0xff]
        %v1348 = vld [vmem:[%s1340 + $0x38] sm:$0xff]
        %v1349 = vld [vmem:[%s1340 + $0x40] sm:$0xff]
        %v1350 = vld [vmem:[%s1340 + $0x48] sm:$0xff]
        %v1351 = vld [vmem:[%s1340 + $0x50] sm:$0xff]
        %v1352 = vld [vmem:[%s1340 + $0x58] sm:$0xff]
        %v1353 = vld [vmem:[%s1340 + $0x60] sm:$0xff]
        %v1354 = vld [vmem:[%s1340 + $0x68] sm:$0xff]
        %v1355 = vld [vmem:[%s1340 + $0x70] sm:$0xff]
        %v1356 = vld [vmem:[%s1340 + $0x78] sm:$0xff]
        %v1357 = vld [vmem:[%s1340 + $0x80] sm:$0xff]
        %v1358 = vld [vmem:[%s1340 + $0x88] sm:$0xff]
        %v1359 = vld [vmem:[%s1340 + $0x90] sm:$0xff]
        %v1360 = vld [vmem:[%s1340 + $0x98] sm:$0xff]
        %v1361 = vld [vmem:[%s1340 + $0xa0] sm:$0xff]
        %v1362 = vld [vmem:[%s1340 + $0xa8] sm:$0xff]
        %v1363 = vld [vmem:[%s1340 + $0xb0] sm:$0xff]
        %v1364 = vld [vmem:[%s1340 + $0xb8] sm:$0xff]
        %v1365 = vld [vmem:[%s1340 + $0xc0] sm:$0xff]
        %v1366 = vld [vmem:[%s1340 + $0xc8] sm:$0xff]
        %v1367 = vld [vmem:[%s1340 + $0xd0] sm:$0xff]
        %v1368 = vld [vmem:[%s1340 + $0xd8] sm:$0xff]
        %v1369 = vld [vmem:[%s1340 + $0xe0] sm:$0xff]
        %v1370 = vld [vmem:[%s1340 + $0xe8] sm:$0xff]
        %v1371 = vld [vmem:[%s1340 + $0xf0] sm:$0xff]
        %v1372 = vld [vmem:[%s1340 + $0xf8] sm:$0xff]
        %v1373 = vld [vmem:[%s1340 + $0x100] sm:$0xff]
        %v1374 = vld [vmem:[%s1340 + $0x108] sm:$0xff]
        %v1375 = vld [vmem:[%s1340 + $0x110] sm:$0xff]
        %v1376 = vld [vmem:[%s1340 + $0x118] sm:$0xff]
        %v1377 = vld [vmem:[%s1340 + $0x120] sm:$0xff]
        %v1378 = vld [vmem:[%s1340 + $0x128] sm:$0xff]
        %v1379 = vld [vmem:[%s1340 + $0x130] sm:$0xff]
        %v1380 = vld [vmem:[%s1340 + $0x138] sm:$0xff]
        %v1381 = vld [vmem:[%s1340 + $0x140] sm:$0xff]
        %v1382 = vld [vmem:[%s1340 + $0x148] sm:$0xff]
        %v1383 = vld [vmem:[%s1340 + $0x150] sm:$0xff]
        %v1384 = vld [vmem:[%s1340 + $0x158] sm:$0xff]
        %v1385 = vld [vmem:[%s1340 + $0x160] sm:$0xff]
        %v1386 = vld [vmem:[%s1340 + $0x168] sm:$0xff]
        %v1387 = vld [vmem:[%s1340 + $0x170] sm:$0xff]
        %v1388 = vld [vmem:[%s1340 + $0x178] sm:$0xff]
        %v1389 = vld [vmem:[%s1340 + $0x180] sm:$0xff]
        %v1390 = vld [vmem:[%s1340 + $0x188] sm:$0xff]
        %v1391 = vld [vmem:[%s1340 + $0x190] sm:$0xff]
        %v1392 = vld [vmem:[%s1340 + $0x198] sm:$0xff]
        %v1393 = vld [vmem:[%s1340 + $0x1a0] sm:$0xff]
        %v1394 = vld [vmem:[%s1340 + $0x1a8] sm:$0xff]
        %v1395 = vld [vmem:[%s1340 + $0x1b0] sm:$0xff]
        %v1396 = vld [vmem:[%s1340 + $0x1b8] sm:$0xff]
        %v1397 = vld [vmem:[%s1340 + $0x1c0] sm:$0xff]
        %v1398 = vld [vmem:[%s1340 + $0x1c8] sm:$0xff]
        %v1399 = vld [vmem:[%s1340 + $0x1d0] sm:$0xff]
        %v1400 = vld [vmem:[%s1340 + $0x1d8] sm:$0xff]
        %v1401 = vld [vmem:[%s1340 + $0x1e0] sm:$0xff]
        %v1402 = vld [vmem:[%s1340 + $0x1e8] sm:$0xff]
        %v1403 = vld [vmem:[%s1340 + $0x1f0] sm:$0xff]
        %v1404 = vld [vmem:[%s1340 + $0x1f8] sm:$0xff]
        %1405 = vmatprep.subr.mxu0 %v1342
        %1406 = vmatpush1.msra.mxu0 %v1341
        %1407 = vmatprep.subr.mxu0 %v1344
        %1408 = vmatpush1.msra.mxu0 %v1343
        %1409 = vmatprep.subr.mxu0 %v1346
        %1410 = vmatpush1.msra.mxu0 %v1345
        %1411 = vmatprep.subr.mxu0 %v1348
        %1412 = vmatpush1.msra.mxu0 %v1347
        %1413 = vmatprep.subr.mxu0 %v1350
        %1414 = vmatpush1.msra.mxu0 %v1349
        %1415 = vmatprep.subr.mxu0 %v1352
        %1416 = vmatpush1.msra.mxu0 %v1351
        %1417 = vmatprep.subr.mxu0 %v1354
        %1418 = vmatpush1.msra.mxu0 %v1353
        %1419 = vmatprep.subr.mxu0 %v1356
        %1420 = vmatpush1.msra.mxu0 %v1355
        %1421 = vmatprep.subr.mxu0 %v1358
        %1422 = vmatpush1.msra.mxu0 %v1357
        %1423 = vmatprep.subr.mxu0 %v1360
        %1424 = vmatpush1.msra.mxu0 %v1359
        %1425 = vmatprep.subr.mxu0 %v1362
        %1426 = vmatpush1.msra.mxu0 %v1361
        %1427 = vmatprep.subr.mxu0 %v1364
        %1428 = vmatpush1.msra.mxu0 %v1363
        %1429 = vmatprep.subr.mxu0 %v1366
        %1430 = vmatpush1.msra.mxu0 %v1365
        %1431 = vmatprep.subr.mxu0 %v1368
        %1432 = vmatpush1.msra.mxu0 %v1367
        %1433 = vmatprep.subr.mxu0 %v1370
        %1434 = vmatpush1.msra.mxu0 %v1369
        %1435 = vmatprep.subr.mxu0 %v1372
        %1436 = vmatpush1.msra.mxu0 %v1371
        %1437 = vmatprep.subr.mxu0 %v1374
        %1438 = vmatpush1.msra.mxu0 %v1373
        %1439 = vmatprep.subr.mxu0 %v1376
        %1440 = vmatpush1.msra.mxu0 %v1375
        %1441 = vmatprep.subr.mxu0 %v1378
        %1442 = vmatpush1.msra.mxu0 %v1377
        %1443 = vmatprep.subr.mxu0 %v1380
        %1444 = vmatpush1.msra.mxu0 %v1379
        %1445 = vmatprep.subr.mxu0 %v1382
        %1446 = vmatpush1.msra.mxu0 %v1381
        %1447 = vmatprep.subr.mxu0 %v1384
        %1448 = vmatpush1.msra.mxu0 %v1383
        %1449 = vmatprep.subr.mxu0 %v1386
        %1450 = vmatpush1.msra.mxu0 %v1385
        %1451 = vmatprep.subr.mxu0 %v1388
        %1452 = vmatpush1.msra.mxu0 %v1387
        %1453 = vmatprep.subr.mxu0 %v1390
        %1454 = vmatpush1.msra.mxu0 %v1389
        %1455 = vmatprep.subr.mxu0 %v1392
        %1456 = vmatpush1.msra.mxu0 %v1391
        %1457 = vmatprep.subr.mxu0 %v1394
        %1458 = vmatpush1.msra.mxu0 %v1393
        %1459 = vmatprep.subr.mxu0 %v1396
        %1460 = vmatpush1.msra.mxu0 %v1395
        %1461 = vmatprep.subr.mxu0 %v1398
        %1462 = vmatpush1.msra.mxu0 %v1397
        %1463 = vmatprep.subr.mxu0 %v1400
        %1464 = vmatpush1.msra.mxu0 %v1399
        %1465 = vmatprep.subr.mxu0 %v1402
        %1466 = vmatpush1.msra.mxu0 %v1401
        %1467 = vmatprep.subr.mxu0 %v1404
        %1468 = vmatpush1.msra.mxu0 %v1403
        %1469 = vmatprep.mubr.f32.mxu0 %v369
        %1470 = vmatmul.mubr.f32.gmra.mrb[0].mxu0 %v367
        %v1471 = vpop.f32.mrb[0].mxu0
        %v1472 = vadd.f32 0.0, %v1471
        %v1473 = vpop.f32.mrb[0].mxu0
        %v1474 = vadd.f32 0.0, %v1473
        %1475 = vdwg.mxu0
        %v1476 = vadd.f32 %v1338, %v1472
        %v1477 = vadd.f32 %v1339, %v1474
        %vm1478 = vcmp.ge.f32.partialorder %v1476, 0.0
        %vm1479 = vcmp.ge.f32.partialorder %v1477, 0.0
        %v1480 = vmul.f32 %v1476, 0.1
        %v1481 = vmul.f32 %v1477, 0.1
        %v1482 = vsel %vm1478, %v1476, %v1480
        %v1483 = vsel %vm1479, %v1477, %v1481
        %s1484 = scalar_lea.vmem %s1, 72
        %v1485 = vld [vmem:[%s1484] sm:$0xff]
        %v1486 = vld [vmem:[%s1484 + $0x8] sm:$0xff]
        %v1487 = vld [vmem:[%s1484 + $0x10] sm:$0xff]
        %v1488 = vld [vmem:[%s1484 + $0x18] sm:$0xff]
        %v1489 = vld [vmem:[%s1484 + $0x20] sm:$0xff]
        %v1490 = vld [vmem:[%s1484 + $0x28] sm:$0xff]
        %v1491 = vld [vmem:[%s1484 + $0x30] sm:$0xff]
        %v1492 = vld [vmem:[%s1484 + $0x38] sm:$0xff]
        %v1493 = vld [vmem:[%s1484 + $0x40] sm:$0xff]
        %v1495 = vsel %vm224, %v1485, 0
        %v1498 = vsel %vm224, %v1486, 0
        %v1501 = vsel %vm224, %v1487, 0
        %v1504 = vsel %vm224, %v1488, 0
        %v1507 = vsel %vm224, %v1489, 0
        %v1510 = vsel %vm224, %v1490, 0
        %v1513 = vsel %vm224, %v1491, 0
        %v1516 = vsel %vm224, %v1492, 0
        %v1519 = vsel %vm224, %v1493, 0
        %1521 = vmatprep.subr.mxu0 %v1483
        %1522 = vmatpush1.msra.mxu0 %v1482
        %1523 = vmatprep.subr.mxu0 0.0
        %1524 = vmatpush1.msra.mxu0 0.0
        %1525 = vmatprep.subr.mxu0 0.0
        %1526 = vmatpush1.msra.mxu0 0.0
        %1527 = vmatprep.subr.mxu0 0.0
        %1528 = vmatpush1.msra.mxu0 0.0
        %1529 = vmatprep.subr.mxu0 0.0
        %1530 = vmatpush1.msra.mxu0 0.0
        %1531 = vmatprep.subr.mxu0 0.0
        %1532 = vmatpush1.msra.mxu0 0.0
        %1533 = vmatprep.subr.mxu0 0.0
        %1534 = vmatpush1.msra.mxu0 0.0
        %1535 = vmatprep.subr.mxu0 0.0
        %1536 = vmatpush1.msra.mxu0 0.0
        %1537 = vmatprep.subr.mxu0 0.0
        %1538 = vmatpush1.msra.mxu0 0.0
        %1539 = vmatprep.subr.mxu0 0.0
        %1540 = vmatpush1.msra.mxu0 0.0
        %1541 = vmatprep.subr.mxu0 0.0
        %1542 = vmatpush1.msra.mxu0 0.0
        %1543 = vmatprep.subr.mxu0 0.0
        %1544 = vmatpush1.msra.mxu0 0.0
        %1545 = vmatprep.subr.mxu0 0.0
        %1546 = vmatpush1.msra.mxu0 0.0
        %1547 = vmatprep.subr.mxu0 0.0
        %1548 = vmatpush1.msra.mxu0 0.0
        %1549 = vmatprep.subr.mxu0 0.0
        %1550 = vmatpush1.msra.mxu0 0.0
        %1551 = vmatprep.subr.mxu0 0.0
        %1552 = vmatpush1.msra.mxu0 0.0
        %1553 = vmatprep.subr.mxu0 0.0
        %1554 = vmatpush1.msra.mxu0 0.0
        %1555 = vmatprep.subr.mxu0 0.0
        %1556 = vmatpush1.msra.mxu0 0.0
        %1557 = vmatprep.subr.mxu0 0.0
        %1558 = vmatpush1.msra.mxu0 0.0
        %1559 = vmatprep.subr.mxu0 0.0
        %1560 = vmatpush1.msra.mxu0 0.0
        %1561 = vmatprep.subr.mxu0 0.0
        %1562 = vmatpush1.msra.mxu0 0.0
        %1563 = vmatprep.subr.mxu0 0.0
        %1564 = vmatpush1.msra.mxu0 0.0
        %1565 = vmatprep.subr.mxu0 0.0
        %1566 = vmatpush1.msra.mxu0 0.0
        %1567 = vmatprep.subr.mxu0 0.0
        %1568 = vmatpush1.msra.mxu0 0.0
        %1569 = vmatprep.subr.mxu0 0.0
        %1570 = vmatpush1.msra.mxu0 0.0
        %1571 = vmatprep.subr.mxu0 0.0
        %1572 = vmatpush1.msra.mxu0 0.0
        %1573 = vmatprep.subr.mxu0 0.0
        %1574 = vmatpush1.msra.mxu0 0.0
        %1575 = vmatprep.subr.mxu0 0.0
        %1576 = vmatpush1.msra.mxu0 0.0
        %1577 = vmatprep.subr.mxu0 0.0
        %1578 = vmatpush1.msra.mxu0 0.0
        %1579 = vmatprep.subr.mxu0 0.0
        %1580 = vmatpush1.msra.mxu0 0.0
        %1581 = vmatprep.subr.mxu0 0.0
        %1582 = vmatpush1.msra.mxu0 0.0
        %1583 = vmatprep.subr.mxu0 0.0
        %1584 = vmatpush1.msra.mxu0 0.0
        %1585 = vmatprep.mubr.f32.mxu0 0.0
        %1586 = vmatmul.mubr.f32.gmra.mrb[0].mxu0 %v1495
        %v1587 = vpop.f32.mrb[0].mxu0
        %v1588 = vadd.f32 0.0, %v1587
        %v1589 = vpop.f32.mrb[0].mxu0
        %v1590 = vadd.f32 0.0, %v1589
        %1591 = vmatprep.mubr.f32.mxu0 0.0
        %1592 = vmatmul.mubr.f32.gmra.mrb[0].mxu0 %v1498
        %v1593 = vpop.f32.mrb[0].mxu0
        %v1594 = vadd.f32 0.0, %v1593
        %v1595 = vpop.f32.mrb[0].mxu0
        %v1596 = vadd.f32 0.0, %v1595
        %1597 = vmatprep.mubr.f32.mxu0 0.0
        %1598 = vmatmul.mubr.f32.gmra.mrb[0].mxu0 %v1501
        %v1599 = vpop.f32.mrb[0].mxu0
        %v1600 = vadd.f32 0.0, %v1599
        %v1601 = vpop.f32.mrb[0].mxu0
        %v1602 = vadd.f32 0.0, %v1601
        %1603 = vmatprep.mubr.f32.mxu0 0.0
        %1604 = vmatmul.mubr.f32.gmra.mrb[0].mxu0 %v1504
        %v1605 = vpop.f32.mrb[0].mxu0
        %v1606 = vadd.f32 0.0, %v1605
        %v1607 = vpop.f32.mrb[0].mxu0
        %v1608 = vadd.f32 0.0, %v1607
        %1609 = vmatprep.mubr.f32.mxu0 0.0
        %1610 = vmatmul.mubr.f32.gmra.mrb[0].mxu0 %v1507
        %v1611 = vpop.f32.mrb[0].mxu0
        %v1612 = vadd.f32 0.0, %v1611
        %v1613 = vpop.f32.mrb[0].mxu0
        %v1614 = vadd.f32 0.0, %v1613
        %1615 = vmatprep.mubr.f32.mxu0 0.0
        %1616 = vmatmul.mubr.f32.gmra.mrb[0].mxu0 %v1510
        %v1617 = vpop.f32.mrb[0].mxu0
        %v1618 = vadd.f32 0.0, %v1617
        %v1619 = vpop.f32.mrb[0].mxu0
        %v1620 = vadd.f32 0.0, %v1619
        %1621 = vmatprep.mubr.f32.mxu0 0.0
        %1622 = vmatmul.mubr.f32.gmra.mrb[0].mxu0 %v1513
        %v1623 = vpop.f32.mrb[0].mxu0
        %v1624 = vadd.f32 0.0, %v1623
        %v1625 = vpop.f32.mrb[0].mxu0
        %v1626 = vadd.f32 0.0, %v1625
        %1627 = vmatprep.mubr.f32.mxu0 0.0
        %1628 = vmatmul.mubr.f32.gmra.mrb[0].mxu0 %v1516
        %v1629 = vpop.f32.mrb[0].mxu0
        %v1630 = vadd.f32 0.0, %v1629
        %v1631 = vpop.f32.mrb[0].mxu0
        %v1632 = vadd.f32 0.0, %v1631
        %1633 = vmatprep.mubr.f32.mxu0 0.0
        %1634 = vmatmul.mubr.f32.gmra.mrb[0].mxu0 %v1519
        %v1635 = vpop.f32.mrb[0].mxu0
        %v1636 = vadd.f32 0.0, %v1635
        %v1637 = vpop.f32.mrb[0].mxu0
        %v1638 = vadd.f32 0.0, %v1637
        %1639 = vdwg.mxu0
        %s1640 = scalar_lea.vmem %s2, 16
        %v1641 = vld [vmem:[%s1640] sm:$0xff]
        %v1642 = vld [vmem:[%s1640 + $0x8] sm:$0xff]
        %1643 = vmatprep.subr.mxu0 %v374
        %1644 = vmatpush1.msra.mxu0 %v373
        %1645 = vmatprep.subr.mxu0 %v376
        %1646 = vmatpush1.msra.mxu0 %v375
        %1647 = vmatprep.subr.mxu0 %v378
        %1648 = vmatpush1.msra.mxu0 %v377
        %1649 = vmatprep.subr.mxu0 %v380
        %1650 = vmatpush1.msra.mxu0 %v379
        %1651 = vmatprep.subr.mxu0 %v382
        %1652 = vmatpush1.msra.mxu0 %v381
        %1653 = vmatprep.subr.mxu0 %v384
        %1654 = vmatpush1.msra.mxu0 %v383
        %1655 = vmatprep.subr.mxu0 %v386
        %1656 = vmatpush1.msra.mxu0 %v385
        %1657 = vmatprep.subr.mxu0 %v388
        %1658 = vmatpush1.msra.mxu0 %v387
        %1659 = vmatprep.subr.mxu0 %v390
        %1660 = vmatpush1.msra.mxu0 %v389
        %1661 = vmatprep.subr.mxu0 %v392
        %1662 = vmatpush1.msra.mxu0 %v391
        %1663 = vmatprep.subr.mxu0 %v394
        %1664 = vmatpush1.msra.mxu0 %v393
        %1665 = vmatprep.subr.mxu0 %v396
        %1666 = vmatpush1.msra.mxu0 %v395
        %1667 = vmatprep.subr.mxu0 %v398
        %1668 = vmatpush1.msra.mxu0 %v397
        %1669 = vmatprep.subr.mxu0 %v400
        %1670 = vmatpush1.msra.mxu0 %v399
        %1671 = vmatprep.subr.mxu0 %v402
        %1672 = vmatpush1.msra.mxu0 %v401
        %1673 = vmatprep.subr.mxu0 %v404
        %1674 = vmatpush1.msra.mxu0 %v403
        %1675 = vmatprep.subr.mxu0 %v406
        %1676 = vmatpush1.msra.mxu0 %v405
        %1677 = vmatprep.subr.mxu0 %v408
        %1678 = vmatpush1.msra.mxu0 %v407
        %1679 = vmatprep.subr.mxu0 %v410
        %1680 = vmatpush1.msra.mxu0 %v409
        %1681 = vmatprep.subr.mxu0 %v412
        %1682 = vmatpush1.msra.mxu0 %v411
        %1683 = vmatprep.subr.mxu0 %v414
        %1684 = vmatpush1.msra.mxu0 %v413
        %1685 = vmatprep.subr.mxu0 %v416
        %1686 = vmatpush1.msra.mxu0 %v415
        %1687 = vmatprep.subr.mxu0 %v418
        %1688 = vmatpush1.msra.mxu0 %v417
        %1689 = vmatprep.subr.mxu0 %v420
        %1690 = vmatpush1.msra.mxu0 %v419
        %1691 = vmatprep.subr.mxu0 %v422
        %1692 = vmatpush1.msra.mxu0 %v421
        %1693 = vmatprep.subr.mxu0 %v424
        %1694 = vmatpush1.msra.mxu0 %v423
        %1695 = vmatprep.subr.mxu0 %v426
        %1696 = vmatpush1.msra.mxu0 %v425
        %1697 = vmatprep.subr.mxu0 %v428
        %1698 = vmatpush1.msra.mxu0 %v427
        %1699 = vmatprep.subr.mxu0 %v430
        %1700 = vmatpush1.msra.mxu0 %v429
        %1701 = vmatprep.subr.mxu0 %v432
        %1702 = vmatpush1.msra.mxu0 %v431
        %1703 = vmatprep.subr.mxu0 %v434
        %1704 = vmatpush1.msra.mxu0 %v433
        %1705 = vmatprep.subr.mxu0 %v436
        %1706 = vmatpush1.msra.mxu0 %v435
        %1707 = vmatprep.mubr.f32.mxu0 %v1590
        %1708 = vmatmul.mubr.f32.gmra.mrb[0].mxu0 %v1588
        %v1709 = vpop.f32.mrb[0].mxu0
        %v1710 = vadd.f32 0.0, %v1709
        %v1711 = vpop.f32.mrb[0].mxu0
        %v1712 = vadd.f32 0.0, %v1711
        %1713 = vdwg.mxu0
        %v1714 = vadd.f32 %v1641, %v1710
        %v1715 = vadd.f32 %v1642, %v1712
        %1716 = vmatprep.subr.mxu0 %v512
        %1717 = vmatpush1.msra.mxu0 %v511
        %1718 = vmatprep.subr.mxu0 %v514
        %1719 = vmatpush1.msra.mxu0 %v513
        %1720 = vmatprep.subr.mxu0 %v516
        %1721 = vmatpush1.msra.mxu0 %v515
        %1722 = vmatprep.subr.mxu0 %v518
        %1723 = vmatpush1.msra.mxu0 %v517
        %1724 = vmatprep.subr.mxu0 %v520
        %1725 = vmatpush1.msra.mxu0 %v519
        %1726 = vmatprep.subr.mxu0 %v522
        %1727 = vmatpush1.msra.mxu0 %v521
        %1728 = vmatprep.subr.mxu0 %v524
        %1729 = vmatpush1.msra.mxu0 %v523
        %1730 = vmatprep.subr.mxu0 %v526
        %1731 = vmatpush1.msra.mxu0 %v525
        %1732 = vmatprep.subr.mxu0 %v528
        %1733 = vmatpush1.msra.mxu0 %v527
        %1734 = vmatprep.subr.mxu0 %v530
        %1735 = vmatpush1.msra.mxu0 %v529
        %1736 = vmatprep.subr.mxu0 %v532
        %1737 = vmatpush1.msra.mxu0 %v531
        %1738 = vmatprep.subr.mxu0 %v534
        %1739 = vmatpush1.msra.mxu0 %v533
        %1740 = vmatprep.subr.mxu0 %v536
        %1741 = vmatpush1.msra.mxu0 %v535
        %1742 = vmatprep.subr.mxu0 %v538
        %1743 = vmatpush1.msra.mxu0 %v537
        %1744 = vmatprep.subr.mxu0 %v540
        %1745 = vmatpush1.msra.mxu0 %v539
        %1746 = vmatprep.subr.mxu0 %v542
        %1747 = vmatpush1.msra.mxu0 %v541
        %1748 = vmatprep.subr.mxu0 %v544
        %1749 = vmatpush1.msra.mxu0 %v543
        %1750 = vmatprep.subr.mxu0 %v546
        %1751 = vmatpush1.msra.mxu0 %v545
        %1752 = vmatprep.subr.mxu0 %v548
        %1753 = vmatpush1.msra.mxu0 %v547
        %1754 = vmatprep.subr.mxu0 %v550
        %1755 = vmatpush1.msra.mxu0 %v549
        %1756 = vmatprep.subr.mxu0 %v552
        %1757 = vmatpush1.msra.mxu0 %v551
        %1758 = vmatprep.subr.mxu0 %v554
        %1759 = vmatpush1.msra.mxu0 %v553
        %1760 = vmatprep.subr.mxu0 %v556
        %1761 = vmatpush1.msra.mxu0 %v555
        %1762 = vmatprep.subr.mxu0 %v558
        %1763 = vmatpush1.msra.mxu0 %v557
        %1764 = vmatprep.subr.mxu0 %v560
        %1765 = vmatpush1.msra.mxu0 %v559
        %1766 = vmatprep.subr.mxu0 %v562
        %1767 = vmatpush1.msra.mxu0 %v561
        %1768 = vmatprep.subr.mxu0 %v564
        %1769 = vmatpush1.msra.mxu0 %v563
        %1770 = vmatprep.subr.mxu0 %v566
        %1771 = vmatpush1.msra.mxu0 %v565
        %1772 = vmatprep.subr.mxu0 %v568
        %1773 = vmatpush1.msra.mxu0 %v567
        %1774 = vmatprep.subr.mxu0 %v570
        %1775 = vmatpush1.msra.mxu0 %v569
        %1776 = vmatprep.subr.mxu0 %v572
        %1777 = vmatpush1.msra.mxu0 %v571
        %1778 = vmatprep.subr.mxu0 %v574
        %1779 = vmatpush1.msra.mxu0 %v573
        %1780 = vmatprep.mubr.f32.mxu0 %v1596
        %1781 = vmatmul.mubr.f32.gmra.mrb[0].mxu0 %v1594
        %v1782 = vpop.f32.mrb[0].mxu0
        %v1783 = vadd.f32 0.0, %v1782
        %v1784 = vpop.f32.mrb[0].mxu0
        %v1785 = vadd.f32 0.0, %v1784
        %1786 = vdwg.mxu0
        %v1787 = vadd.f32 %v1714, %v1783
        %v1788 = vadd.f32 %v1715, %v1785
        %1789 = vmatprep.subr.mxu0 %v650
        %1790 = vmatpush1.msra.mxu0 %v649
        %1791 = vmatprep.subr.mxu0 %v652
        %1792 = vmatpush1.msra.mxu0 %v651
        %1793 = vmatprep.subr.mxu0 %v654
        %1794 = vmatpush1.msra.mxu0 %v653
        %1795 = vmatprep.subr.mxu0 %v656
        %1796 = vmatpush1.msra.mxu0 %v655
        %1797 = vmatprep.subr.mxu0 %v658
        %1798 = vmatpush1.msra.mxu0 %v657
        %1799 = vmatprep.subr.mxu0 %v660
        %1800 = vmatpush1.msra.mxu0 %v659
        %1801 = vmatprep.subr.mxu0 %v662
        %1802 = vmatpush1.msra.mxu0 %v661
        %1803 = vmatprep.subr.mxu0 %v664
        %1804 = vmatpush1.msra.mxu0 %v663
        %1805 = vmatprep.subr.mxu0 %v666
        %1806 = vmatpush1.msra.mxu0 %v665
        %1807 = vmatprep.subr.mxu0 %v668
        %1808 = vmatpush1.msra.mxu0 %v667
        %1809 = vmatprep.subr.mxu0 %v670
        %1810 = vmatpush1.msra.mxu0 %v669
        %1811 = vmatprep.subr.mxu0 %v672
        %1812 = vmatpush1.msra.mxu0 %v671
        %1813 = vmatprep.subr.mxu0 %v674
        %1814 = vmatpush1.msra.mxu0 %v673
        %1815 = vmatprep.subr.mxu0 %v676
        %1816 = vmatpush1.msra.mxu0 %v675
        %1817 = vmatprep.subr.mxu0 %v678
        %1818 = vmatpush1.msra.mxu0 %v677
        %1819 = vmatprep.subr.mxu0 %v680
        %1820 = vmatpush1.msra.mxu0 %v679
        %1821 = vmatprep.subr.mxu0 %v682
        %1822 = vmatpush1.msra.mxu0 %v681
        %1823 = vmatprep.subr.mxu0 %v684
        %1824 = vmatpush1.msra.mxu0 %v683
        %1825 = vmatprep.subr.mxu0 %v686
        %1826 = vmatpush1.msra.mxu0 %v685
        %1827 = vmatprep.subr.mxu0 %v688
        %1828 = vmatpush1.msra.mxu0 %v687
        %1829 = vmatprep.subr.mxu0 %v690
        %1830 = vmatpush1.msra.mxu0 %v689
        %1831 = vmatprep.subr.mxu0 %v692
        %1832 = vmatpush1.msra.mxu0 %v691
        %1833 = vmatprep.subr.mxu0 %v694
        %1834 = vmatpush1.msra.mxu0 %v693
        %1835 = vmatprep.subr.mxu0 %v696
        %1836 = vmatpush1.msra.mxu0 %v695
        %1837 = vmatprep.subr.mxu0 %v698
        %1838 = vmatpush1.msra.mxu0 %v697
        %1839 = vmatprep.subr.mxu0 %v700
        %1840 = vmatpush1.msra.mxu0 %v699
        %1841 = vmatprep.subr.mxu0 %v702
        %1842 = vmatpush1.msra.mxu0 %v701
        %1843 = vmatprep.subr.mxu0 %v704
        %1844 = vmatpush1.msra.mxu0 %v703
        %1845 = vmatprep.subr.mxu0 %v706
        %1846 = vmatpush1.msra.mxu0 %v705
        %1847 = vmatprep.subr.mxu0 %v708
        %1848 = vmatpush1.msra.mxu0 %v707
        %1849 = vmatprep.subr.mxu0 %v710
        %1850 = vmatpush1.msra.mxu0 %v709
        %1851 = vmatprep.subr.mxu0 %v712
        %1852 = vmatpush1.msra.mxu0 %v711
        %1853 = vmatprep.mubr.f32.mxu0 %v1602
        %1854 = vmatmul.mubr.f32.gmra.mrb[0].mxu0 %v1600
        %v1855 = vpop.f32.mrb[0].mxu0
        %v1856 = vadd.f32 0.0, %v1855
        %v1857 = vpop.f32.mrb[0].mxu0
        %v1858 = vadd.f32 0.0, %v1857
        %1859 = vdwg.mxu0
        %v1860 = vadd.f32 %v1787, %v1856
        %v1861 = vadd.f32 %v1788, %v1858
        %1862 = vmatprep.subr.mxu0 %v788
        %1863 = vmatpush1.msra.mxu0 %v787
        %1864 = vmatprep.subr.mxu0 %v790
        %1865 = vmatpush1.msra.mxu0 %v789
        %1866 = vmatprep.subr.mxu0 %v792
        %1867 = vmatpush1.msra.mxu0 %v791
        %1868 = vmatprep.subr.mxu0 %v794
        %1869 = vmatpush1.msra.mxu0 %v793
        %1870 = vmatprep.subr.mxu0 %v796
        %1871 = vmatpush1.msra.mxu0 %v795
        %1872 = vmatprep.subr.mxu0 %v798
        %1873 = vmatpush1.msra.mxu0 %v797
        %1874 = vmatprep.subr.mxu0 %v800
        %1875 = vmatpush1.msra.mxu0 %v799
        %1876 = vmatprep.subr.mxu0 %v802
        %1877 = vmatpush1.msra.mxu0 %v801
        %1878 = vmatprep.subr.mxu0 %v804
        %1879 = vmatpush1.msra.mxu0 %v803
        %1880 = vmatprep.subr.mxu0 %v806
        %1881 = vmatpush1.msra.mxu0 %v805
        %1882 = vmatprep.subr.mxu0 %v808
        %1883 = vmatpush1.msra.mxu0 %v807
        %1884 = vmatprep.subr.mxu0 %v810
        %1885 = vmatpush1.msra.mxu0 %v809
        %1886 = vmatprep.subr.mxu0 %v812
        %1887 = vmatpush1.msra.mxu0 %v811
        %1888 = vmatprep.subr.mxu0 %v814
        %1889 = vmatpush1.msra.mxu0 %v813
        %1890 = vmatprep.subr.mxu0 %v816
        %1891 = vmatpush1.msra.mxu0 %v815
        %1892 = vmatprep.subr.mxu0 %v818
        %1893 = vmatpush1.msra.mxu0 %v817
        %1894 = vmatprep.subr.mxu0 %v820
        %1895 = vmatpush1.msra.mxu0 %v819
        %1896 = vmatprep.subr.mxu0 %v822
        %1897 = vmatpush1.msra.mxu0 %v821
        %1898 = vmatprep.subr.mxu0 %v824
        %1899 = vmatpush1.msra.mxu0 %v823
        %1900 = vmatprep.subr.mxu0 %v826
        %1901 = vmatpush1.msra.mxu0 %v825
        %1902 = vmatprep.subr.mxu0 %v828
        %1903 = vmatpush1.msra.mxu0 %v827
        %1904 = vmatprep.subr.mxu0 %v830
        %1905 = vmatpush1.msra.mxu0 %v829
        %1906 = vmatprep.subr.mxu0 %v832
        %1907 = vmatpush1.msra.mxu0 %v831
        %1908 = vmatprep.subr.mxu0 %v834
        %1909 = vmatpush1.msra.mxu0 %v833
        %1910 = vmatprep.subr.mxu0 %v836
        %1911 = vmatpush1.msra.mxu0 %v835
        %1912 = vmatprep.subr.mxu0 %v838
        %1913 = vmatpush1.msra.mxu0 %v837
        %1914 = vmatprep.subr.mxu0 %v840
        %1915 = vmatpush1.msra.mxu0 %v839
        %1916 = vmatprep.subr.mxu0 %v842
        %1917 = vmatpush1.msra.mxu0 %v841
        %1918 = vmatprep.subr.mxu0 %v844
        %1919 = vmatpush1.msra.mxu0 %v843
        %1920 = vmatprep.subr.mxu0 %v846
        %1921 = vmatpush1.msra.mxu0 %v845
        %1922 = vmatprep.subr.mxu0 %v848
        %1923 = vmatpush1.msra.mxu0 %v847
        %1924 = vmatprep.subr.mxu0 %v850
        %1925 = vmatpush1.msra.mxu0 %v849
        %1926 = vmatprep.mubr.f32.mxu0 %v1608
        %1927 = vmatmul.mubr.f32.gmra.mrb[0].mxu0 %v1606
        %v1928 = vpop.f32.mrb[0].mxu0
        %v1929 = vadd.f32 0.0, %v1928
        %v1930 = vpop.f32.mrb[0].mxu0
        %v1931 = vadd.f32 0.0, %v1930
        %1932 = vdwg.mxu0
        %v1933 = vadd.f32 %v1860, %v1929
        %v1934 = vadd.f32 %v1861, %v1931
        %v1935 = vadd.f32 %v1933, %v1612
        %v1936 = vadd.f32 %v1934, %v1614
        %1937 = vmatprep.subr.mxu0 %v928
        %1938 = vmatpush1.msra.mxu0 %v927
        %1939 = vmatprep.subr.mxu0 %v930
        %1940 = vmatpush1.msra.mxu0 %v929
        %1941 = vmatprep.subr.mxu0 %v932
        %1942 = vmatpush1.msra.mxu0 %v931
        %1943 = vmatprep.subr.mxu0 %v934
        %1944 = vmatpush1.msra.mxu0 %v933
        %1945 = vmatprep.subr.mxu0 %v936
        %1946 = vmatpush1.msra.mxu0 %v935
        %1947 = vmatprep.subr.mxu0 %v938
        %1948 = vmatpush1.msra.mxu0 %v937
        %1949 = vmatprep.subr.mxu0 %v940
        %1950 = vmatpush1.msra.mxu0 %v939
        %1951 = vmatprep.subr.mxu0 %v942
        %1952 = vmatpush1.msra.mxu0 %v941
        %1953 = vmatprep.subr.mxu0 %v944
        %1954 = vmatpush1.msra.mxu0 %v943
        %1955 = vmatprep.subr.mxu0 %v946
        %1956 = vmatpush1.msra.mxu0 %v945
        %1957 = vmatprep.subr.mxu0 %v948
        %1958 = vmatpush1.msra.mxu0 %v947
        %1959 = vmatprep.subr.mxu0 %v950
        %1960 = vmatpush1.msra.mxu0 %v949
        %1961 = vmatprep.subr.mxu0 %v952
        %1962 = vmatpush1.msra.mxu0 %v951
        %1963 = vmatprep.subr.mxu0 %v954
        %1964 = vmatpush1.msra.mxu0 %v953
        %1965 = vmatprep.subr.mxu0 %v956
        %1966 = vmatpush1.msra.mxu0 %v955
        %1967 = vmatprep.subr.mxu0 %v958
        %1968 = vmatpush1.msra.mxu0 %v957
        %1969 = vmatprep.subr.mxu0 %v960
        %1970 = vmatpush1.msra.mxu0 %v959
        %1971 = vmatprep.subr.mxu0 %v962
        %1972 = vmatpush1.msra.mxu0 %v961
        %1973 = vmatprep.subr.mxu0 %v964
        %1974 = vmatpush1.msra.mxu0 %v963
        %1975 = vmatprep.subr.mxu0 %v966
        %1976 = vmatpush1.msra.mxu0 %v965
        %1977 = vmatprep.subr.mxu0 %v968
        %1978 = vmatpush1.msra.mxu0 %v967
        %1979 = vmatprep.subr.mxu0 %v970
        %1980 = vmatpush1.msra.mxu0 %v969
        %1981 = vmatprep.subr.mxu0 %v972
        %1982 = vmatpush1.msra.mxu0 %v971
        %1983 = vmatprep.subr.mxu0 %v974
        %1984 = vmatpush1.msra.mxu0 %v973
        %1985 = vmatprep.subr.mxu0 %v976
        %1986 = vmatpush1.msra.mxu0 %v975
        %1987 = vmatprep.subr.mxu0 %v978
        %1988 = vmatpush1.msra.mxu0 %v977
        %1989 = vmatprep.subr.mxu0 %v980
        %1990 = vmatpush1.msra.mxu0 %v979
        %1991 = vmatprep.subr.mxu0 %v982
        %1992 = vmatpush1.msra.mxu0 %v981
        %1993 = vmatprep.subr.mxu0 %v984
        %1994 = vmatpush1.msra.mxu0 %v983
        %1995 = vmatprep.subr.mxu0 %v986
        %1996 = vmatpush1.msra.mxu0 %v985
        %1997 = vmatprep.subr.mxu0 %v988
        %1998 = vmatpush1.msra.mxu0 %v987
        %1999 = vmatprep.subr.mxu0 %v990
        %2000 = vmatpush1.msra.mxu0 %v989
        %2001 = vmatprep.mubr.f32.mxu0 %v1620
        %2002 = vmatmul.mubr.f32.gmra.mrb[0].mxu0 %v1618
        %v2003 = vpop.f32.mrb[0].mxu0
        %v2004 = vadd.f32 0.0, %v2003
        %v2005 = vpop.f32.mrb[0].mxu0
        %v2006 = vadd.f32 0.0, %v2005
        %2007 = vdwg.mxu0
        %v2008 = vadd.f32 %v1935, %v2004
        %v2009 = vadd.f32 %v1936, %v2006
        %2010 = vmatprep.subr.mxu0 %v1066
        %2011 = vmatpush1.msra.mxu0 %v1065
        %2012 = vmatprep.subr.mxu0 %v1068
        %2013 = vmatpush1.msra.mxu0 %v1067
        %2014 = vmatprep.subr.mxu0 %v1070
        %2015 = vmatpush1.msra.mxu0 %v1069
        %2016 = vmatprep.subr.mxu0 %v1072
        %2017 = vmatpush1.msra.mxu0 %v1071
        %2018 = vmatprep.subr.mxu0 %v1074
        %2019 = vmatpush1.msra.mxu0 %v1073
        %2020 = vmatprep.subr.mxu0 %v1076
        %2021 = vmatpush1.msra.mxu0 %v1075
        %2022 = vmatprep.subr.mxu0 %v1078
        %2023 = vmatpush1.msra.mxu0 %v1077
        %2024 = vmatprep.subr.mxu0 %v1080
        %2025 = vmatpush1.msra.mxu0 %v1079
        %2026 = vmatprep.subr.mxu0 %v1082
        %2027 = vmatpush1.msra.mxu0 %v1081
        %2028 = vmatprep.subr.mxu0 %v1084
        %2029 = vmatpush1.msra.mxu0 %v1083
        %2030 = vmatprep.subr.mxu0 %v1086
        %2031 = vmatpush1.msra.mxu0 %v1085
        %2032 = vmatprep.subr.mxu0 %v1088
        %2033 = vmatpush1.msra.mxu0 %v1087
        %2034 = vmatprep.subr.mxu0 %v1090
        %2035 = vmatpush1.msra.mxu0 %v1089
        %2036 = vmatprep.subr.mxu0 %v1092
        %2037 = vmatpush1.msra.mxu0 %v1091
        %2038 = vmatprep.subr.mxu0 %v1094
        %2039 = vmatpush1.msra.mxu0 %v1093
        %2040 = vmatprep.subr.mxu0 %v1096
        %2041 = vmatpush1.msra.mxu0 %v1095
        %2042 = vmatprep.subr.mxu0 %v1098
        %2043 = vmatpush1.msra.mxu0 %v1097
        %2044 = vmatprep.subr.mxu0 %v1100
        %2045 = vmatpush1.msra.mxu0 %v1099
        %2046 = vmatprep.subr.mxu0 %v1102
        %2047 = vmatpush1.msra.mxu0 %v1101
        %2048 = vmatprep.subr.mxu0 %v1104
        %2049 = vmatpush1.msra.mxu0 %v1103
        %2050 = vmatprep.subr.mxu0 %v1106
        %2051 = vmatpush1.msra.mxu0 %v1105
        %2052 = vmatprep.subr.mxu0 %v1108
        %2053 = vmatpush1.msra.mxu0 %v1107
        %2054 = vmatprep.subr.mxu0 %v1110
        %2055 = vmatpush1.msra.mxu0 %v1109
        %2056 = vmatprep.subr.mxu0 %v1112
        %2057 = vmatpush1.msra.mxu0 %v1111
        %2058 = vmatprep.subr.mxu0 %v1114
        %2059 = vmatpush1.msra.mxu0 %v1113
        %2060 = vmatprep.subr.mxu0 %v1116
        %2061 = vmatpush1.msra.mxu0 %v1115
        %2062 = vmatprep.subr.mxu0 %v1118
        %2063 = vmatpush1.msra.mxu0 %v1117
        %2064 = vmatprep.subr.mxu0 %v1120
        %2065 = vmatpush1.msra.mxu0 %v1119
        %2066 = vmatprep.subr.mxu0 %v1122
        %2067 = vmatpush1.msra.mxu0 %v1121
        %2068 = vmatprep.subr.mxu0 %v1124
        %2069 = vmatpush1.msra.mxu0 %v1123
        %2070 = vmatprep.subr.mxu0 %v1126
        %2071 = vmatpush1.msra.mxu0 %v1125
        %2072 = vmatprep.subr.mxu0 %v1128
        %2073 = vmatpush1.msra.mxu0 %v1127
        %2074 = vmatprep.mubr.f32.mxu0 %v1626
        %2075 = vmatmul.mubr.f32.gmra.mrb[0].mxu0 %v1624
        %v2076 = vpop.f32.mrb[0].mxu0
        %v2077 = vadd.f32 0.0, %v2076
        %v2078 = vpop.f32.mrb[0].mxu0
        %v2079 = vadd.f32 0.0, %v2078
        %2080 = vdwg.mxu0
        %v2081 = vadd.f32 %v2008, %v2077
        %v2082 = vadd.f32 %v2009, %v2079
        %2083 = vmatprep.subr.mxu0 %v1204
        %2084 = vmatpush1.msra.mxu0 %v1203
        %2085 = vmatprep.subr.mxu0 %v1206
        %2086 = vmatpush1.msra.mxu0 %v1205
        %2087 = vmatprep.subr.mxu0 %v1208
        %2088 = vmatpush1.msra.mxu0 %v1207
        %2089 = vmatprep.subr.mxu0 %v1210
        %2090 = vmatpush1.msra.mxu0 %v1209
        %2091 = vmatprep.subr.mxu0 %v1212
        %2092 = vmatpush1.msra.mxu0 %v1211
        %2093 = vmatprep.subr.mxu0 %v1214
        %2094 = vmatpush1.msra.mxu0 %v1213
        %2095 = vmatprep.subr.mxu0 %v1216
        %2096 = vmatpush1.msra.mxu0 %v1215
        %2097 = vmatprep.subr.mxu0 %v1218
        %2098 = vmatpush1.msra.mxu0 %v1217
        %2099 = vmatprep.subr.mxu0 %v1220
        %2100 = vmatpush1.msra.mxu0 %v1219
        %2101 = vmatprep.subr.mxu0 %v1222
        %2102 = vmatpush1.msra.mxu0 %v1221
        %2103 = vmatprep.subr.mxu0 %v1224
        %2104 = vmatpush1.msra.mxu0 %v1223
        %2105 = vmatprep.subr.mxu0 %v1226
        %2106 = vmatpush1.msra.mxu0 %v1225
        %2107 = vmatprep.subr.mxu0 %v1228
        %2108 = vmatpush1.msra.mxu0 %v1227
        %2109 = vmatprep.subr.mxu0 %v1230
        %2110 = vmatpush1.msra.mxu0 %v1229
        %2111 = vmatprep.subr.mxu0 %v1232
        %2112 = vmatpush1.msra.mxu0 %v1231
        %2113 = vmatprep.subr.mxu0 %v1234
        %2114 = vmatpush1.msra.mxu0 %v1233
        %2115 = vmatprep.subr.mxu0 %v1236
        %2116 = vmatpush1.msra.mxu0 %v1235
        %2117 = vmatprep.subr.mxu0 %v1238
        %2118 = vmatpush1.msra.mxu0 %v1237
        %2119 = vmatprep.subr.mxu0 %v1240
        %2120 = vmatpush1.msra.mxu0 %v1239
        %2121 = vmatprep.subr.mxu0 %v1242
        %2122 = vmatpush1.msra.mxu0 %v1241
        %2123 = vmatprep.subr.mxu0 %v1244
        %2124 = vmatpush1.msra.mxu0 %v1243
        %2125 = vmatprep.subr.mxu0 %v1246
        %2126 = vmatpush1.msra.mxu0 %v1245
        %2127 = vmatprep.subr.mxu0 %v1248
        %2128 = vmatpush1.msra.mxu0 %v1247
        %2129 = vmatprep.subr.mxu0 %v1250
        %2130 = vmatpush1.msra.mxu0 %v1249
        %2131 = vmatprep.subr.mxu0 %v1252
        %2132 = vmatpush1.msra.mxu0 %v1251
        %2133 = vmatprep.subr.mxu0 %v1254
        %2134 = vmatpush1.msra.mxu0 %v1253
        %2135 = vmatprep.subr.mxu0 %v1256
        %2136 = vmatpush1.msra.mxu0 %v1255
        %2137 = vmatprep.subr.mxu0 %v1258
        %2138 = vmatpush1.msra.mxu0 %v1257
        %2139 = vmatprep.subr.mxu0 %v1260
        %2140 = vmatpush1.msra.mxu0 %v1259
        %2141 = vmatprep.subr.mxu0 %v1262
        %2142 = vmatpush1.msra.mxu0 %v1261
        %2143 = vmatprep.subr.mxu0 %v1264
        %2144 = vmatpush1.msra.mxu0 %v1263
        %2145 = vmatprep.subr.mxu0 %v1266
        %2146 = vmatpush1.msra.mxu0 %v1265
        %2147 = vmatprep.mubr.f32.mxu0 %v1632
        %2148 = vmatmul.mubr.f32.gmra.mrb[0].mxu0 %v1630
        %v2149 = vpop.f32.mrb[0].mxu0
        %v2150 = vadd.f32 0.0, %v2149
        %v2151 = vpop.f32.mrb[0].mxu0
        %v2152 = vadd.f32 0.0, %v2151
        %2153 = vdwg.mxu0
        %v2154 = vadd.f32 %v2081, %v2150
        %v2155 = vadd.f32 %v2082, %v2152
        %2156 = vmatprep.subr.mxu0 %v1342
        %2157 = vmatpush1.msra.mxu0 %v1341
        %2158 = vmatprep.subr.mxu0 %v1344
        %2159 = vmatpush1.msra.mxu0 %v1343
        %2160 = vmatprep.subr.mxu0 %v1346
        %2161 = vmatpush1.msra.mxu0 %v1345
        %2162 = vmatprep.subr.mxu0 %v1348
        %2163 = vmatpush1.msra.mxu0 %v1347
        %2164 = vmatprep.subr.mxu0 %v1350
        %2165 = vmatpush1.msra.mxu0 %v1349
        %2166 = vmatprep.subr.mxu0 %v1352
        %2167 = vmatpush1.msra.mxu0 %v1351
        %2168 = vmatprep.subr.mxu0 %v1354
        %2169 = vmatpush1.msra.mxu0 %v1353
        %2170 = vmatprep.subr.mxu0 %v1356
        %2171 = vmatpush1.msra.mxu0 %v1355
        %2172 = vmatprep.subr.mxu0 %v1358
        %2173 = vmatpush1.msra.mxu0 %v1357
        %2174 = vmatprep.subr.mxu0 %v1360
        %2175 = vmatpush1.msra.mxu0 %v1359
        %2176 = vmatprep.subr.mxu0 %v1362
        %2177 = vmatpush1.msra.mxu0 %v1361
        %2178 = vmatprep.subr.mxu0 %v1364
        %2179 = vmatpush1.msra.mxu0 %v1363
        %2180 = vmatprep.subr.mxu0 %v1366
        %2181 = vmatpush1.msra.mxu0 %v1365
        %2182 = vmatprep.subr.mxu0 %v1368
        %2183 = vmatpush1.msra.mxu0 %v1367
        %2184 = vmatprep.subr.mxu0 %v1370
        %2185 = vmatpush1.msra.mxu0 %v1369
        %2186 = vmatprep.subr.mxu0 %v1372
        %2187 = vmatpush1.msra.mxu0 %v1371
        %2188 = vmatprep.subr.mxu0 %v1374
        %2189 = vmatpush1.msra.mxu0 %v1373
        %2190 = vmatprep.subr.mxu0 %v1376
        %2191 = vmatpush1.msra.mxu0 %v1375
        %2192 = vmatprep.subr.mxu0 %v1378
        %2193 = vmatpush1.msra.mxu0 %v1377
        %2194 = vmatprep.subr.mxu0 %v1380
        %2195 = vmatpush1.msra.mxu0 %v1379
        %2196 = vmatprep.subr.mxu0 %v1382
        %2197 = vmatpush1.msra.mxu0 %v1381
        %2198 = vmatprep.subr.mxu0 %v1384
        %2199 = vmatpush1.msra.mxu0 %v1383
        %2200 = vmatprep.subr.mxu0 %v1386
        %2201 = vmatpush1.msra.mxu0 %v1385
        %2202 = vmatprep.subr.mxu0 %v1388
        %2203 = vmatpush1.msra.mxu0 %v1387
        %2204 = vmatprep.subr.mxu0 %v1390
        %2205 = vmatpush1.msra.mxu0 %v1389
        %2206 = vmatprep.subr.mxu0 %v1392
        %2207 = vmatpush1.msra.mxu0 %v1391
        %2208 = vmatprep.subr.mxu0 %v1394
        %2209 = vmatpush1.msra.mxu0 %v1393
        %2210 = vmatprep.subr.mxu0 %v1396
        %2211 = vmatpush1.msra.mxu0 %v1395
        %2212 = vmatprep.subr.mxu0 %v1398
        %2213 = vmatpush1.msra.mxu0 %v1397
        %2214 = vmatprep.subr.mxu0 %v1400
        %2215 = vmatpush1.msra.mxu0 %v1399
        %2216 = vmatprep.subr.mxu0 %v1402
        %2217 = vmatpush1.msra.mxu0 %v1401
        %2218 = vmatprep.subr.mxu0 %v1404
        %2219 = vmatpush1.msra.mxu0 %v1403
        %2220 = vmatprep.mubr.f32.mxu0 %v1638
        %2221 = vmatmul.mubr.f32.gmra.mrb[0].mxu0 %v1636
        %v2222 = vpop.f32.mrb[0].mxu0
        %v2223 = vadd.f32 0.0, %v2222
        %v2224 = vpop.f32.mrb[0].mxu0
        %v2225 = vadd.f32 0.0, %v2224
        %2226 = vdwg.mxu0
        %v2227 = vadd.f32 %v2154, %v2223
        %v2228 = vadd.f32 %v2155, %v2225
        %s2229 = scalar_lea.vmem %s1, 144
        %v2230 = vld [vmem:[%s2229] sm:$0xff]
        %v2231 = vld [vmem:[%s2229 + $0x8] sm:$0xff]
        %v2232 = vld [vmem:[%s2229 + $0x10] sm:$0xff]
        %v2233 = vld [vmem:[%s2229 + $0x18] sm:$0xff]
        %v2234 = vld [vmem:[%s2229 + $0x20] sm:$0xff]
        %v2235 = vld [vmem:[%s2229 + $0x28] sm:$0xff]
        %v2236 = vld [vmem:[%s2229 + $0x30] sm:$0xff]
        %v2237 = vld [vmem:[%s2229 + $0x38] sm:$0xff]
        %v2238 = vld [vmem:[%s2229 + $0x40] sm:$0xff]
        %v2240 = vsel %vm224, %v2230, 0
        %v2243 = vsel %vm224, %v2231, 0
        %v2246 = vsel %vm224, %v2232, 0
        %v2249 = vsel %vm224, %v2233, 0
        %v2252 = vsel %vm224, %v2234, 0
        %v2255 = vsel %vm224, %v2235, 0
        %v2258 = vsel %vm224, %v2236, 0
        %v2261 = vsel %vm224, %v2237, 0
        %v2264 = vsel %vm224, %v2238, 0
        %2266 = vmatprep.subr.mxu0 %v2228
        %2267 = vmatpush1.msra.mxu0 %v2227
        %2268 = vmatprep.subr.mxu0 0.0
        %2269 = vmatpush1.msra.mxu0 0.0
        %2270 = vmatprep.subr.mxu0 0.0
        %2271 = vmatpush1.msra.mxu0 0.0
        %2272 = vmatprep.subr.mxu0 0.0
        %2273 = vmatpush1.msra.mxu0 0.0
        %2274 = vmatprep.subr.mxu0 0.0
        %2275 = vmatpush1.msra.mxu0 0.0
        %2276 = vmatprep.subr.mxu0 0.0
        %2277 = vmatpush1.msra.mxu0 0.0
        %2278 = vmatprep.subr.mxu0 0.0
        %2279 = vmatpush1.msra.mxu0 0.0
        %2280 = vmatprep.subr.mxu0 0.0
        %2281 = vmatpush1.msra.mxu0 0.0
        %2282 = vmatprep.subr.mxu0 0.0
        %2283 = vmatpush1.msra.mxu0 0.0
        %2284 = vmatprep.subr.mxu0 0.0
        %2285 = vmatpush1.msra.mxu0 0.0
        %2286 = vmatprep.subr.mxu0 0.0
        %2287 = vmatpush1.msra.mxu0 0.0
        %2288 = vmatprep.subr.mxu0 0.0
        %2289 = vmatpush1.msra.mxu0 0.0
        %2290 = vmatprep.subr.mxu0 0.0
        %2291 = vmatpush1.msra.mxu0 0.0
        %2292 = vmatprep.subr.mxu0 0.0
        %2293 = vmatpush1.msra.mxu0 0.0
        %2294 = vmatprep.subr.mxu0 0.0
        %2295 = vmatpush1.msra.mxu0 0.0
        %2296 = vmatprep.subr.mxu0 0.0
        %2297 = vmatpush1.msra.mxu0 0.0
        %2298 = vmatprep.subr.mxu0 0.0
        %2299 = vmatpush1.msra.mxu0 0.0
        %2300 = vmatprep.subr.mxu0 0.0
        %2301 = vmatpush1.msra.mxu0 0.0
        %2302 = vmatprep.subr.mxu0 0.0
        %2303 = vmatpush1.msra.mxu0 0.0
        %2304 = vmatprep.subr.mxu0 0.0
        %2305 = vmatpush1.msra.mxu0 0.0
        %2306 = vmatprep.subr.mxu0 0.0
        %2307 = vmatpush1.msra.mxu0 0.0
        %2308 = vmatprep.subr.mxu0 0.0
        %2309 = vmatpush1.msra.mxu0 0.0
        %2310 = vmatprep.subr.mxu0 0.0
        %2311 = vmatpush1.msra.mxu0 0.0
        %2312 = vmatprep.subr.mxu0 0.0
        %2313 = vmatpush1.msra.mxu0 0.0
        %2314 = vmatprep.subr.mxu0 0.0
        %2315 = vmatpush1.msra.mxu0 0.0
        %2316 = vmatprep.subr.mxu0 0.0
        %2317 = vmatpush1.msra.mxu0 0.0
        %2318 = vmatprep.subr.mxu0 0.0
        %2319 = vmatpush1.msra.mxu0 0.0
        %2320 = vmatprep.subr.mxu0 0.0
        %2321 = vmatpush1.msra.mxu0 0.0
        %2322 = vmatprep.subr.mxu0 0.0
        %2323 = vmatpush1.msra.mxu0 0.0
        %2324 = vmatprep.subr.mxu0 0.0
        %2325 = vmatpush1.msra.mxu0 0.0
        %2326 = vmatprep.subr.mxu0 0.0
        %2327 = vmatpush1.msra.mxu0 0.0
        %2328 = vmatprep.subr.mxu0 0.0
        %2329 = vmatpush1.msra.mxu0 0.0
        %2330 = vmatprep.mubr.f32.mxu0 0.0
        %2331 = vmatmul.mubr.f32.gmra.mrb[0].mxu0 %v2240
        %v2332 = vpop.f32.mrb[0].mxu0
        %v2333 = vadd.f32 0.0, %v2332
        %v2334 = vpop.f32.mrb[0].mxu0
        %v2335 = vadd.f32 0.0, %v2334
        %2336 = vmatprep.mubr.f32.mxu0 0.0
        %2337 = vmatmul.mubr.f32.gmra.mrb[0].mxu0 %v2243
        %v2338 = vpop.f32.mrb[0].mxu0
        %v2339 = vadd.f32 0.0, %v2338
        %v2340 = vpop.f32.mrb[0].mxu0
        %v2341 = vadd.f32 0.0, %v2340
        %2342 = vmatprep.mubr.f32.mxu0 0.0
        %2343 = vmatmul.mubr.f32.gmra.mrb[0].mxu0 %v2246
        %v2344 = vpop.f32.mrb[0].mxu0
        %v2345 = vadd.f32 0.0, %v2344
        %v2346 = vpop.f32.mrb[0].mxu0
        %v2347 = vadd.f32 0.0, %v2346
        %2348 = vmatprep.mubr.f32.mxu0 0.0
        %2349 = vmatmul.mubr.f32.gmra.mrb[0].mxu0 %v2249
        %v2350 = vpop.f32.mrb[0].mxu0
        %v2351 = vadd.f32 0.0, %v2350
        %v2352 = vpop.f32.mrb[0].mxu0
        %v2353 = vadd.f32 0.0, %v2352
        %2354 = vmatprep.mubr.f32.mxu0 0.0
        %2355 = vmatmul.mubr.f32.gmra.mrb[0].mxu0 %v2252
        %v2356 = vpop.f32.mrb[0].mxu0
        %v2357 = vadd.f32 0.0, %v2356
        %v2358 = vpop.f32.mrb[0].mxu0
        %v2359 = vadd.f32 0.0, %v2358
        %2360 = vmatprep.mubr.f32.mxu0 0.0
        %2361 = vmatmul.mubr.f32.gmra.mrb[0].mxu0 %v2255
        %v2362 = vpop.f32.mrb[0].mxu0
        %v2363 = vadd.f32 0.0, %v2362
        %v2364 = vpop.f32.mrb[0].mxu0
        %v2365 = vadd.f32 0.0, %v2364
        %2366 = vmatprep.mubr.f32.mxu0 0.0
        %2367 = vmatmul.mubr.f32.gmra.mrb[0].mxu0 %v2258
        %v2368 = vpop.f32.mrb[0].mxu0
        %v2369 = vadd.f32 0.0, %v2368
        %v2370 = vpop.f32.mrb[0].mxu0
        %v2371 = vadd.f32 0.0, %v2370
        %2372 = vmatprep.mubr.f32.mxu0 0.0
        %2373 = vmatmul.mubr.f32.gmra.mrb[0].mxu0 %v2261
        %v2374 = vpop.f32.mrb[0].mxu0
        %v2375 = vadd.f32 0.0, %v2374
        %v2376 = vpop.f32.mrb[0].mxu0
        %v2377 = vadd.f32 0.0, %v2376
        %2378 = vmatprep.mubr.f32.mxu0 0.0
        %2379 = vmatmul.mubr.f32.gmra.mrb[0].mxu0 %v2264
        %v2380 = vpop.f32.mrb[0].mxu0
        %v2381 = vadd.f32 0.0, %v2380
        %v2382 = vpop.f32.mrb[0].mxu0
        %v2383 = vadd.f32 0.0, %v2382
        %2384 = vdwg.mxu0
        %s2385 = scalar_lea.vmem %s2, 32
        %v2386 = vld [vmem:[%s2385] sm:$0xff]
        %v2387 = vld [vmem:[%s2385 + $0x8] sm:$0xff]
        %2388 = vmatprep.subr.mxu0 %v374
        %2389 = vmatpush1.msra.mxu0 %v373
        %2390 = vmatprep.subr.mxu0 %v376
        %2391 = vmatpush1.msra.mxu0 %v375
        %2392 = vmatprep.subr.mxu0 %v378
        %2393 = vmatpush1.msra.mxu0 %v377
        %2394 = vmatprep.subr.mxu0 %v380
        %2395 = vmatpush1.msra.mxu0 %v379
        %2396 = vmatprep.subr.mxu0 %v382
        %2397 = vmatpush1.msra.mxu0 %v381
        %2398 = vmatprep.subr.mxu0 %v384
        %2399 = vmatpush1.msra.mxu0 %v383
        %2400 = vmatprep.subr.mxu0 %v386
        %2401 = vmatpush1.msra.mxu0 %v385
        %2402 = vmatprep.subr.mxu0 %v388
        %2403 = vmatpush1.msra.mxu0 %v387
        %2404 = vmatprep.subr.mxu0 %v390
        %2405 = vmatpush1.msra.mxu0 %v389
        %2406 = vmatprep.subr.mxu0 %v392
        %2407 = vmatpush1.msra.mxu0 %v391
        %2408 = vmatprep.subr.mxu0 %v394
        %2409 = vmatpush1.msra.mxu0 %v393
        %2410 = vmatprep.subr.mxu0 %v396
        %2411 = vmatpush1.msra.mxu0 %v395
        %2412 = vmatprep.subr.mxu0 %v398
        %2413 = vmatpush1.msra.mxu0 %v397
        %2414 = vmatprep.subr.mxu0 %v400
        %2415 = vmatpush1.msra.mxu0 %v399
        %2416 = vmatprep.subr.mxu0 %v402
        %2417 = vmatpush1.msra.mxu0 %v401
        %2418 = vmatprep.subr.mxu0 %v404
        %2419 = vmatpush1.msra.mxu0 %v403
        %2420 = vmatprep.subr.mxu0 %v406
        %2421 = vmatpush1.msra.mxu0 %v405
        %2422 = vmatprep.subr.mxu0 %v408
        %2423 = vmatpush1.msra.mxu0 %v407
        %2424 = vmatprep.subr.mxu0 %v410
        %2425 = vmatpush1.msra.mxu0 %v409
        %2426 = vmatprep.subr.mxu0 %v412
        %2427 = vmatpush1.msra.mxu0 %v411
        %2428 = vmatprep.subr.mxu0 %v414
        %2429 = vmatpush1.msra.mxu0 %v413
        %2430 = vmatprep.subr.mxu0 %v416
        %2431 = vmatpush1.msra.mxu0 %v415
        %2432 = vmatprep.subr.mxu0 %v418
        %2433 = vmatpush1.msra.mxu0 %v417
        %2434 = vmatprep.subr.mxu0 %v420
        %2435 = vmatpush1.msra.mxu0 %v419
        %2436 = vmatprep.subr.mxu0 %v422
        %2437 = vmatpush1.msra.mxu0 %v421
        %2438 = vmatprep.subr.mxu0 %v424
        %2439 = vmatpush1.msra.mxu0 %v423
        %2440 = vmatprep.subr.mxu0 %v426
        %2441 = vmatpush1.msra.mxu0 %v425
        %2442 = vmatprep.subr.mxu0 %v428
        %2443 = vmatpush1.msra.mxu0 %v427
        %2444 = vmatprep.subr.mxu0 %v430
        %2445 = vmatpush1.msra.mxu0 %v429
        %2446 = vmatprep.subr.mxu0 %v432
        %2447 = vmatpush1.msra.mxu0 %v431
        %2448 = vmatprep.subr.mxu0 %v434
        %2449 = vmatpush1.msra.mxu0 %v433
        %2450 = vmatprep.subr.mxu0 %v436
        %2451 = vmatpush1.msra.mxu0 %v435
        %2452 = vmatprep.mubr.f32.mxu0 %v2335
        %2453 = vmatmul.mubr.f32.gmra.mrb[0].mxu0 %v2333
        %v2454 = vpop.f32.mrb[0].mxu0
        %v2455 = vadd.f32 0.0, %v2454
        %v2456 = vpop.f32.mrb[0].mxu0
        %v2457 = vadd.f32 0.0, %v2456
        %2458 = vdwg.mxu0
        %v2459 = vadd.f32 %v2386, %v2455
        %v2460 = vadd.f32 %v2387, %v2457
        %2461 = vmatprep.subr.mxu0 %v512
        %2462 = vmatpush1.msra.mxu0 %v511
        %2463 = vmatprep.subr.mxu0 %v514
        %2464 = vmatpush1.msra.mxu0 %v513
        %2465 = vmatprep.subr.mxu0 %v516
        %2466 = vmatpush1.msra.mxu0 %v515
        %2467 = vmatprep.subr.mxu0 %v518
        %2468 = vmatpush1.msra.mxu0 %v517
        %2469 = vmatprep.subr.mxu0 %v520
        %2470 = vmatpush1.msra.mxu0 %v519
        %2471 = vmatprep.subr.mxu0 %v522
        %2472 = vmatpush1.msra.mxu0 %v521
        %2473 = vmatprep.subr.mxu0 %v524
        %2474 = vmatpush1.msra.mxu0 %v523
        %2475 = vmatprep.subr.mxu0 %v526
        %2476 = vmatpush1.msra.mxu0 %v525
        %2477 = vmatprep.subr.mxu0 %v528
        %2478 = vmatpush1.msra.mxu0 %v527
        %2479 = vmatprep.subr.mxu0 %v530
        %2480 = vmatpush1.msra.mxu0 %v529
        %2481 = vmatprep.subr.mxu0 %v532
        %2482 = vmatpush1.msra.mxu0 %v531
        %2483 = vmatprep.subr.mxu0 %v534
        %2484 = vmatpush1.msra.mxu0 %v533
        %2485 = vmatprep.subr.mxu0 %v536
        %2486 = vmatpush1.msra.mxu0 %v535
        %2487 = vmatprep.subr.mxu0 %v538
        %2488 = vmatpush1.msra.mxu0 %v537
        %2489 = vmatprep.subr.mxu0 %v540
        %2490 = vmatpush1.msra.mxu0 %v539
        %2491 = vmatprep.subr.mxu0 %v542
        %2492 = vmatpush1.msra.mxu0 %v541
        %2493 = vmatprep.subr.mxu0 %v544
        %2494 = vmatpush1.msra.mxu0 %v543
        %2495 = vmatprep.subr.mxu0 %v546
        %2496 = vmatpush1.msra.mxu0 %v545
        %2497 = vmatprep.subr.mxu0 %v548
        %2498 = vmatpush1.msra.mxu0 %v547
        %2499 = vmatprep.subr.mxu0 %v550
        %2500 = vmatpush1.msra.mxu0 %v549
        %2501 = vmatprep.subr.mxu0 %v552
        %2502 = vmatpush1.msra.mxu0 %v551
        %2503 = vmatprep.subr.mxu0 %v554
        %2504 = vmatpush1.msra.mxu0 %v553
        %2505 = vmatprep.subr.mxu0 %v556
        %2506 = vmatpush1.msra.mxu0 %v555
        %2507 = vmatprep.subr.mxu0 %v558
        %2508 = vmatpush1.msra.mxu0 %v557
        %2509 = vmatprep.subr.mxu0 %v560
        %2510 = vmatpush1.msra.mxu0 %v559
        %2511 = vmatprep.subr.mxu0 %v562
        %2512 = vmatpush1.msra.mxu0 %v561
        %2513 = vmatprep.subr.mxu0 %v564
        %2514 = vmatpush1.msra.mxu0 %v563
        %2515 = vmatprep.subr.mxu0 %v566
        %2516 = vmatpush1.msra.mxu0 %v565
        %2517 = vmatprep.subr.mxu0 %v568
        %2518 = vmatpush1.msra.mxu0 %v567
        %2519 = vmatprep.subr.mxu0 %v570
        %2520 = vmatpush1.msra.mxu0 %v569
        %2521 = vmatprep.subr.mxu0 %v572
        %2522 = vmatpush1.msra.mxu0 %v571
        %2523 = vmatprep.subr.mxu0 %v574
        %2524 = vmatpush1.msra.mxu0 %v573
        %2525 = vmatprep.mubr.f32.mxu0 %v2341
        %2526 = vmatmul.mubr.f32.gmra.mrb[0].mxu0 %v2339
        %v2527 = vpop.f32.mrb[0].mxu0
        %v2528 = vadd.f32 0.0, %v2527
        %v2529 = vpop.f32.mrb[0].mxu0
        %v2530 = vadd.f32 0.0, %v2529
        %2531 = vdwg.mxu0
        %v2532 = vadd.f32 %v2459, %v2528
        %v2533 = vadd.f32 %v2460, %v2530
        %2534 = vmatprep.subr.mxu0 %v650
        %2535 = vmatpush1.msra.mxu0 %v649
        %2536 = vmatprep.subr.mxu0 %v652
        %2537 = vmatpush1.msra.mxu0 %v651
        %2538 = vmatprep.subr.mxu0 %v654
        %2539 = vmatpush1.msra.mxu0 %v653
        %2540 = vmatprep.subr.mxu0 %v656
        %2541 = vmatpush1.msra.mxu0 %v655
        %2542 = vmatprep.subr.mxu0 %v658
        %2543 = vmatpush1.msra.mxu0 %v657
        %2544 = vmatprep.subr.mxu0 %v660
        %2545 = vmatpush1.msra.mxu0 %v659
        %2546 = vmatprep.subr.mxu0 %v662
        %2547 = vmatpush1.msra.mxu0 %v661
        %2548 = vmatprep.subr.mxu0 %v664
        %2549 = vmatpush1.msra.mxu0 %v663
        %2550 = vmatprep.subr.mxu0 %v666
        %2551 = vmatpush1.msra.mxu0 %v665
        %2552 = vmatprep.subr.mxu0 %v668
        %2553 = vmatpush1.msra.mxu0 %v667
        %2554 = vmatprep.subr.mxu0 %v670
        %2555 = vmatpush1.msra.mxu0 %v669
        %2556 = vmatprep.subr.mxu0 %v672
        %2557 = vmatpush1.msra.mxu0 %v671
        %2558 = vmatprep.subr.mxu0 %v674
        %2559 = vmatpush1.msra.mxu0 %v673
        %2560 = vmatprep.subr.mxu0 %v676
        %2561 = vmatpush1.msra.mxu0 %v675
        %2562 = vmatprep.subr.mxu0 %v678
        %2563 = vmatpush1.msra.mxu0 %v677
        %2564 = vmatprep.subr.mxu0 %v680
        %2565 = vmatpush1.msra.mxu0 %v679
        %2566 = vmatprep.subr.mxu0 %v682
        %2567 = vmatpush1.msra.mxu0 %v681
        %2568 = vmatprep.subr.mxu0 %v684
        %2569 = vmatpush1.msra.mxu0 %v683
        %2570 = vmatprep.subr.mxu0 %v686
        %2571 = vmatpush1.msra.mxu0 %v685
        %2572 = vmatprep.subr.mxu0 %v688
        %2573 = vmatpush1.msra.mxu0 %v687
        %2574 = vmatprep.subr.mxu0 %v690
        %2575 = vmatpush1.msra.mxu0 %v689
        %2576 = vmatprep.subr.mxu0 %v692
        %2577 = vmatpush1.msra.mxu0 %v691
        %2578 = vmatprep.subr.mxu0 %v694
        %2579 = vmatpush1.msra.mxu0 %v693
        %2580 = vmatprep.subr.mxu0 %v696
        %2581 = vmatpush1.msra.mxu0 %v695
        %2582 = vmatprep.subr.mxu0 %v698
        %2583 = vmatpush1.msra.mxu0 %v697
        %2584 = vmatprep.subr.mxu0 %v700
        %2585 = vmatpush1.msra.mxu0 %v699
        %2586 = vmatprep.subr.mxu0 %v702
        %2587 = vmatpush1.msra.mxu0 %v701
        %2588 = vmatprep.subr.mxu0 %v704
        %2589 = vmatpush1.msra.mxu0 %v703
        %2590 = vmatprep.subr.mxu0 %v706
        %2591 = vmatpush1.msra.mxu0 %v705
        %2592 = vmatprep.subr.mxu0 %v708
        %2593 = vmatpush1.msra.mxu0 %v707
        %2594 = vmatprep.subr.mxu0 %v710
        %2595 = vmatpush1.msra.mxu0 %v709
        %2596 = vmatprep.subr.mxu0 %v712
        %2597 = vmatpush1.msra.mxu0 %v711
        %2598 = vmatprep.mubr.f32.mxu0 %v2347
        %2599 = vmatmul.mubr.f32.gmra.mrb[0].mxu0 %v2345
        %v2600 = vpop.f32.mrb[0].mxu0
        %v2601 = vadd.f32 0.0, %v2600
        %v2602 = vpop.f32.mrb[0].mxu0
        %v2603 = vadd.f32 0.0, %v2602
        %2604 = vdwg.mxu0
        %v2605 = vadd.f32 %v2532, %v2601
        %v2606 = vadd.f32 %v2533, %v2603
        %2607 = vmatprep.subr.mxu0 %v788
        %2608 = vmatpush1.msra.mxu0 %v787
        %2609 = vmatprep.subr.mxu0 %v790
        %2610 = vmatpush1.msra.mxu0 %v789
        %2611 = vmatprep.subr.mxu0 %v792
        %2612 = vmatpush1.msra.mxu0 %v791
        %2613 = vmatprep.subr.mxu0 %v794
        %2614 = vmatpush1.msra.mxu0 %v793
        %2615 = vmatprep.subr.mxu0 %v796
        %2616 = vmatpush1.msra.mxu0 %v795
        %2617 = vmatprep.subr.mxu0 %v798
        %2618 = vmatpush1.msra.mxu0 %v797
        %2619 = vmatprep.subr.mxu0 %v800
        %2620 = vmatpush1.msra.mxu0 %v799
        %2621 = vmatprep.subr.mxu0 %v802
        %2622 = vmatpush1.msra.mxu0 %v801
        %2623 = vmatprep.subr.mxu0 %v804
        %2624 = vmatpush1.msra.mxu0 %v803
        %2625 = vmatprep.subr.mxu0 %v806
        %2626 = vmatpush1.msra.mxu0 %v805
        %2627 = vmatprep.subr.mxu0 %v808
        %2628 = vmatpush1.msra.mxu0 %v807
        %2629 = vmatprep.subr.mxu0 %v810
        %2630 = vmatpush1.msra.mxu0 %v809
        %2631 = vmatprep.subr.mxu0 %v812
        %2632 = vmatpush1.msra.mxu0 %v811
        %2633 = vmatprep.subr.mxu0 %v814
        %2634 = vmatpush1.msra.mxu0 %v813
        %2635 = vmatprep.subr.mxu0 %v816
        %2636 = vmatpush1.msra.mxu0 %v815
        %2637 = vmatprep.subr.mxu0 %v818
        %2638 = vmatpush1.msra.mxu0 %v817
        %2639 = vmatprep.subr.mxu0 %v820
        %2640 = vmatpush1.msra.mxu0 %v819
        %2641 = vmatprep.subr.mxu0 %v822
        %2642 = vmatpush1.msra.mxu0 %v821
        %2643 = vmatprep.subr.mxu0 %v824
        %2644 = vmatpush1.msra.mxu0 %v823
        %2645 = vmatprep.subr.mxu0 %v826
        %2646 = vmatpush1.msra.mxu0 %v825
        %2647 = vmatprep.subr.mxu0 %v828
        %2648 = vmatpush1.msra.mxu0 %v827
        %2649 = vmatprep.subr.mxu0 %v830
        %2650 = vmatpush1.msra.mxu0 %v829
        %2651 = vmatprep.subr.mxu0 %v832
        %2652 = vmatpush1.msra.mxu0 %v831
        %2653 = vmatprep.subr.mxu0 %v834
        %2654 = vmatpush1.msra.mxu0 %v833
        %2655 = vmatprep.subr.mxu0 %v836
        %2656 = vmatpush1.msra.mxu0 %v835
        %2657 = vmatprep.subr.mxu0 %v838
        %2658 = vmatpush1.msra.mxu0 %v837
        %2659 = vmatprep.subr.mxu0 %v840
        %2660 = vmatpush1.msra.mxu0 %v839
        %2661 = vmatprep.subr.mxu0 %v842
        %2662 = vmatpush1.msra.mxu0 %v841
        %2663 = vmatprep.subr.mxu0 %v844
        %2664 = vmatpush1.msra.mxu0 %v843
        %2665 = vmatprep.subr.mxu0 %v846
        %2666 = vmatpush1.msra.mxu0 %v845
        %2667 = vmatprep.subr.mxu0 %v848
        %2668 = vmatpush1.msra.mxu0 %v847
        %2669 = vmatprep.subr.mxu0 %v850
        %2670 = vmatpush1.msra.mxu0 %v849
        %2671 = vmatprep.mubr.f32.mxu0 %v2353
        %2672 = vmatmul.mubr.f32.gmra.mrb[0].mxu0 %v2351
        %v2673 = vpop.f32.mrb[0].mxu0
        %v2674 = vadd.f32 0.0, %v2673
        %v2675 = vpop.f32.mrb[0].mxu0
        %v2676 = vadd.f32 0.0, %v2675
        %2677 = vdwg.mxu0
        %v2678 = vadd.f32 %v2605, %v2674
        %v2679 = vadd.f32 %v2606, %v2676
        %v2680 = vadd.f32 %v2678, %v2357
        %v2681 = vadd.f32 %v2679, %v2359
        %2682 = vmatprep.subr.mxu0 %v928
        %2683 = vmatpush1.msra.mxu0 %v927
        %2684 = vmatprep.subr.mxu0 %v930
        %2685 = vmatpush1.msra.mxu0 %v929
        %2686 = vmatprep.subr.mxu0 %v932
        %2687 = vmatpush1.msra.mxu0 %v931
        %2688 = vmatprep.subr.mxu0 %v934
        %2689 = vmatpush1.msra.mxu0 %v933
        %2690 = vmatprep.subr.mxu0 %v936
        %2691 = vmatpush1.msra.mxu0 %v935
        %2692 = vmatprep.subr.mxu0 %v938
        %2693 = vmatpush1.msra.mxu0 %v937
        %2694 = vmatprep.subr.mxu0 %v940
        %2695 = vmatpush1.msra.mxu0 %v939
        %2696 = vmatprep.subr.mxu0 %v942
        %2697 = vmatpush1.msra.mxu0 %v941
        %2698 = vmatprep.subr.mxu0 %v944
        %2699 = vmatpush1.msra.mxu0 %v943
        %2700 = vmatprep.subr.mxu0 %v946
        %2701 = vmatpush1.msra.mxu0 %v945
        %2702 = vmatprep.subr.mxu0 %v948
        %2703 = vmatpush1.msra.mxu0 %v947
        %2704 = vmatprep.subr.mxu0 %v950
        %2705 = vmatpush1.msra.mxu0 %v949
        %2706 = vmatprep.subr.mxu0 %v952
        %2707 = vmatpush1.msra.mxu0 %v951
        %2708 = vmatprep.subr.mxu0 %v954
        %2709 = vmatpush1.msra.mxu0 %v953
        %2710 = vmatprep.subr.mxu0 %v956
        %2711 = vmatpush1.msra.mxu0 %v955
        %2712 = vmatprep.subr.mxu0 %v958
        %2713 = vmatpush1.msra.mxu0 %v957
        %2714 = vmatprep.subr.mxu0 %v960
        %2715 = vmatpush1.msra.mxu0 %v959
        %2716 = vmatprep.subr.mxu0 %v962
        %2717 = vmatpush1.msra.mxu0 %v961
        %2718 = vmatprep.subr.mxu0 %v964
        %2719 = vmatpush1.msra.mxu0 %v963
        %2720 = vmatprep.subr.mxu0 %v966
        %2721 = vmatpush1.msra.mxu0 %v965
        %2722 = vmatprep.subr.mxu0 %v968
        %2723 = vmatpush1.msra.mxu0 %v967
        %2724 = vmatprep.subr.mxu0 %v970
        %2725 = vmatpush1.msra.mxu0 %v969
        %2726 = vmatprep.subr.mxu0 %v972
        %2727 = vmatpush1.msra.mxu0 %v971
        %2728 = vmatprep.subr.mxu0 %v974
        %2729 = vmatpush1.msra.mxu0 %v973
        %2730 = vmatprep.subr.mxu0 %v976
        %2731 = vmatpush1.msra.mxu0 %v975
        %2732 = vmatprep.subr.mxu0 %v978
        %2733 = vmatpush1.msra.mxu0 %v977
        %2734 = vmatprep.subr.mxu0 %v980
        %2735 = vmatpush1.msra.mxu0 %v979
        %2736 = vmatprep.subr.mxu0 %v982
        %2737 = vmatpush1.msra.mxu0 %v981
        %2738 = vmatprep.subr.mxu0 %v984
        %2739 = vmatpush1.msra.mxu0 %v983
        %2740 = vmatprep.subr.mxu0 %v986
        %2741 = vmatpush1.msra.mxu0 %v985
        %2742 = vmatprep.subr.mxu0 %v988
        %2743 = vmatpush1.msra.mxu0 %v987
        %2744 = vmatprep.subr.mxu0 %v990
        %2745 = vmatpush1.msra.mxu0 %v989
        %2746 = vmatprep.mubr.f32.mxu0 %v2365
        %2747 = vmatmul.mubr.f32.gmra.mrb[0].mxu0 %v2363
        %v2748 = vpop.f32.mrb[0].mxu0
        %v2749 = vadd.f32 0.0, %v2748
        %v2750 = vpop.f32.mrb[0].mxu0
        %v2751 = vadd.f32 0.0, %v2750
        %2752 = vdwg.mxu0
        %v2753 = vadd.f32 %v2680, %v2749
        %v2754 = vadd.f32 %v2681, %v2751
        %2755 = vmatprep.subr.mxu0 %v1066
        %2756 = vmatpush1.msra.mxu0 %v1065
        %2757 = vmatprep.subr.mxu0 %v1068
        %2758 = vmatpush1.msra.mxu0 %v1067
        %2759 = vmatprep.subr.mxu0 %v1070
        %2760 = vmatpush1.msra.mxu0 %v1069
        %2761 = vmatprep.subr.mxu0 %v1072
        %2762 = vmatpush1.msra.mxu0 %v1071
        %2763 = vmatprep.subr.mxu0 %v1074
        %2764 = vmatpush1.msra.mxu0 %v1073
        %2765 = vmatprep.subr.mxu0 %v1076
        %2766 = vmatpush1.msra.mxu0 %v1075
        %2767 = vmatprep.subr.mxu0 %v1078
        %2768 = vmatpush1.msra.mxu0 %v1077
        %2769 = vmatprep.subr.mxu0 %v1080
        %2770 = vmatpush1.msra.mxu0 %v1079
        %2771 = vmatprep.subr.mxu0 %v1082
        %2772 = vmatpush1.msra.mxu0 %v1081
        %2773 = vmatprep.subr.mxu0 %v1084
        %2774 = vmatpush1.msra.mxu0 %v1083
        %2775 = vmatprep.subr.mxu0 %v1086
        %2776 = vmatpush1.msra.mxu0 %v1085
        %2777 = vmatprep.subr.mxu0 %v1088
        %2778 = vmatpush1.msra.mxu0 %v1087
        %2779 = vmatprep.subr.mxu0 %v1090
        %2780 = vmatpush1.msra.mxu0 %v1089
        %2781 = vmatprep.subr.mxu0 %v1092
        %2782 = vmatpush1.msra.mxu0 %v1091
        %2783 = vmatprep.subr.mxu0 %v1094
        %2784 = vmatpush1.msra.mxu0 %v1093
        %2785 = vmatprep.subr.mxu0 %v1096
        %2786 = vmatpush1.msra.mxu0 %v1095
        %2787 = vmatprep.subr.mxu0 %v1098
        %2788 = vmatpush1.msra.mxu0 %v1097
        %2789 = vmatprep.subr.mxu0 %v1100
        %2790 = vmatpush1.msra.mxu0 %v1099
        %2791 = vmatprep.subr.mxu0 %v1102
        %2792 = vmatpush1.msra.mxu0 %v1101
        %2793 = vmatprep.subr.mxu0 %v1104
        %2794 = vmatpush1.msra.mxu0 %v1103
        %2795 = vmatprep.subr.mxu0 %v1106
        %2796 = vmatpush1.msra.mxu0 %v1105
        %2797 = vmatprep.subr.mxu0 %v1108
        %2798 = vmatpush1.msra.mxu0 %v1107
        %2799 = vmatprep.subr.mxu0 %v1110
        %2800 = vmatpush1.msra.mxu0 %v1109
        %2801 = vmatprep.subr.mxu0 %v1112
        %2802 = vmatpush1.msra.mxu0 %v1111
        %2803 = vmatprep.subr.mxu0 %v1114
        %2804 = vmatpush1.msra.mxu0 %v1113
        %2805 = vmatprep.subr.mxu0 %v1116
        %2806 = vmatpush1.msra.mxu0 %v1115
        %2807 = vmatprep.subr.mxu0 %v1118
        %2808 = vmatpush1.msra.mxu0 %v1117
        %2809 = vmatprep.subr.mxu0 %v1120
        %2810 = vmatpush1.msra.mxu0 %v1119
        %2811 = vmatprep.subr.mxu0 %v1122
        %2812 = vmatpush1.msra.mxu0 %v1121
        %2813 = vmatprep.subr.mxu0 %v1124
        %2814 = vmatpush1.msra.mxu0 %v1123
        %2815 = vmatprep.subr.mxu0 %v1126
        %2816 = vmatpush1.msra.mxu0 %v1125
        %2817 = vmatprep.subr.mxu0 %v1128
        %2818 = vmatpush1.msra.mxu0 %v1127
        %2819 = vmatprep.mubr.f32.mxu0 %v2371
        %2820 = vmatmul.mubr.f32.gmra.mrb[0].mxu0 %v2369
        %v2821 = vpop.f32.mrb[0].mxu0
        %v2822 = vadd.f32 0.0, %v2821
        %v2823 = vpop.f32.mrb[0].mxu0
        %v2824 = vadd.f32 0.0, %v2823
        %2825 = vdwg.mxu0
        %v2826 = vadd.f32 %v2753, %v2822
        %v2827 = vadd.f32 %v2754, %v2824
        %2828 = vmatprep.subr.mxu0 %v1204
        %2829 = vmatpush1.msra.mxu0 %v1203
        %2830 = vmatprep.subr.mxu0 %v1206
        %2831 = vmatpush1.msra.mxu0 %v1205
        %2832 = vmatprep.subr.mxu0 %v1208
        %2833 = vmatpush1.msra.mxu0 %v1207
        %2834 = vmatprep.subr.mxu0 %v1210
        %2835 = vmatpush1.msra.mxu0 %v1209
        %2836 = vmatprep.subr.mxu0 %v1212
        %2837 = vmatpush1.msra.mxu0 %v1211
        %2838 = vmatprep.subr.mxu0 %v1214
        %2839 = vmatpush1.msra.mxu0 %v1213
        %2840 = vmatprep.subr.mxu0 %v1216
        %2841 = vmatpush1.msra.mxu0 %v1215
        %2842 = vmatprep.subr.mxu0 %v1218
        %2843 = vmatpush1.msra.mxu0 %v1217
        %2844 = vmatprep.subr.mxu0 %v1220
        %2845 = vmatpush1.msra.mxu0 %v1219
        %2846 = vmatprep.subr.mxu0 %v1222
        %2847 = vmatpush1.msra.mxu0 %v1221
        %2848 = vmatprep.subr.mxu0 %v1224
        %2849 = vmatpush1.msra.mxu0 %v1223
        %2850 = vmatprep.subr.mxu0 %v1226
        %2851 = vmatpush1.msra.mxu0 %v1225
        %2852 = vmatprep.subr.mxu0 %v1228
        %2853 = vmatpush1.msra.mxu0 %v1227
        %2854 = vmatprep.subr.mxu0 %v1230
        %2855 = vmatpush1.msra.mxu0 %v1229
        %2856 = vmatprep.subr.mxu0 %v1232
        %2857 = vmatpush1.msra.mxu0 %v1231
        %2858 = vmatprep.subr.mxu0 %v1234
        %2859 = vmatpush1.msra.mxu0 %v1233
        %2860 = vmatprep.subr.mxu0 %v1236
        %2861 = vmatpush1.msra.mxu0 %v1235
        %2862 = vmatprep.subr.mxu0 %v1238
        %2863 = vmatpush1.msra.mxu0 %v1237
        %2864 = vmatprep.subr.mxu0 %v1240
        %2865 = vmatpush1.msra.mxu0 %v1239
        %2866 = vmatprep.subr.mxu0 %v1242
        %2867 = vmatpush1.msra.mxu0 %v1241
        %2868 = vmatprep.subr.mxu0 %v1244
        %2869 = vmatpush1.msra.mxu0 %v1243
        %2870 = vmatprep.subr.mxu0 %v1246
        %2871 = vmatpush1.msra.mxu0 %v1245
        %2872 = vmatprep.subr.mxu0 %v1248
        %2873 = vmatpush1.msra.mxu0 %v1247
        %2874 = vmatprep.subr.mxu0 %v1250
        %2875 = vmatpush1.msra.mxu0 %v1249
        %2876 = vmatprep.subr.mxu0 %v1252
        %2877 = vmatpush1.msra.mxu0 %v1251
        %2878 = vmatprep.subr.mxu0 %v1254
        %2879 = vmatpush1.msra.mxu0 %v1253
        %2880 = vmatprep.subr.mxu0 %v1256
        %2881 = vmatpush1.msra.mxu0 %v1255
        %2882 = vmatprep.subr.mxu0 %v1258
        %2883 = vmatpush1.msra.mxu0 %v1257
        %2884 = vmatprep.subr.mxu0 %v1260
        %2885 = vmatpush1.msra.mxu0 %v1259
        %2886 = vmatprep.subr.mxu0 %v1262
        %2887 = vmatpush1.msra.mxu0 %v1261
        %2888 = vmatprep.subr.mxu0 %v1264
        %2889 = vmatpush1.msra.mxu0 %v1263
        %2890 = vmatprep.subr.mxu0 %v1266
        %2891 = vmatpush1.msra.mxu0 %v1265
        %2892 = vmatprep.mubr.f32.mxu0 %v2377
        %2893 = vmatmul.mubr.f32.gmra.mrb[0].mxu0 %v2375
        %v2894 = vpop.f32.mrb[0].mxu0
        %v2895 = vadd.f32 0.0, %v2894
        %v2896 = vpop.f32.mrb[0].mxu0
        %v2897 = vadd.f32 0.0, %v2896
        %2898 = vdwg.mxu0
        %v2899 = vadd.f32 %v2826, %v2895
        %v2900 = vadd.f32 %v2827, %v2897
        %2901 = vmatprep.subr.mxu0 %v1342
        %2902 = vmatpush1.msra.mxu0 %v1341
        %2903 = vmatprep.subr.mxu0 %v1344
        %2904 = vmatpush1.msra.mxu0 %v1343
        %2905 = vmatprep.subr.mxu0 %v1346
        %2906 = vmatpush1.msra.mxu0 %v1345
        %2907 = vmatprep.subr.mxu0 %v1348
        %2908 = vmatpush1.msra.mxu0 %v1347
        %2909 = vmatprep.subr.mxu0 %v1350
        %2910 = vmatpush1.msra.mxu0 %v1349
        %2911 = vmatprep.subr.mxu0 %v1352
        %2912 = vmatpush1.msra.mxu0 %v1351
        %2913 = vmatprep.subr.mxu0 %v1354
        %2914 = vmatpush1.msra.mxu0 %v1353
        %2915 = vmatprep.subr.mxu0 %v1356
        %2916 = vmatpush1.msra.mxu0 %v1355
        %2917 = vmatprep.subr.mxu0 %v1358
        %2918 = vmatpush1.msra.mxu0 %v1357
        %2919 = vmatprep.subr.mxu0 %v1360
        %2920 = vmatpush1.msra.mxu0 %v1359
        %2921 = vmatprep.subr.mxu0 %v1362
        %2922 = vmatpush1.msra.mxu0 %v1361
        %2923 = vmatprep.subr.mxu0 %v1364
        %2924 = vmatpush1.msra.mxu0 %v1363
        %2925 = vmatprep.subr.mxu0 %v1366
        %2926 = vmatpush1.msra.mxu0 %v1365
        %2927 = vmatprep.subr.mxu0 %v1368
        %2928 = vmatpush1.msra.mxu0 %v1367
        %2929 = vmatprep.subr.mxu0 %v1370
        %2930 = vmatpush1.msra.mxu0 %v1369
        %2931 = vmatprep.subr.mxu0 %v1372
        %2932 = vmatpush1.msra.mxu0 %v1371
        %2933 = vmatprep.subr.mxu0 %v1374
        %2934 = vmatpush1.msra.mxu0 %v1373
        %2935 = vmatprep.subr.mxu0 %v1376
        %2936 = vmatpush1.msra.mxu0 %v1375
        %2937 = vmatprep.subr.mxu0 %v1378
        %2938 = vmatpush1.msra.mxu0 %v1377
        %2939 = vmatprep.subr.mxu0 %v1380
        %2940 = vmatpush1.msra.mxu0 %v1379
        %2941 = vmatprep.subr.mxu0 %v1382
        %2942 = vmatpush1.msra.mxu0 %v1381
        %2943 = vmatprep.subr.mxu0 %v1384
        %2944 = vmatpush1.msra.mxu0 %v1383
        %2945 = vmatprep.subr.mxu0 %v1386
        %2946 = vmatpush1.msra.mxu0 %v1385
        %2947 = vmatprep.subr.mxu0 %v1388
        %2948 = vmatpush1.msra.mxu0 %v1387
        %2949 = vmatprep.subr.mxu0 %v1390
        %2950 = vmatpush1.msra.mxu0 %v1389
        %2951 = vmatprep.subr.mxu0 %v1392
        %2952 = vmatpush1.msra.mxu0 %v1391
        %2953 = vmatprep.subr.mxu0 %v1394
        %2954 = vmatpush1.msra.mxu0 %v1393
        %2955 = vmatprep.subr.mxu0 %v1396
        %2956 = vmatpush1.msra.mxu0 %v1395
        %2957 = vmatprep.subr.mxu0 %v1398
        %2958 = vmatpush1.msra.mxu0 %v1397
        %2959 = vmatprep.subr.mxu0 %v1400
        %2960 = vmatpush1.msra.mxu0 %v1399
        %2961 = vmatprep.subr.mxu0 %v1402
        %2962 = vmatpush1.msra.mxu0 %v1401
        %2963 = vmatprep.subr.mxu0 %v1404
        %2964 = vmatpush1.msra.mxu0 %v1403
        %2965 = vmatprep.mubr.f32.mxu0 %v2383
        %2966 = vmatmul.mubr.f32.gmra.mrb[0].mxu0 %v2381
        %v2967 = vpop.f32.mrb[0].mxu0
        %v2968 = vadd.f32 0.0, %v2967
        %v2969 = vpop.f32.mrb[0].mxu0
        %v2970 = vadd.f32 0.0, %v2969
        %2971 = vdwg.mxu0
        %v2972 = vadd.f32 %v2899, %v2968
        %v2973 = vadd.f32 %v2900, %v2970
        %vm2974 = vcmp.ge.f32.partialorder %v2972, 0.0
        %vm2975 = vcmp.ge.f32.partialorder %v2973, 0.0
        %v2976 = vmul.f32 %v2972, 0.1
        %v2977 = vmul.f32 %v2973, 0.1
        %v2978 = vsel %vm2974, %v2972, %v2976
        %v2979 = vsel %vm2975, %v2973, %v2977
        %s2980 = scalar_lea.vmem %s1, 216
        %v2981 = vld [vmem:[%s2980] sm:$0xff]
        %v2982 = vld [vmem:[%s2980 + $0x8] sm:$0xff]
        %v2983 = vld [vmem:[%s2980 + $0x10] sm:$0xff]
        %v2984 = vld [vmem:[%s2980 + $0x18] sm:$0xff]
        %v2985 = vld [vmem:[%s2980 + $0x20] sm:$0xff]
        %v2986 = vld [vmem:[%s2980 + $0x28] sm:$0xff]
        %v2987 = vld [vmem:[%s2980 + $0x30] sm:$0xff]
        %v2988 = vld [vmem:[%s2980 + $0x38] sm:$0xff]
        %v2989 = vld [vmem:[%s2980 + $0x40] sm:$0xff]
        %v2991 = vsel %vm224, %v2981, 0
        %v2994 = vsel %vm224, %v2982, 0
        %v2997 = vsel %vm224, %v2983, 0
        %v3000 = vsel %vm224, %v2984, 0
        %v3003 = vsel %vm224, %v2985, 0
        %v3006 = vsel %vm224, %v2986, 0
        %v3009 = vsel %vm224, %v2987, 0
        %v3012 = vsel %vm224, %v2988, 0
        %v3015 = vsel %vm224, %v2989, 0
        %3017 = vmatprep.subr.mxu0 %v2979
        %3018 = vmatpush1.msra.mxu0 %v2978
        %3019 = vmatprep.subr.mxu0 0.0
        %3020 = vmatpush1.msra.mxu0 0.0
        %3021 = vmatprep.subr.mxu0 0.0
        %3022 = vmatpush1.msra.mxu0 0.0
        %3023 = vmatprep.subr.mxu0 0.0
        %3024 = vmatpush1.msra.mxu0 0.0
        %3025 = vmatprep.subr.mxu0 0.0
        %3026 = vmatpush1.msra.mxu0 0.0
        %3027 = vmatprep.subr.mxu0 0.0
        %3028 = vmatpush1.msra.mxu0 0.0
        %3029 = vmatprep.subr.mxu0 0.0
        %3030 = vmatpush1.msra.mxu0 0.0
        %3031 = vmatprep.subr.mxu0 0.0
        %3032 = vmatpush1.msra.mxu0 0.0
        %3033 = vmatprep.subr.mxu0 0.0
        %3034 = vmatpush1.msra.mxu0 0.0
        %3035 = vmatprep.subr.mxu0 0.0
        %3036 = vmatpush1.msra.mxu0 0.0
        %3037 = vmatprep.subr.mxu0 0.0
        %3038 = vmatpush1.msra.mxu0 0.0
        %3039 = vmatprep.subr.mxu0 0.0
        %3040 = vmatpush1.msra.mxu0 0.0
        %3041 = vmatprep.subr.mxu0 0.0
        %3042 = vmatpush1.msra.mxu0 0.0
        %3043 = vmatprep.subr.mxu0 0.0
        %3044 = vmatpush1.msra.mxu0 0.0
        %3045 = vmatprep.subr.mxu0 0.0
        %3046 = vmatpush1.msra.mxu0 0.0
        %3047 = vmatprep.subr.mxu0 0.0
        %3048 = vmatpush1.msra.mxu0 0.0
        %3049 = vmatprep.subr.mxu0 0.0
        %3050 = vmatpush1.msra.mxu0 0.0
        %3051 = vmatprep.subr.mxu0 0.0
        %3052 = vmatpush1.msra.mxu0 0.0
        %3053 = vmatprep.subr.mxu0 0.0
        %3054 = vmatpush1.msra.mxu0 0.0
        %3055 = vmatprep.subr.mxu0 0.0
        %3056 = vmatpush1.msra.mxu0 0.0
        %3057 = vmatprep.subr.mxu0 0.0
        %3058 = vmatpush1.msra.mxu0 0.0
        %3059 = vmatprep.subr.mxu0 0.0
        %3060 = vmatpush1.msra.mxu0 0.0
        %3061 = vmatprep.subr.mxu0 0.0
        %3062 = vmatpush1.msra.mxu0 0.0
        %3063 = vmatprep.subr.mxu0 0.0
        %3064 = vmatpush1.msra.mxu0 0.0
        %3065 = vmatprep.subr.mxu0 0.0
        %3066 = vmatpush1.msra.mxu0 0.0
        %3067 = vmatprep.subr.mxu0 0.0
        %3068 = vmatpush1.msra.mxu0 0.0
        %3069 = vmatprep.subr.mxu0 0.0
        %3070 = vmatpush1.msra.mxu0 0.0
        %3071 = vmatprep.subr.mxu0 0.0
        %3072 = vmatpush1.msra.mxu0 0.0
        %3073 = vmatprep.subr.mxu0 0.0
        %3074 = vmatpush1.msra.mxu0 0.0
        %3075 = vmatprep.subr.mxu0 0.0
        %3076 = vmatpush1.msra.mxu0 0.0
        %3077 = vmatprep.subr.mxu0 0.0
        %3078 = vmatpush1.msra.mxu0 0.0
        %3079 = vmatprep.subr.mxu0 0.0
        %3080 = vmatpush1.msra.mxu0 0.0
        %3081 = vmatprep.mubr.f32.mxu0 0.0
        %3082 = vmatmul.mubr.f32.gmra.mrb[0].mxu0 %v2991
        %v3083 = vpop.f32.mrb[0].mxu0
        %v3084 = vadd.f32 0.0, %v3083
        %v3085 = vpop.f32.mrb[0].mxu0
        %v3086 = vadd.f32 0.0, %v3085
        %3087 = vmatprep.mubr.f32.mxu0 0.0
        %3088 = vmatmul.mubr.f32.gmra.mrb[0].mxu0 %v2994
        %v3089 = vpop.f32.mrb[0].mxu0
        %v3090 = vadd.f32 0.0, %v3089
        %v3091 = vpop.f32.mrb[0].mxu0
        %v3092 = vadd.f32 0.0, %v3091
        %3093 = vmatprep.mubr.f32.mxu0 0.0
        %3094 = vmatmul.mubr.f32.gmra.mrb[0].mxu0 %v2997
        %v3095 = vpop.f32.mrb[0].mxu0
        %v3096 = vadd.f32 0.0, %v3095
        %v3097 = vpop.f32.mrb[0].mxu0
        %v3098 = vadd.f32 0.0, %v3097
        %3099 = vmatprep.mubr.f32.mxu0 0.0
        %3100 = vmatmul.mubr.f32.gmra.mrb[0].mxu0 %v3000
        %v3101 = vpop.f32.mrb[0].mxu0
        %v3102 = vadd.f32 0.0, %v3101
        %v3103 = vpop.f32.mrb[0].mxu0
        %v3104 = vadd.f32 0.0, %v3103
        %3105 = vmatprep.mubr.f32.mxu0 0.0
        %3106 = vmatmul.mubr.f32.gmra.mrb[0].mxu0 %v3003
        %v3107 = vpop.f32.mrb[0].mxu0
        %v3108 = vadd.f32 0.0, %v3107
        %v3109 = vpop.f32.mrb[0].mxu0
        %v3110 = vadd.f32 0.0, %v3109
        %3111 = vmatprep.mubr.f32.mxu0 0.0
        %3112 = vmatmul.mubr.f32.gmra.mrb[0].mxu0 %v3006
        %v3113 = vpop.f32.mrb[0].mxu0
        %v3114 = vadd.f32 0.0, %v3113
        %v3115 = vpop.f32.mrb[0].mxu0
        %v3116 = vadd.f32 0.0, %v3115
        %3117 = vmatprep.mubr.f32.mxu0 0.0
        %3118 = vmatmul.mubr.f32.gmra.mrb[0].mxu0 %v3009
        %v3119 = vpop.f32.mrb[0].mxu0
        %v3120 = vadd.f32 0.0, %v3119
        %v3121 = vpop.f32.mrb[0].mxu0
        %v3122 = vadd.f32 0.0, %v3121
        %3123 = vmatprep.mubr.f32.mxu0 0.0
        %3124 = vmatmul.mubr.f32.gmra.mrb[0].mxu0 %v3012
        %v3125 = vpop.f32.mrb[0].mxu0
        %v3126 = vadd.f32 0.0, %v3125
        %v3127 = vpop.f32.mrb[0].mxu0
        %v3128 = vadd.f32 0.0, %v3127
        %3129 = vmatprep.mubr.f32.mxu0 0.0
        %3130 = vmatmul.mubr.f32.gmra.mrb[0].mxu0 %v3015
        %v3131 = vpop.f32.mrb[0].mxu0
        %v3132 = vadd.f32 0.0, %v3131
        %v3133 = vpop.f32.mrb[0].mxu0
        %v3134 = vadd.f32 0.0, %v3133
        %3135 = vdwg.mxu0
        %s3136 = scalar_lea.vmem %s2, 48
        %v3137 = vld [vmem:[%s3136] sm:$0xff]
        %v3138 = vld [vmem:[%s3136 + $0x8] sm:$0xff]
        %3139 = vmatprep.subr.mxu0 %v374
        %3140 = vmatpush1.msra.mxu0 %v373
        %3141 = vmatprep.subr.mxu0 %v376
        %3142 = vmatpush1.msra.mxu0 %v375
        %3143 = vmatprep.subr.mxu0 %v378
        %3144 = vmatpush1.msra.mxu0 %v377
        %3145 = vmatprep.subr.mxu0 %v380
        %3146 = vmatpush1.msra.mxu0 %v379
        %3147 = vmatprep.subr.mxu0 %v382
        %3148 = vmatpush1.msra.mxu0 %v381
        %3149 = vmatprep.subr.mxu0 %v384
        %3150 = vmatpush1.msra.mxu0 %v383
        %3151 = vmatprep.subr.mxu0 %v386
        %3152 = vmatpush1.msra.mxu0 %v385
        %3153 = vmatprep.subr.mxu0 %v388
        %3154 = vmatpush1.msra.mxu0 %v387
        %3155 = vmatprep.subr.mxu0 %v390
        %3156 = vmatpush1.msra.mxu0 %v389
        %3157 = vmatprep.subr.mxu0 %v392
        %3158 = vmatpush1.msra.mxu0 %v391
        %3159 = vmatprep.subr.mxu0 %v394
        %3160 = vmatpush1.msra.mxu0 %v393
        %3161 = vmatprep.subr.mxu0 %v396
        %3162 = vmatpush1.msra.mxu0 %v395
        %3163 = vmatprep.subr.mxu0 %v398
        %3164 = vmatpush1.msra.mxu0 %v397
        %3165 = vmatprep.subr.mxu0 %v400
        %3166 = vmatpush1.msra.mxu0 %v399
        %3167 = vmatprep.subr.mxu0 %v402
        %3168 = vmatpush1.msra.mxu0 %v401
        %3169 = vmatprep.subr.mxu0 %v404
        %3170 = vmatpush1.msra.mxu0 %v403
        %3171 = vmatprep.subr.mxu0 %v406
        %3172 = vmatpush1.msra.mxu0 %v405
        %3173 = vmatprep.subr.mxu0 %v408
        %3174 = vmatpush1.msra.mxu0 %v407
        %3175 = vmatprep.subr.mxu0 %v410
        %3176 = vmatpush1.msra.mxu0 %v409
        %3177 = vmatprep.subr.mxu0 %v412
        %3178 = vmatpush1.msra.mxu0 %v411
        %3179 = vmatprep.subr.mxu0 %v414
        %3180 = vmatpush1.msra.mxu0 %v413
        %3181 = vmatprep.subr.mxu0 %v416
        %3182 = vmatpush1.msra.mxu0 %v415
        %3183 = vmatprep.subr.mxu0 %v418
        %3184 = vmatpush1.msra.mxu0 %v417
        %3185 = vmatprep.subr.mxu0 %v420
        %3186 = vmatpush1.msra.mxu0 %v419
        %3187 = vmatprep.subr.mxu0 %v422
        %3188 = vmatpush1.msra.mxu0 %v421
        %3189 = vmatprep.subr.mxu0 %v424
        %3190 = vmatpush1.msra.mxu0 %v423
        %3191 = vmatprep.subr.mxu0 %v426
        %3192 = vmatpush1.msra.mxu0 %v425
        %3193 = vmatprep.subr.mxu0 %v428
        %3194 = vmatpush1.msra.mxu0 %v427
        %3195 = vmatprep.subr.mxu0 %v430
        %3196 = vmatpush1.msra.mxu0 %v429
        %3197 = vmatprep.subr.mxu0 %v432
        %3198 = vmatpush1.msra.mxu0 %v431
        %3199 = vmatprep.subr.mxu0 %v434
        %3200 = vmatpush1.msra.mxu0 %v433
        %3201 = vmatprep.subr.mxu0 %v436
        %3202 = vmatpush1.msra.mxu0 %v435
        %3203 = vmatprep.mubr.f32.mxu0 %v3086
        %3204 = vmatmul.mubr.f32.gmra.mrb[0].mxu0 %v3084
        %v3205 = vpop.f32.mrb[0].mxu0
        %v3206 = vadd.f32 0.0, %v3205
        %v3207 = vpop.f32.mrb[0].mxu0
        %v3208 = vadd.f32 0.0, %v3207
        %3209 = vdwg.mxu0
        %v3210 = vadd.f32 %v3137, %v3206
        %v3211 = vadd.f32 %v3138, %v3208
        %3212 = vmatprep.subr.mxu0 %v512
        %3213 = vmatpush1.msra.mxu0 %v511
        %3214 = vmatprep.subr.mxu0 %v514
        %3215 = vmatpush1.msra.mxu0 %v513
        %3216 = vmatprep.subr.mxu0 %v516
        %3217 = vmatpush1.msra.mxu0 %v515
        %3218 = vmatprep.subr.mxu0 %v518
        %3219 = vmatpush1.msra.mxu0 %v517
        %3220 = vmatprep.subr.mxu0 %v520
        %3221 = vmatpush1.msra.mxu0 %v519
        %3222 = vmatprep.subr.mxu0 %v522
        %3223 = vmatpush1.msra.mxu0 %v521
        %3224 = vmatprep.subr.mxu0 %v524
        %3225 = vmatpush1.msra.mxu0 %v523
        %3226 = vmatprep.subr.mxu0 %v526
        %3227 = vmatpush1.msra.mxu0 %v525
        %3228 = vmatprep.subr.mxu0 %v528
        %3229 = vmatpush1.msra.mxu0 %v527
        %3230 = vmatprep.subr.mxu0 %v530
        %3231 = vmatpush1.msra.mxu0 %v529
        %3232 = vmatprep.subr.mxu0 %v532
        %3233 = vmatpush1.msra.mxu0 %v531
        %3234 = vmatprep.subr.mxu0 %v534
        %3235 = vmatpush1.msra.mxu0 %v533
        %3236 = vmatprep.subr.mxu0 %v536
        %3237 = vmatpush1.msra.mxu0 %v535
        %3238 = vmatprep.subr.mxu0 %v538
        %3239 = vmatpush1.msra.mxu0 %v537
        %3240 = vmatprep.subr.mxu0 %v540
        %3241 = vmatpush1.msra.mxu0 %v539
        %3242 = vmatprep.subr.mxu0 %v542
        %3243 = vmatpush1.msra.mxu0 %v541
        %3244 = vmatprep.subr.mxu0 %v544
        %3245 = vmatpush1.msra.mxu0 %v543
        %3246 = vmatprep.subr.mxu0 %v546
        %3247 = vmatpush1.msra.mxu0 %v545
        %3248 = vmatprep.subr.mxu0 %v548
        %3249 = vmatpush1.msra.mxu0 %v547
        %3250 = vmatprep.subr.mxu0 %v550
        %3251 = vmatpush1.msra.mxu0 %v549
        %3252 = vmatprep.subr.mxu0 %v552
        %3253 = vmatpush1.msra.mxu0 %v551
        %3254 = vmatprep.subr.mxu0 %v554
        %3255 = vmatpush1.msra.mxu0 %v553
        %3256 = vmatprep.subr.mxu0 %v556
        %3257 = vmatpush1.msra.mxu0 %v555
        %3258 = vmatprep.subr.mxu0 %v558
        %3259 = vmatpush1.msra.mxu0 %v557
        %3260 = vmatprep.subr.mxu0 %v560
        %3261 = vmatpush1.msra.mxu0 %v559
        %3262 = vmatprep.subr.mxu0 %v562
        %3263 = vmatpush1.msra.mxu0 %v561
        %3264 = vmatprep.subr.mxu0 %v564
        %3265 = vmatpush1.msra.mxu0 %v563
        %3266 = vmatprep.subr.mxu0 %v566
        %3267 = vmatpush1.msra.mxu0 %v565
        %3268 = vmatprep.subr.mxu0 %v568
        %3269 = vmatpush1.msra.mxu0 %v567
        %3270 = vmatprep.subr.mxu0 %v570
        %3271 = vmatpush1.msra.mxu0 %v569
        %3272 = vmatprep.subr.mxu0 %v572
        %3273 = vmatpush1.msra.mxu0 %v571
        %3274 = vmatprep.subr.mxu0 %v574
        %3275 = vmatpush1.msra.mxu0 %v573
        %3276 = vmatprep.mubr.f32.mxu0 %v3092
        %3277 = vmatmul.mubr.f32.gmra.mrb[0].mxu0 %v3090
        %v3278 = vpop.f32.mrb[0].mxu0
        %v3279 = vadd.f32 0.0, %v3278
        %v3280 = vpop.f32.mrb[0].mxu0
        %v3281 = vadd.f32 0.0, %v3280
        %3282 = vdwg.mxu0
        %v3283 = vadd.f32 %v3210, %v3279
        %v3284 = vadd.f32 %v3211, %v3281
        %3285 = vmatprep.subr.mxu0 %v650
        %3286 = vmatpush1.msra.mxu0 %v649
        %3287 = vmatprep.subr.mxu0 %v652
        %3288 = vmatpush1.msra.mxu0 %v651
        %3289 = vmatprep.subr.mxu0 %v654
        %3290 = vmatpush1.msra.mxu0 %v653
        %3291 = vmatprep.subr.mxu0 %v656
        %3292 = vmatpush1.msra.mxu0 %v655
        %3293 = vmatprep.subr.mxu0 %v658
        %3294 = vmatpush1.msra.mxu0 %v657
        %3295 = vmatprep.subr.mxu0 %v660
        %3296 = vmatpush1.msra.mxu0 %v659
        %3297 = vmatprep.subr.mxu0 %v662
        %3298 = vmatpush1.msra.mxu0 %v661
        %3299 = vmatprep.subr.mxu0 %v664
        %3300 = vmatpush1.msra.mxu0 %v663
        %3301 = vmatprep.subr.mxu0 %v666
        %3302 = vmatpush1.msra.mxu0 %v665
        %3303 = vmatprep.subr.mxu0 %v668
        %3304 = vmatpush1.msra.mxu0 %v667
        %3305 = vmatprep.subr.mxu0 %v670
        %3306 = vmatpush1.msra.mxu0 %v669
        %3307 = vmatprep.subr.mxu0 %v672
        %3308 = vmatpush1.msra.mxu0 %v671
        %3309 = vmatprep.subr.mxu0 %v674
        %3310 = vmatpush1.msra.mxu0 %v673
        %3311 = vmatprep.subr.mxu0 %v676
        %3312 = vmatpush1.msra.mxu0 %v675
        %3313 = vmatprep.subr.mxu0 %v678
        %3314 = vmatpush1.msra.mxu0 %v677
        %3315 = vmatprep.subr.mxu0 %v680
        %3316 = vmatpush1.msra.mxu0 %v679
        %3317 = vmatprep.subr.mxu0 %v682
        %3318 = vmatpush1.msra.mxu0 %v681
        %3319 = vmatprep.subr.mxu0 %v684
        %3320 = vmatpush1.msra.mxu0 %v683
        %3321 = vmatprep.subr.mxu0 %v686
        %3322 = vmatpush1.msra.mxu0 %v685
        %3323 = vmatprep.subr.mxu0 %v688
        %3324 = vmatpush1.msra.mxu0 %v687
        %3325 = vmatprep.subr.mxu0 %v690
        %3326 = vmatpush1.msra.mxu0 %v689
        %3327 = vmatprep.subr.mxu0 %v692
        %3328 = vmatpush1.msra.mxu0 %v691
        %3329 = vmatprep.subr.mxu0 %v694
        %3330 = vmatpush1.msra.mxu0 %v693
        %3331 = vmatprep.subr.mxu0 %v696
        %3332 = vmatpush1.msra.mxu0 %v695
        %3333 = vmatprep.subr.mxu0 %v698
        %3334 = vmatpush1.msra.mxu0 %v697
        %3335 = vmatprep.subr.mxu0 %v700
        %3336 = vmatpush1.msra.mxu0 %v699
        %3337 = vmatprep.subr.mxu0 %v702
        %3338 = vmatpush1.msra.mxu0 %v701
        %3339 = vmatprep.subr.mxu0 %v704
        %3340 = vmatpush1.msra.mxu0 %v703
        %3341 = vmatprep.subr.mxu0 %v706
        %3342 = vmatpush1.msra.mxu0 %v705
        %3343 = vmatprep.subr.mxu0 %v708
        %3344 = vmatpush1.msra.mxu0 %v707
        %3345 = vmatprep.subr.mxu0 %v710
        %3346 = vmatpush1.msra.mxu0 %v709
        %3347 = vmatprep.subr.mxu0 %v712
        %3348 = vmatpush1.msra.mxu0 %v711
        %3349 = vmatprep.mubr.f32.mxu0 %v3098
        %3350 = vmatmul.mubr.f32.gmra.mrb[0].mxu0 %v3096
        %v3351 = vpop.f32.mrb[0].mxu0
        %v3352 = vadd.f32 0.0, %v3351
        %v3353 = vpop.f32.mrb[0].mxu0
        %v3354 = vadd.f32 0.0, %v3353
        %3355 = vdwg.mxu0
        %v3356 = vadd.f32 %v3283, %v3352
        %v3357 = vadd.f32 %v3284, %v3354
        %3358 = vmatprep.subr.mxu0 %v788
        %3359 = vmatpush1.msra.mxu0 %v787
        %3360 = vmatprep.subr.mxu0 %v790
        %3361 = vmatpush1.msra.mxu0 %v789
        %3362 = vmatprep.subr.mxu0 %v792
        %3363 = vmatpush1.msra.mxu0 %v791
        %3364 = vmatprep.subr.mxu0 %v794
        %3365 = vmatpush1.msra.mxu0 %v793
        %3366 = vmatprep.subr.mxu0 %v796
        %3367 = vmatpush1.msra.mxu0 %v795
        %3368 = vmatprep.subr.mxu0 %v798
        %3369 = vmatpush1.msra.mxu0 %v797
        %3370 = vmatprep.subr.mxu0 %v800
        %3371 = vmatpush1.msra.mxu0 %v799
        %3372 = vmatprep.subr.mxu0 %v802
        %3373 = vmatpush1.msra.mxu0 %v801
        %3374 = vmatprep.subr.mxu0 %v804
        %3375 = vmatpush1.msra.mxu0 %v803
        %3376 = vmatprep.subr.mxu0 %v806
        %3377 = vmatpush1.msra.mxu0 %v805
        %3378 = vmatprep.subr.mxu0 %v808
        %3379 = vmatpush1.msra.mxu0 %v807
        %3380 = vmatprep.subr.mxu0 %v810
        %3381 = vmatpush1.msra.mxu0 %v809
        %3382 = vmatprep.subr.mxu0 %v812
        %3383 = vmatpush1.msra.mxu0 %v811
        %3384 = vmatprep.subr.mxu0 %v814
        %3385 = vmatpush1.msra.mxu0 %v813
        %3386 = vmatprep.subr.mxu0 %v816
        %3387 = vmatpush1.msra.mxu0 %v815
        %3388 = vmatprep.subr.mxu0 %v818
        %3389 = vmatpush1.msra.mxu0 %v817
        %3390 = vmatprep.subr.mxu0 %v820
        %3391 = vmatpush1.msra.mxu0 %v819
        %3392 = vmatprep.subr.mxu0 %v822
        %3393 = vmatpush1.msra.mxu0 %v821
        %3394 = vmatprep.subr.mxu0 %v824
        %3395 = vmatpush1.msra.mxu0 %v823
        %3396 = vmatprep.subr.mxu0 %v826
        %3397 = vmatpush1.msra.mxu0 %v825
        %3398 = vmatprep.subr.mxu0 %v828
        %3399 = vmatpush1.msra.mxu0 %v827
        %3400 = vmatprep.subr.mxu0 %v830
        %3401 = vmatpush1.msra.mxu0 %v829
        %3402 = vmatprep.subr.mxu0 %v832
        %3403 = vmatpush1.msra.mxu0 %v831
        %3404 = vmatprep.subr.mxu0 %v834
        %3405 = vmatpush1.msra.mxu0 %v833
        %3406 = vmatprep.subr.mxu0 %v836
        %3407 = vmatpush1.msra.mxu0 %v835
        %3408 = vmatprep.subr.mxu0 %v838
        %3409 = vmatpush1.msra.mxu0 %v837
        %3410 = vmatprep.subr.mxu0 %v840
        %3411 = vmatpush1.msra.mxu0 %v839
        %3412 = vmatprep.subr.mxu0 %v842
        %3413 = vmatpush1.msra.mxu0 %v841
        %3414 = vmatprep.subr.mxu0 %v844
        %3415 = vmatpush1.msra.mxu0 %v843
        %3416 = vmatprep.subr.mxu0 %v846
        %3417 = vmatpush1.msra.mxu0 %v845
        %3418 = vmatprep.subr.mxu0 %v848
        %3419 = vmatpush1.msra.mxu0 %v847
        %3420 = vmatprep.subr.mxu0 %v850
        %3421 = vmatpush1.msra.mxu0 %v849
        %3422 = vmatprep.mubr.f32.mxu0 %v3104
        %3423 = vmatmul.mubr.f32.gmra.mrb[0].mxu0 %v3102
        %v3424 = vpop.f32.mrb[0].mxu0
        %v3425 = vadd.f32 0.0, %v3424
        %v3426 = vpop.f32.mrb[0].mxu0
        %v3427 = vadd.f32 0.0, %v3426
        %3428 = vdwg.mxu0
        %v3429 = vadd.f32 %v3356, %v3425
        %v3430 = vadd.f32 %v3357, %v3427
        %v3431 = vadd.f32 %v3429, %v3108
        %v3432 = vadd.f32 %v3430, %v3110
        %3433 = vmatprep.subr.mxu0 %v928
        %3434 = vmatpush1.msra.mxu0 %v927
        %3435 = vmatprep.subr.mxu0 %v930
        %3436 = vmatpush1.msra.mxu0 %v929
        %3437 = vmatprep.subr.mxu0 %v932
        %3438 = vmatpush1.msra.mxu0 %v931
        %3439 = vmatprep.subr.mxu0 %v934
        %3440 = vmatpush1.msra.mxu0 %v933
        %3441 = vmatprep.subr.mxu0 %v936
        %3442 = vmatpush1.msra.mxu0 %v935
        %3443 = vmatprep.subr.mxu0 %v938
        %3444 = vmatpush1.msra.mxu0 %v937
        %3445 = vmatprep.subr.mxu0 %v940
        %3446 = vmatpush1.msra.mxu0 %v939
        %3447 = vmatprep.subr.mxu0 %v942
        %3448 = vmatpush1.msra.mxu0 %v941
        %3449 = vmatprep.subr.mxu0 %v944
        %3450 = vmatpush1.msra.mxu0 %v943
        %3451 = vmatprep.subr.mxu0 %v946
        %3452 = vmatpush1.msra.mxu0 %v945
        %3453 = vmatprep.subr.mxu0 %v948
        %3454 = vmatpush1.msra.mxu0 %v947
        %3455 = vmatprep.subr.mxu0 %v950
        %3456 = vmatpush1.msra.mxu0 %v949
        %3457 = vmatprep.subr.mxu0 %v952
        %3458 = vmatpush1.msra.mxu0 %v951
        %3459 = vmatprep.subr.mxu0 %v954
        %3460 = vmatpush1.msra.mxu0 %v953
        %3461 = vmatprep.subr.mxu0 %v956
        %3462 = vmatpush1.msra.mxu0 %v955
        %3463 = vmatprep.subr.mxu0 %v958
        %3464 = vmatpush1.msra.mxu0 %v957
        %3465 = vmatprep.subr.mxu0 %v960
        %3466 = vmatpush1.msra.mxu0 %v959
        %3467 = vmatprep.subr.mxu0 %v962
        %3468 = vmatpush1.msra.mxu0 %v961
        %3469 = vmatprep.subr.mxu0 %v964
        %3470 = vmatpush1.msra.mxu0 %v963
        %3471 = vmatprep.subr.mxu0 %v966
        %3472 = vmatpush1.msra.mxu0 %v965
        %3473 = vmatprep.subr.mxu0 %v968
        %3474 = vmatpush1.msra.mxu0 %v967
        %3475 = vmatprep.subr.mxu0 %v970
        %3476 = vmatpush1.msra.mxu0 %v969
        %3477 = vmatprep.subr.mxu0 %v972
        %3478 = vmatpush1.msra.mxu0 %v971
        %3479 = vmatprep.subr.mxu0 %v974
        %3480 = vmatpush1.msra.mxu0 %v973
        %3481 = vmatprep.subr.mxu0 %v976
        %3482 = vmatpush1.msra.mxu0 %v975
        %3483 = vmatprep.subr.mxu0 %v978
        %3484 = vmatpush1.msra.mxu0 %v977
        %3485 = vmatprep.subr.mxu0 %v980
        %3486 = vmatpush1.msra.mxu0 %v979
        %3487 = vmatprep.subr.mxu0 %v982
        %3488 = vmatpush1.msra.mxu0 %v981
        %3489 = vmatprep.subr.mxu0 %v984
        %3490 = vmatpush1.msra.mxu0 %v983
        %3491 = vmatprep.subr.mxu0 %v986
        %3492 = vmatpush1.msra.mxu0 %v985
        %3493 = vmatprep.subr.mxu0 %v988
        %3494 = vmatpush1.msra.mxu0 %v987
        %3495 = vmatprep.subr.mxu0 %v990
        %3496 = vmatpush1.msra.mxu0 %v989
        %3497 = vmatprep.mubr.f32.mxu0 %v3116
        %3498 = vmatmul.mubr.f32.gmra.mrb[0].mxu0 %v3114
        %v3499 = vpop.f32.mrb[0].mxu0
        %v3500 = vadd.f32 0.0, %v3499
        %v3501 = vpop.f32.mrb[0].mxu0
        %v3502 = vadd.f32 0.0, %v3501
        %3503 = vdwg.mxu0
        %v3504 = vadd.f32 %v3431, %v3500
        %v3505 = vadd.f32 %v3432, %v3502
        %3506 = vmatprep.subr.mxu0 %v1066
        %3507 = vmatpush1.msra.mxu0 %v1065
        %3508 = vmatprep.subr.mxu0 %v1068
        %3509 = vmatpush1.msra.mxu0 %v1067
        %3510 = vmatprep.subr.mxu0 %v1070
        %3511 = vmatpush1.msra.mxu0 %v1069
        %3512 = vmatprep.subr.mxu0 %v1072
        %3513 = vmatpush1.msra.mxu0 %v1071
        %3514 = vmatprep.subr.mxu0 %v1074
        %3515 = vmatpush1.msra.mxu0 %v1073
        %3516 = vmatprep.subr.mxu0 %v1076
        %3517 = vmatpush1.msra.mxu0 %v1075
        %3518 = vmatprep.subr.mxu0 %v1078
        %3519 = vmatpush1.msra.mxu0 %v1077
        %3520 = vmatprep.subr.mxu0 %v1080
        %3521 = vmatpush1.msra.mxu0 %v1079
        %3522 = vmatprep.subr.mxu0 %v1082
        %3523 = vmatpush1.msra.mxu0 %v1081
        %3524 = vmatprep.subr.mxu0 %v1084
        %3525 = vmatpush1.msra.mxu0 %v1083
        %3526 = vmatprep.subr.mxu0 %v1086
        %3527 = vmatpush1.msra.mxu0 %v1085
        %3528 = vmatprep.subr.mxu0 %v1088
        %3529 = vmatpush1.msra.mxu0 %v1087
        %3530 = vmatprep.subr.mxu0 %v1090
        %3531 = vmatpush1.msra.mxu0 %v1089
        %3532 = vmatprep.subr.mxu0 %v1092
        %3533 = vmatpush1.msra.mxu0 %v1091
        %3534 = vmatprep.subr.mxu0 %v1094
        %3535 = vmatpush1.msra.mxu0 %v1093
        %3536 = vmatprep.subr.mxu0 %v1096
        %3537 = vmatpush1.msra.mxu0 %v1095
        %3538 = vmatprep.subr.mxu0 %v1098
        %3539 = vmatpush1.msra.mxu0 %v1097
        %3540 = vmatprep.subr.mxu0 %v1100
        %3541 = vmatpush1.msra.mxu0 %v1099
        %3542 = vmatprep.subr.mxu0 %v1102
        %3543 = vmatpush1.msra.mxu0 %v1101
        %3544 = vmatprep.subr.mxu0 %v1104
        %3545 = vmatpush1.msra.mxu0 %v1103
        %3546 = vmatprep.subr.mxu0 %v1106
        %3547 = vmatpush1.msra.mxu0 %v1105
        %3548 = vmatprep.subr.mxu0 %v1108
        %3549 = vmatpush1.msra.mxu0 %v1107
        %3550 = vmatprep.subr.mxu0 %v1110
        %3551 = vmatpush1.msra.mxu0 %v1109
        %3552 = vmatprep.subr.mxu0 %v1112
        %3553 = vmatpush1.msra.mxu0 %v1111
        %3554 = vmatprep.subr.mxu0 %v1114
        %3555 = vmatpush1.msra.mxu0 %v1113
        %3556 = vmatprep.subr.mxu0 %v1116
        %3557 = vmatpush1.msra.mxu0 %v1115
        %3558 = vmatprep.subr.mxu0 %v1118
        %3559 = vmatpush1.msra.mxu0 %v1117
        %3560 = vmatprep.subr.mxu0 %v1120
        %3561 = vmatpush1.msra.mxu0 %v1119
        %3562 = vmatprep.subr.mxu0 %v1122
        %3563 = vmatpush1.msra.mxu0 %v1121
        %3564 = vmatprep.subr.mxu0 %v1124
        %3565 = vmatpush1.msra.mxu0 %v1123
        %3566 = vmatprep.subr.mxu0 %v1126
        %3567 = vmatpush1.msra.mxu0 %v1125
        %3568 = vmatprep.subr.mxu0 %v1128
        %3569 = vmatpush1.msra.mxu0 %v1127
        %3570 = vmatprep.mubr.f32.mxu0 %v3122
        %3571 = vmatmul.mubr.f32.gmra.mrb[0].mxu0 %v3120
        %v3572 = vpop.f32.mrb[0].mxu0
        %v3573 = vadd.f32 0.0, %v3572
        %v3574 = vpop.f32.mrb[0].mxu0
        %v3575 = vadd.f32 0.0, %v3574
        %3576 = vdwg.mxu0
        %v3577 = vadd.f32 %v3504, %v3573
        %v3578 = vadd.f32 %v3505, %v3575
        %3579 = vmatprep.subr.mxu0 %v1204
        %3580 = vmatpush1.msra.mxu0 %v1203
        %3581 = vmatprep.subr.mxu0 %v1206
        %3582 = vmatpush1.msra.mxu0 %v1205
        %3583 = vmatprep.subr.mxu0 %v1208
        %3584 = vmatpush1.msra.mxu0 %v1207
        %3585 = vmatprep.subr.mxu0 %v1210
        %3586 = vmatpush1.msra.mxu0 %v1209
        %3587 = vmatprep.subr.mxu0 %v1212
        %3588 = vmatpush1.msra.mxu0 %v1211
        %3589 = vmatprep.subr.mxu0 %v1214
        %3590 = vmatpush1.msra.mxu0 %v1213
        %3591 = vmatprep.subr.mxu0 %v1216
        %3592 = vmatpush1.msra.mxu0 %v1215
        %3593 = vmatprep.subr.mxu0 %v1218
        %3594 = vmatpush1.msra.mxu0 %v1217
        %3595 = vmatprep.subr.mxu0 %v1220
        %3596 = vmatpush1.msra.mxu0 %v1219
        %3597 = vmatprep.subr.mxu0 %v1222
        %3598 = vmatpush1.msra.mxu0 %v1221
        %3599 = vmatprep.subr.mxu0 %v1224
        %3600 = vmatpush1.msra.mxu0 %v1223
        %3601 = vmatprep.subr.mxu0 %v1226
        %3602 = vmatpush1.msra.mxu0 %v1225
        %3603 = vmatprep.subr.mxu0 %v1228
        %3604 = vmatpush1.msra.mxu0 %v1227
        %3605 = vmatprep.subr.mxu0 %v1230
        %3606 = vmatpush1.msra.mxu0 %v1229
        %3607 = vmatprep.subr.mxu0 %v1232
        %3608 = vmatpush1.msra.mxu0 %v1231
        %3609 = vmatprep.subr.mxu0 %v1234
        %3610 = vmatpush1.msra.mxu0 %v1233
        %3611 = vmatprep.subr.mxu0 %v1236
        %3612 = vmatpush1.msra.mxu0 %v1235
        %3613 = vmatprep.subr.mxu0 %v1238
        %3614 = vmatpush1.msra.mxu0 %v1237
        %3615 = vmatprep.subr.mxu0 %v1240
        %3616 = vmatpush1.msra.mxu0 %v1239
        %3617 = vmatprep.subr.mxu0 %v1242
        %3618 = vmatpush1.msra.mxu0 %v1241
        %3619 = vmatprep.subr.mxu0 %v1244
        %3620 = vmatpush1.msra.mxu0 %v1243
        %3621 = vmatprep.subr.mxu0 %v1246
        %3622 = vmatpush1.msra.mxu0 %v1245
        %3623 = vmatprep.subr.mxu0 %v1248
        %3624 = vmatpush1.msra.mxu0 %v1247
        %3625 = vmatprep.subr.mxu0 %v1250
        %3626 = vmatpush1.msra.mxu0 %v1249
        %3627 = vmatprep.subr.mxu0 %v1252
        %3628 = vmatpush1.msra.mxu0 %v1251
        %3629 = vmatprep.subr.mxu0 %v1254
        %3630 = vmatpush1.msra.mxu0 %v1253
        %3631 = vmatprep.subr.mxu0 %v1256
        %3632 = vmatpush1.msra.mxu0 %v1255
        %3633 = vmatprep.subr.mxu0 %v1258
        %3634 = vmatpush1.msra.mxu0 %v1257
        %3635 = vmatprep.subr.mxu0 %v1260
        %3636 = vmatpush1.msra.mxu0 %v1259
        %3637 = vmatprep.subr.mxu0 %v1262
        %3638 = vmatpush1.msra.mxu0 %v1261
        %3639 = vmatprep.subr.mxu0 %v1264
        %3640 = vmatpush1.msra.mxu0 %v1263
        %3641 = vmatprep.subr.mxu0 %v1266
        %3642 = vmatpush1.msra.mxu0 %v1265
        %3643 = vmatprep.mubr.f32.mxu0 %v3128
        %3644 = vmatmul.mubr.f32.gmra.mrb[0].mxu0 %v3126
        %v3645 = vpop.f32.mrb[0].mxu0
        %v3646 = vadd.f32 0.0, %v3645
        %v3647 = vpop.f32.mrb[0].mxu0
        %v3648 = vadd.f32 0.0, %v3647
        %3649 = vdwg.mxu0
        %v3650 = vadd.f32 %v3577, %v3646
        %v3651 = vadd.f32 %v3578, %v3648
        %3652 = vmatprep.subr.mxu0 %v1342
        %3653 = vmatpush1.msra.mxu0 %v1341
        %3654 = vmatprep.subr.mxu0 %v1344
        %3655 = vmatpush1.msra.mxu0 %v1343
        %3656 = vmatprep.subr.mxu0 %v1346
        %3657 = vmatpush1.msra.mxu0 %v1345
        %3658 = vmatprep.subr.mxu0 %v1348
        %3659 = vmatpush1.msra.mxu0 %v1347
        %3660 = vmatprep.subr.mxu0 %v1350
        %3661 = vmatpush1.msra.mxu0 %v1349
        %3662 = vmatprep.subr.mxu0 %v1352
        %3663 = vmatpush1.msra.mxu0 %v1351
        %3664 = vmatprep.subr.mxu0 %v1354
        %3665 = vmatpush1.msra.mxu0 %v1353
        %3666 = vmatprep.subr.mxu0 %v1356
        %3667 = vmatpush1.msra.mxu0 %v1355
        %3668 = vmatprep.subr.mxu0 %v1358
        %3669 = vmatpush1.msra.mxu0 %v1357
        %3670 = vmatprep.subr.mxu0 %v1360
        %3671 = vmatpush1.msra.mxu0 %v1359
        %3672 = vmatprep.subr.mxu0 %v1362
        %3673 = vmatpush1.msra.mxu0 %v1361
        %3674 = vmatprep.subr.mxu0 %v1364
        %3675 = vmatpush1.msra.mxu0 %v1363
        %3676 = vmatprep.subr.mxu0 %v1366
        %3677 = vmatpush1.msra.mxu0 %v1365
        %3678 = vmatprep.subr.mxu0 %v1368
        %3679 = vmatpush1.msra.mxu0 %v1367
        %3680 = vmatprep.subr.mxu0 %v1370
        %3681 = vmatpush1.msra.mxu0 %v1369
        %3682 = vmatprep.subr.mxu0 %v1372
        %3683 = vmatpush1.msra.mxu0 %v1371
        %3684 = vmatprep.subr.mxu0 %v1374
        %3685 = vmatpush1.msra.mxu0 %v1373
        %3686 = vmatprep.subr.mxu0 %v1376
        %3687 = vmatpush1.msra.mxu0 %v1375
        %3688 = vmatprep.subr.mxu0 %v1378
        %3689 = vmatpush1.msra.mxu0 %v1377
        %3690 = vmatprep.subr.mxu0 %v1380
        %3691 = vmatpush1.msra.mxu0 %v1379
        %3692 = vmatprep.subr.mxu0 %v1382
        %3693 = vmatpush1.msra.mxu0 %v1381
        %3694 = vmatprep.subr.mxu0 %v1384
        %3695 = vmatpush1.msra.mxu0 %v1383
        %3696 = vmatprep.subr.mxu0 %v1386
        %3697 = vmatpush1.msra.mxu0 %v1385
        %3698 = vmatprep.subr.mxu0 %v1388
        %3699 = vmatpush1.msra.mxu0 %v1387
        %3700 = vmatprep.subr.mxu0 %v1390
        %3701 = vmatpush1.msra.mxu0 %v1389
        %3702 = vmatprep.subr.mxu0 %v1392
        %3703 = vmatpush1.msra.mxu0 %v1391
        %3704 = vmatprep.subr.mxu0 %v1394
        %3705 = vmatpush1.msra.mxu0 %v1393
        %3706 = vmatprep.subr.mxu0 %v1396
        %3707 = vmatpush1.msra.mxu0 %v1395
        %3708 = vmatprep.subr.mxu0 %v1398
        %3709 = vmatpush1.msra.mxu0 %v1397
        %3710 = vmatprep.subr.mxu0 %v1400
        %3711 = vmatpush1.msra.mxu0 %v1399
        %3712 = vmatprep.subr.mxu0 %v1402
        %3713 = vmatpush1.msra.mxu0 %v1401
        %3714 = vmatprep.subr.mxu0 %v1404
        %3715 = vmatpush1.msra.mxu0 %v1403
        %3716 = vmatprep.mubr.f32.mxu0 %v3134
        %3717 = vmatmul.mubr.f32.gmra.mrb[0].mxu0 %v3132
        %v3718 = vpop.f32.mrb[0].mxu0
        %v3719 = vadd.f32 0.0, %v3718
        %v3720 = vpop.f32.mrb[0].mxu0
        %v3721 = vadd.f32 0.0, %v3720
        %3722 = vdwg.mxu0
        %v3723 = vadd.f32 %v3650, %v3719
        %v3724 = vadd.f32 %v3651, %v3721
        %3725 = vst [vmem:[%s212] sm:$0xff] %v3723
        %3726 = vst [vmem:[%s212 + $0x8] sm:$0xff] %v3724
        %p3727 = scmp.lt.s32.totalorder %s16, 1
        %s3728 = scalar_select %p3727, %s16, 1
        %s3729 = smul.addr %s3728, 2
        %s3730 = smul.addr %s3729, 8
        %s3731 = scalar_lea.vmem %s4, %s3730
        // Predicated region
        $region41: #{encoder1_forward.1} parent=35 // pred_check
          %p3732 = pneg %p123
        $region42: #{encoder1_forward.1} parent=35 // pred_check_branch
          %3734 = sbr.rel (%p3732) target = $region44
        $region43: #{encoder1_forward.1} parent=35 // pred_region
          _
        $region44: #{encoder1_forward.1} parent=35 // pred_fallthru
          _
      $region36: #{encoder1_forward.1} parent=5 // pred_fallthru
        _
      %p3735 = scmp.le.s32.totalorder 2, %s11
      // Predicated region
      $region45: #{encoder1_forward.1} parent=5 // pred_check
        %p3736 = pneg %p3735
      $region46: #{encoder1_forward.1} parent=5 // pred_check_branch
        %3738 = sbr.rel (%p3736) target = $region48
      $region47: #{encoder1_forward.1} parent=5 // pred_region
        %s3739 = ssub.s32 %s11, 2
        // Predicated region
        $region49: #{encoder1_forward.1} parent=47 // pred_check
          %p3740 = pneg %p129
        $region50: #{encoder1_forward.1} parent=47 // pred_check_branch
          %3742 = sbr.rel (%p3740) target = $region52
        $region51: #{encoder1_forward.1} parent=47 // pred_region
          %p3743 = scmp.lt.s32.totalorder %s17, 1
          %s3744 = scalar_select %p3743, %s17, 1
          %s3745 = smul.addr %s3744, 2
          %s3746 = smul.addr %s3745, 8
          %s3747 = scalar_lea.vmem %s4, %s3746
        $region52: #{encoder1_forward.1} parent=47 // pred_fallthru
          _
      $region48: #{encoder1_forward.1} parent=5 // pred_fallthru
        _
    $region6: #{encoder1_forward.1} parent=1 // loop_footer
      %s15 = sadd.s32 1, %s11
    $region7: #{encoder1_forward.1} parent=1 // loop_footer_branch
      %10 = sbr.rel target = $region3
    $region8: #{encoder1_forward.1} parent=1 // loop_exit
      _
    %3748 = vsyncpa [#allocation3], 1
    %s3749 = scalar_lea.sflag [#allocation3], 1
    %3750 = vsyncpa %s3749, 1

</llo_original>
